<compile_context>
chip_gen: v7x
topology: tpu7x:2x2x1
jax: 0.10.0
libtpu: 0.0.40
codegen_flags: <defaults>
</compile_context>

<pallas_src>
import functools

import jax
import jax.numpy as jnp
from jax.experimental import pallas as pl
from jax.experimental.pallas import tpu as pltpu

HALO = 2  # halo rows above/below a multi-tile slab (enough for the 5x5 dwconv)


# ---------------------------------------------------------------------------
# Kernel
# ---------------------------------------------------------------------------
def _mlgffn_kernel(*refs, fuse_fc1, w_valid, approx_gelu):
    """One (image n, H-tile i) step.

    refs (fuse_fc1=False):
      x, w1a, b1a, w1b, b1b, k3, b3, k5, b5, w2a, w2b, gbias, out, s1, s2
    refs (fuse_fc1=True, used when half % 128 == 0):
      x, w1,  b1,             k3, b3, k5, b5, w2a, w2b, gbias, out, s1, s2

    x  : (1, HT, W, C) bf16 input slab, HT = tile_h + 2*halo (halo only if nt>1)
    s1 : (tile_h + 2, W + 2, half) zero-bordered conv scratch for the 3x3
    s2 : (tile_h + 4, W + 4, half) zero-bordered conv scratch for the 5x5
    out: (1, tile_h, W, dim) f32
    """
    if fuse_fc1:
        (x_ref, w1_ref, b1_ref, k3_ref, b3_ref, k5_ref, b5_ref,
         w2a_ref, w2b_ref, gb_ref, o_ref, s1_ref, s2_ref) = refs
    else:
        (x_ref, w1a_ref, b1a_ref, w1b_ref, b1b_ref, k3_ref, b3_ref,
         k5_ref, b5_ref, w2a_ref, w2b_ref, gb_ref, o_ref, s1_ref, s2_ref) = refs

    _, HT, W, C = x_ref.shape
    tile_h = o_ref.shape[1]
    dim_out = o_ref.shape[3]
    half = s1_ref.shape[2]
    halo = (HT - tile_h) // 2
    cdt = s1_ref.dtype
    f32 = jnp.float32
    i = pl.program_id(1)

    # ---- fc1 (1x1 conv): bf16 MXU matmul(s), f32 accumulation.
    xt = x_ref[0].reshape(HT * W, C)
    if fuse_fc1:
        # half % 128 == 0 -> the post-matmul lane split is tile-aligned (free),
        # so one wide matmul keeps the MXU fed with a single weight push.
        y = jnp.dot(xt, w1_ref[...], preferred_element_type=f32) + b1_ref[...]
        y1 = y[:, :half].reshape(HT, W, half)
        y2 = y[:, half:].reshape(HT, W, half)
    else:
        y1 = (jnp.dot(xt, w1a_ref[...], preferred_element_type=f32)
              + b1a_ref[...]).reshape(HT, W, half)
        y2 = (jnp.dot(xt, w1b_ref[...], preferred_element_type=f32)
              + b1b_ref[...]).reshape(HT, W, half)

    # ---- stage y into the persistent zero-bordered conv scratch.
    if halo:
        s1_ref[:, 1:1 + W, :] = y1[1:HT - 1].astype(cdt)   # 3x3 needs +-1 rows
        s2_ref[:, 2:2 + W, :] = y2.astype(cdt)             # 5x5 needs +-2 rows
    else:
        s1_ref[1:1 + tile_h, 1:1 + W, :] = y1.astype(cdt)
        s2_ref[2:2 + tile_h, 2:2 + W, :] = y2.astype(cdt)

    # Zero the W borders every step (also wipes fc1-of-zero in any W-padding
    # columns), so per-core scratch never carries stale data under megacore.
    s1_ref[:, 0:1, :] = jnp.zeros((tile_h + 2, 1, half), cdt)
    s1_ref[:, 1 + w_valid:, :] = jnp.zeros((tile_h + 2, 1 + W - w_valid, half), cdt)
    s2_ref[:, 0:2, :] = jnp.zeros((tile_h + 4, 2, half), cdt)
    s2_ref[:, 2 + w_valid:, :] = jnp.zeros((tile_h + 4, 2 + W - w_valid, half), cdt)

    # Zero out-of-image boundary rows (fc1 of a zero-padded row is b1, not 0).
    # Only the first/last H-tile pays for this, and only on 1-2 rows; for a
    # whole-H tile (nt == 1) both branches fire and form the vertical border.
    @pl.when(i == 0)
    def _():
        s1_ref[0:1, :, :] = jnp.zeros((1, W + 2, half), cdt)
        s2_ref[0:2, :, :] = jnp.zeros((2, W + 4, half), cdt)

    @pl.when(i == pl.num_programs(1) - 1)
    def _():
        s1_ref[tile_h + 1:tile_h + 2, :, :] = jnp.zeros((1, W + 2, half), cdt)
        s2_ref[tile_h + 2:tile_h + 4, :, :] = jnp.zeros((2, W + 4, half), cdt)

    # ---- depthwise convs.  Column (dw) shifts hit the sublane axis, so hoist
    # them: 3 + 5 shifted slab loads total, then each dh tap is a cheap
    # leading-dim slice of an already-loaded slab.
    k3 = k3_ref[...]          # (3, 3, half) -- single hoisted load
    k5 = k5_ref[...]          # (5, 5, half)
    c3 = [s1_ref[:, dw:dw + W, :] for dw in range(3)]
    c5 = [s2_ref[:, dw:dw + W, :] for dw in range(5)]

    # Fold the conv bias into the first tap (saves a full-slab add per branch).
    acc1 = c3[0][0:tile_h] * k3[0, 0] + b3_ref[...]
    for dh in range(3):
        for dw in range(3):
            if dh == 0 and dw == 0:
                continue
            acc1 = acc1 + c3[dw][dh:dh + tile_h] * k3[dh, dw]
    acc2 = c5[0][0:tile_h] * k5[0, 0] + b5_ref[...]
    for dh in range(5):
        for dw in range(5):
            if dh == 0 and dw == 0:
                continue
            acc2 = acc2 + c5[dw][dh:dh + tile_h] * k5[dh, dw]

    # tanh GELU routes the transcendental to the otherwise-idle EUP slot;
    # approx_gelu=False restores torch.nn.GELU()'s exact erf.
    a1 = jax.nn.gelu(acc1, approximate=approx_gelu)
    a2 = jax.nn.gelu(acc2, approximate=approx_gelu)

    # ---- fc2 on the two local halves; the global-pool branch + fc2 bias come
    # in as the precomputed per-image bias gb (rank-1, same for every pixel).
    bf16 = jnp.bfloat16
    a1f = a1.reshape(tile_h * W, half).astype(bf16)
    a2f = a2.reshape(tile_h * W, half).astype(bf16)
    out = (jnp.dot(a1f, w2a_ref[...], preferred_element_type=f32)
           + jnp.dot(a2f, w2b_ref[...], preferred_element_type=f32)
           + gb_ref[0])
    o_ref[0] = out.reshape(tile_h, W, dim_out)


# ---------------------------------------------------------------------------
# Wrapper helpers
# ---------------------------------------------------------------------------
def _vmem_capacity_bytes():
    try:
        info = pltpu.get_tpu_info()
        cap = getattr(info, "vmem_capacity_bytes", None)
        if cap:
            return int(cap)
    except Exception:
        pass
    return 128 * 1024 * 1024          # v5e / v6e per-core VMEM fallback


def _default_conv_dtype():
    # bf16 conv scratch halves VMEM + the store/reload bytes of the conv stage,
    # but v5e (and older) have no bf16 VPU/EUP, so keep f32 there.
    try:
        kind = jax.devices()[0].device_kind.lower()
    except Exception:
        return jnp.float32
    return jnp.bfloat16 if ("v6" in kind or "v7" in kind) else jnp.float32


def _step_vmem_bytes(tile_h, H, W, C, half, dim_out, conv_bytes):
    nt = H // tile_h
    HT = tile_h + (2 * HALO if nt > 1 else 0)
    b = 2 * HT * W * C * 2                              # dbl-buffered bf16 input
    b += 2 * tile_h * W * dim_out * 4                   # dbl-buffered f32 output
    b += (tile_h + 2) * (W + 2) * half * conv_bytes     # s1
    b += (tile_h + 4) * (W + 4) * half * conv_bytes     # s2
    b += 2 * HT * W * half * 4                          # y1 / y2 (f32)
    b += 4 * tile_h * W * half * 4                      # acc / activation temps
    b += 8 * (tile_h + 4) * W * half * conv_bytes       # hoisted col-shift slabs
    return b


def _weight_vmem_bytes(C, hidden, half, dim_out):
    b = C * hidden * 2 + 2 * half * dim_out * 2                    # bf16 matmul W
    b += (9 + 25) * half * 4 + (hidden + 2 * half + dim_out) * 4   # conv taps, biases
    return 2 * b                                                   # pipeline buffers


def _pick_tile_h(H, W, C, half, dim_out, conv_bytes, budget):
    """Largest divisor of H whose estimated per-step working set fits budget."""
    for t in sorted((t for t in range(1, H + 1) if H % t == 0), reverse=True):
        if _step_vmem_bytes(t, H, W, C, half, dim_out, conv_bytes) <= budget:
            return t
    return 1


# ---------------------------------------------------------------------------
# Forward pass
# ---------------------------------------------------------------------------
def _forward_impl(x, params, tile_h, approx_gelu, conv_dtype, vmem_limit):
    N, H, W_real, C = x.shape
    w1, b1, k3, b3, k5, b5, w2, b2 = params
    hidden = w1.shape[1]
    half = hidden // 2
    dim_out = w2.shape[1]
    f32, bf16 = jnp.float32, jnp.bfloat16
    hp = jax.lax.Precision.HIGHEST

    # ---- global (adaptive_avg_pool2d) branch folded into a per-image bias:
    # fc1 is linear + bias so mean_hw(fc1(x)) == fc1(mean_hw(x)); its fc2
    # contribution (plus b2) is identical for every pixel -> (N, dim) bias.
    gmean = jnp.dot(jnp.mean(x, axis=(1, 2)), w1, precision=hp) + b1
    g_bias = (jnp.dot(gmean, w2[hidden:], precision=hp) + b2).astype(f32)
    g_bias = g_bias.reshape(N, 1, dim_out)

    # ---- pad W up to a sublane multiple so the (rows*W, C) reshapes are free.
    W = ((W_real + 7) // 8) * 8
    if W != W_real:
        x = jnp.pad(x, ((0, 0), (0, 0), (0, W - W_real), (0, 0)))

    # ---- tile height from the VMEM budget (no %8 constraint: tile_h is not
    # one of the two minor block dims).  Whole-H slabs preferred.
    conv_bytes = jnp.dtype(conv_dtype).itemsize
    if tile_h is None:
        budget = vmem_limit - _weight_vmem_bytes(C, hidden, half, dim_out) - (2 << 20)
        tile_h = _pick_tile_h(H, W, C, half, dim_out, conv_bytes, budget)
    assert H % tile_h == 0, (H, tile_h)
    nt = H // tile_h
    halo = HALO if nt > 1 else 0
    HT = tile_h + 2 * halo

    # ---- input slabs.  Whole-H tiles read x directly (no extra HBM traffic);
    # multi-tile configs pre-materialize overlapping halo'd slabs so BlockSpec
    # auto-pipelining (double-buffered HBM->VMEM DMA) still applies.
    if nt == 1:
        x_in = x.astype(bf16)
        x_spec = pl.BlockSpec((1, HT, W, C), lambda n, i: (n, 0, 0, 0))
    else:
        xp = jnp.pad(x, ((0, 0), (HALO, HALO), (0, 0), (0, 0)))
        x_in = jnp.stack(
            [xp[:, t * tile_h:t * tile_h + HT] for t in range(nt)], axis=1)
        x_in = x_in.reshape(N * nt, HT, W, C).astype(bf16)

        def x_index(n, i):
            return (n * nt + i, 0, 0, 0)
        x_spec = pl.BlockSpec((1, HT, W, C), x_index)

    fuse_fc1 = (half % 128 == 0)

    inputs = [x_in]
    in_specs = [x_spec]
    if fuse_fc1:
        inputs += [w1.astype(bf16), b1.reshape(1, hidden).astype(f32)]
        in_specs += [pl.BlockSpec((C, hidden), lambda n, i: (0, 0)),
                     pl.BlockSpec((1, hidden), lambda n, i: (0, 0))]
    else:
        inputs += [w1[:, :half].astype(bf16),
                   b1[:half].reshape(1, half).astype(f32),
                   w1[:, half:].astype(bf16),
                   b1[half:].reshape(1, half).astype(f32)]
        in_specs += [pl.BlockSpec((C, half), lambda n, i: (0, 0)),
                     pl.BlockSpec((1, half), lambda n, i: (0, 0)),
                     pl.BlockSpec((C, half), lambda n, i: (0, 0)),
                     pl.BlockSpec((1, half), lambda n, i: (0, 0))]
    inputs += [k3.astype(f32), b3.reshape(1, half).astype(f32),
               k5.astype(f32), b5.reshape(1, half).astype(f32),
               w2[:half].astype(bf16), w2[half:hidden].astype(bf16), g_bias]
    in_specs += [pl.BlockSpec((3, 3, half), lambda n, i: (0, 0, 0)),
                 pl.BlockSpec((1, half), lambda n, i: (0, 0)),
                 pl.BlockSpec((5, 5, half), lambda n, i: (0, 0, 0)),
                 pl.BlockSpec((1, half), lambda n, i: (0, 0)),
                 pl.BlockSpec((half, dim_out), lambda n, i: (0, 0)),
                 pl.BlockSpec((half, dim_out), lambda n, i: (0, 0)),
                 pl.BlockSpec((1, 1, dim_out), lambda n, i: (n, 0, 0))]

    kernel = functools.partial(_mlgffn_kernel, fuse_fc1=fuse_fc1,
                               w_valid=W_real, approx_gelu=approx_gelu)

    out = pl.pallas_call(
        kernel,
        out_shape=jax.ShapeDtypeStruct((N, H, W, dim_out), f32),
        grid=(N, nt),
        in_specs=in_specs,
        out_specs=pl.BlockSpec((1, tile_h, W, dim_out),
                               lambda n, i: (n, i, 0, 0)),
        scratch_shapes=[
            pltpu.VMEM((tile_h + 2, W + 2, half), conv_dtype),
            pltpu.VMEM((tile_h + 4, W + 4, half), conv_dtype),
        ],
        compiler_params=pltpu.CompilerParams(
            dimension_semantics=("parallel", "parallel"),
            vmem_limit_bytes=vmem_limit,
        ),
    )(*inputs)

    if W != W_real:
        out = out[:, :, :W_real, :]
    return out


def mlgffn_forward(x, params, tile_h=None, approx_gelu=True, conv_dtype=None):
    """x: (N, H, W, dim) float32 (NHWC).  Returns (N, H, W, dim) float32."""
    # Per-generation VMEM limit: ~90 MiB on v5e/v6e (128 MiB/core), ~45 MiB on
    # v7x (64 MiB/core) -- leaves headroom for the pipeline's second buffers.
    vmem_limit = max(32 << 20, int(0.70 * _vmem_capacity_bytes()))
    if conv_dtype is None:
        conv_dtype = _default_conv_dtype()
    try:
        return _forward_impl(x, params, tile_h, approx_gelu, conv_dtype,
                             vmem_limit)
    except Exception:
        if jnp.dtype(conv_dtype) == jnp.dtype(jnp.bfloat16):
            # Safety net: fall back to f32 conv scratch if packed-bf16 sub-tile
            # scratch accesses fail to lower on this chip / jax version.
            return _forward_impl(x, params, tile_h, approx_gelu, jnp.float32,
                                 vmem_limit)
        raise


# ---------------------------------------------------------------------------
# Reference + test
# ---------------------------------------------------------------------------
def mlgffn_reference(x, params):
    """Plain-JAX f32 / HIGHEST-precision reference (original op structure)."""
    w1, b1, k3, b3, k5, b5, w2, b2 = params
    hp = jax.lax.Precision.HIGHEST
    y = jnp.einsum('nhwc,cd->nhwd', x, w1, precision=hp) + b1
    hidden = y.shape[-1]
    half = hidden // 2
    y1, y2 = y[..., :half], y[..., half:]

    def dwconv(z, k, b):
        kh, kw, _ = k.shape
        ph, pw = kh // 2, kw // 2
        zp = jnp.pad(z, ((0, 0), (ph, ph), (pw, pw), (0, 0)))
        H, W = z.shape[1], z.shape[2]
        acc = jnp.zeros_like(z)
        for dh in range(kh):
            for dw in range(kw):
                acc = acc + zp[:, dh:dh + H, dw:dw + W, :] * k[dh, dw]
        return acc + b

    a1 = jax.nn.gelu(dwconv(y1, k3, b3), approximate=False)
    a2 = jax.nn.gelu(dwconv(y2, k5, b5), approximate=False)
    g = jnp.broadcast_to(jnp.mean(y, axis=(1, 2), keepdims=True), y.shape)
    z = jnp.concatenate([a1, a2, g], axis=-1)
    return jnp.einsum('nhwc,cd->nhwd', z, w2, precision=hp) + b2


def _make_params(key, dim, expansion=4):
    hidden = dim * expansion
    half = hidden // 2
    ks = jax.random.split(key, 8)
    return (
        0.1 * jax.random.normal(ks[0], (dim, hidden), jnp.float32),      # fc1 W (C_in, C_out)
        0.1 * jax.random.normal(ks[1], (hidden,), jnp.float32),          # fc1 b
        0.1 * jax.random.normal(ks[2], (3, 3, half), jnp.float32),       # dw3x3 W (kh, kw, C)
        0.1 * jax.random.normal(ks[3], (half,), jnp.float32),            # dw3x3 b
        0.1 * jax.random.normal(ks[4], (5, 5, half), jnp.float32),       # dw5x5 W (kh, kw, C)
        0.1 * jax.random.normal(ks[5], (half,), jnp.float32),            # dw5x5 b
        0.1 * jax.random.normal(ks[6], (2 * hidden, dim), jnp.float32),  # fc2 W (C_in, C_out)
        0.1 * jax.random.normal(ks[7], (dim,), jnp.float32),             # fc2 b
    )


def _check(out, ref, tag):
    assert out.shape == ref.shape, (tag, out.shape, ref.shape)
    # Tolerance: kernel feeds bf16 operands to the MXU (f32 accumulation), may
    # keep the conv scratch in bf16 (v6e+) and uses tanh GELU; the reference is
    # f32 / Precision.HIGHEST / exact-erf GELU.
    tol = 2e-2 + 2e-2 * float(jnp.max(jnp.abs(ref)))
    err = float(jnp.max(jnp.abs(out - ref)))
    assert err < tol, (tag, err, tol)


if __name__ == "__main__":
    key = jax.random.PRNGKey(0)
    kp1, kx1, kp2, kx2 = jax.random.split(key, 4)

    # Case 1: MLGFFN(dim=4, expansion_factor=4) at NHWC (2, 16, 8, 4).
    #   default tile_h -> whole-H slab (no halo, no pad/stack, pre-split fc1);
    #   tile_h=8       -> two H-tiles/image: exercises halo'd slabs and the
    #                     pl.when boundary-row zeroing.
    params1 = _make_params(kp1, dim=4)
    x1 = jax.random.normal(kx1, (2, 16, 8, 4), jnp.float32)
    ref1 = mlgffn_reference(x1, params1)
    _check(jax.block_until_ready(mlgffn_forward(x1, params1)), ref1, "case1/whole-H")
    _check(jax.block_until_ready(mlgffn_forward(x1, params1, tile_h=8)), ref1, "case1/halo")

    # Case 2: dim=64 -> half=128 (fused fc1, lane-aligned split) and W=12
    # (not a sublane multiple -> exercises the W-padding path).
    params2 = _make_params(kp2, dim=64)
    x2 = jax.random.normal(kx2, (1, 16, 12, 64), jnp.float32)
    ref2 = mlgffn_reference(x2, params2)
    _check(jax.block_until_ready(mlgffn_forward(x2, params2)), ref2, "case2/fused-fc1")

    print("KERNEL_OK")
</pallas_src>

<mosaic_0001>
module attributes {stable_mosaic.version = 11 : i64} {
  func.func @_mlgffn_kernel(%arg0: i32, %arg1: i32, %arg2: memref<1x16x8x4xbf16, #tpu.memory_space<vmem>>, %arg3: memref<4x8xbf16, #tpu.memory_space<vmem>>, %arg4: memref<1x8xf32, #tpu.memory_space<vmem>>, %arg5: memref<4x8xbf16, #tpu.memory_space<vmem>>, %arg6: memref<1x8xf32, #tpu.memory_space<vmem>>, %arg7: memref<3x3x8xf32, #tpu.memory_space<vmem>>, %arg8: memref<1x8xf32, #tpu.memory_space<vmem>>, %arg9: memref<5x5x8xf32, #tpu.memory_space<vmem>>, %arg10: memref<1x8xf32, #tpu.memory_space<vmem>>, %arg11: memref<8x4xbf16, #tpu.memory_space<vmem>>, %arg12: memref<8x4xbf16, #tpu.memory_space<vmem>>, %arg13: memref<1x1x4xf32, #tpu.memory_space<vmem>>, %arg14: memref<1x16x8x4xf32, #tpu.memory_space<vmem>>, %arg15: memref<18x10x8xf32, #tpu.memory_space<vmem>>, %arg16: memref<20x12x8xf32, #tpu.memory_space<vmem>>) attributes {dimension_semantics = [#tpu.dimension_semantics<parallel>, #tpu.dimension_semantics<parallel>], iteration_bounds = array<i64: 2, 1>, scalar_prefetch = 0 : i64, scratch_operands = 2 : i64, tpu.core_type = #tpu.core_type<tc>, window_params = [{transform_indices = @transform_0, window_bounds = array<i64: 1, 16, 8, 4>}, {pipeline_mode = #tpu.pipeline_mode<synchronous>, transform_indices = @transform_1, window_bounds = array<i64: 4, 8>}, {pipeline_mode = #tpu.pipeline_mode<synchronous>, transform_indices = @transform_2, window_bounds = array<i64: 1, 8>}, {pipeline_mode = #tpu.pipeline_mode<synchronous>, transform_indices = @transform_3, window_bounds = array<i64: 4, 8>}, {pipeline_mode = #tpu.pipeline_mode<synchronous>, transform_indices = @transform_4, window_bounds = array<i64: 1, 8>}, {pipeline_mode = #tpu.pipeline_mode<synchronous>, transform_indices = @transform_5, window_bounds = array<i64: 3, 3, 8>}, {pipeline_mode = #tpu.pipeline_mode<synchronous>, transform_indices = @transform_6, window_bounds = array<i64: 1, 8>}, {pipeline_mode = #tpu.pipeline_mode<synchronous>, transform_indices = @transform_7, window_bounds = array<i64: 5, 5, 8>}, {pipeline_mode = #tpu.pipeline_mode<synchronous>, transform_indices = @transform_8, window_bounds = array<i64: 1, 8>}, {pipeline_mode = #tpu.pipeline_mode<synchronous>, transform_indices = @transform_9, window_bounds = array<i64: 8, 4>}, {pipeline_mode = #tpu.pipeline_mode<synchronous>, transform_indices = @transform_10, window_bounds = array<i64: 8, 4>}, {transform_indices = @transform_11, window_bounds = array<i64: 1, 1, 4>}, {transform_indices = @transform_12, window_bounds = array<i64: 1, 16, 8, 4>}]} {
    %c0 = arith.constant 0 : index
    %c0_0 = arith.constant 0 : index
    %c0_1 = arith.constant 0 : index
    %c0_2 = arith.constant 0 : index
    %0 = vector.load %arg2[%c0, %c0_0, %c0_1, %c0_2] : memref<1x16x8x4xbf16, #tpu.memory_space<vmem>>, vector<1x16x8x4xbf16>
    %1 = vector.shape_cast %0 : vector<1x16x8x4xbf16> to vector<16x8x4xbf16>
    %2 = vector.shape_cast %1 : vector<16x8x4xbf16> to vector<128x4xbf16>
    %c0_3 = arith.constant 0 : index
    %c0_4 = arith.constant 0 : index
    %3 = vector.load %arg3[%c0_3, %c0_4] : memref<4x8xbf16, #tpu.memory_space<vmem>>, vector<4x8xbf16>
    %cst = arith.constant dense<0.000000e+00> : vector<128x8xf32>
    %4 = tpu.matmul %2, %3, %cst {dimension_numbers = #tpu.dot_dimension_numbers<[1], [0], [0], [1], [0, 0, 1, 1], [], []>} : vector<128x4xbf16>, vector<4x8xbf16>, vector<128x8xf32> -> vector<128x8xf32>
    %c0_5 = arith.constant 0 : index
    %c0_6 = arith.constant 0 : index
    %5 = vector.load %arg4[%c0_5, %c0_6] : memref<1x8xf32, #tpu.memory_space<vmem>>, vector<1x8xf32>
    %6 = vector.broadcast %5 : vector<1x8xf32> to vector<128x8xf32>
    %7 = arith.addf %4, %6 : vector<128x8xf32>
    %8 = vector.shape_cast %7 : vector<128x8xf32> to vector<16x8x8xf32>
    %c0_7 = arith.constant 0 : index
    %c0_8 = arith.constant 0 : index
    %9 = vector.load %arg5[%c0_7, %c0_8] : memref<4x8xbf16, #tpu.memory_space<vmem>>, vector<4x8xbf16>
    %cst_9 = arith.constant dense<0.000000e+00> : vector<128x8xf32>
    %10 = tpu.matmul %2, %9, %cst_9 {dimension_numbers = #tpu.dot_dimension_numbers<[1], [0], [0], [1], [0, 0, 1, 1], [], []>} : vector<128x4xbf16>, vector<4x8xbf16>, vector<128x8xf32> -> vector<128x8xf32>
    %c0_10 = arith.constant 0 : index
    %c0_11 = arith.constant 0 : index
    %11 = vector.load %arg6[%c0_10, %c0_11] : memref<1x8xf32, #tpu.memory_space<vmem>>, vector<1x8xf32>
    %12 = vector.broadcast %11 : vector<1x8xf32> to vector<128x8xf32>
    %13 = arith.addf %10, %12 : vector<128x8xf32>
    %14 = vector.shape_cast %13 : vector<128x8xf32> to vector<16x8x8xf32>
    %c1 = arith.constant 1 : index
    %c1_12 = arith.constant 1 : index
    %c0_13 = arith.constant 0 : index
    %15 = vector.load %arg15[%c1, %c1_12, %c0_13] : memref<18x10x8xf32, #tpu.memory_space<vmem>>, vector<16x8x8xf32>
    tpu.vector_store %arg15[%c1, %c1_12, %c0_13], %8 {strides = array<i32>} : memref<18x10x8xf32, #tpu.memory_space<vmem>>, vector<16x8x8xf32>,
    %c2 = arith.constant 2 : index
    %c2_14 = arith.constant 2 : index
    %c0_15 = arith.constant 0 : index
    %16 = vector.load %arg16[%c2, %c2_14, %c0_15] : memref<20x12x8xf32, #tpu.memory_space<vmem>>, vector<16x8x8xf32>
    tpu.vector_store %arg16[%c2, %c2_14, %c0_15], %14 {strides = array<i32>} : memref<20x12x8xf32, #tpu.memory_space<vmem>>, vector<16x8x8xf32>,
    %cst_16 = arith.constant 0.000000e+00 : f32
    %17 = vector.broadcast %cst_16 : f32 to vector<18x1x8xf32>
    %c0_17 = arith.constant 0 : index
    %c0_18 = arith.constant 0 : index
    %c0_19 = arith.constant 0 : index
    %18 = vector.load %arg15[%c0_17, %c0_18, %c0_19] : memref<18x10x8xf32, #tpu.memory_space<vmem>>, vector<18x1x8xf32>
    tpu.vector_store %arg15[%c0_17, %c0_18, %c0_19], %17 {strides = array<i32>} : memref<18x10x8xf32, #tpu.memory_space<vmem>>, vector<18x1x8xf32>,
    %cst_20 = arith.constant 0.000000e+00 : f32
    %19 = vector.broadcast %cst_20 : f32 to vector<18x1x8xf32>
    %c0_21 = arith.constant 0 : index
    %c9 = arith.constant 9 : index
    %c0_22 = arith.constant 0 : index
    %20 = vector.load %arg15[%c0_21, %c9, %c0_22] : memref<18x10x8xf32, #tpu.memory_space<vmem>>, vector<18x1x8xf32>
    tpu.vector_store %arg15[%c0_21, %c9, %c0_22], %19 {strides = array<i32>} : memref<18x10x8xf32, #tpu.memory_space<vmem>>, vector<18x1x8xf32>,
    %cst_23 = arith.constant 0.000000e+00 : f32
    %21 = vector.broadcast %cst_23 : f32 to vector<20x2x8xf32>
    %c0_24 = arith.constant 0 : index
    %c0_25 = arith.constant 0 : index
    %c0_26 = arith.constant 0 : index
    %22 = vector.load %arg16[%c0_24, %c0_25, %c0_26] : memref<20x12x8xf32, #tpu.memory_space<vmem>>, vector<20x2x8xf32>
    tpu.vector_store %arg16[%c0_24, %c0_25, %c0_26], %21 {strides = array<i32>} : memref<20x12x8xf32, #tpu.memory_space<vmem>>, vector<20x2x8xf32>,
    %cst_27 = arith.constant 0.000000e+00 : f32
    %23 = vector.broadcast %cst_27 : f32 to vector<20x2x8xf32>
    %c0_28 = arith.constant 0 : index
    %c10 = arith.constant 10 : index
    %c0_29 = arith.constant 0 : index
    %24 = vector.load %arg16[%c0_28, %c10, %c0_29] : memref<20x12x8xf32, #tpu.memory_space<vmem>>, vector<20x2x8xf32>
    tpu.vector_store %arg16[%c0_28, %c10, %c0_29], %23 {strides = array<i32>} : memref<20x12x8xf32, #tpu.memory_space<vmem>>, vector<20x2x8xf32>,
    %c0_i32 = arith.constant 0 : i32
    %25 = arith.cmpi eq, %arg1, %c0_i32 : i32
    %26 = arith.extui %25 : i1 to i32
    %c0_i32_30 = arith.constant 0 : i32
    %27 = arith.cmpi ne, %26, %c0_i32_30 : i32
    scf.if %27 {
      %cst_86 = arith.constant 0.000000e+00 : f32
      %328 = vector.broadcast %cst_86 : f32 to vector<1x10x8xf32>
      %c0_87 = arith.constant 0 : index
      %c0_88 = arith.constant 0 : index
      %c0_89 = arith.constant 0 : index
      %329 = vector.load %arg15[%c0_87, %c0_88, %c0_89] : memref<18x10x8xf32, #tpu.memory_space<vmem>>, vector<1x10x8xf32>
      tpu.vector_store %arg15[%c0_87, %c0_88, %c0_89], %328 {strides = array<i32>} : memref<18x10x8xf32, #tpu.memory_space<vmem>>, vector<1x10x8xf32>,
      %cst_90 = arith.constant 0.000000e+00 : f32
      %330 = vector.broadcast %cst_90 : f32 to vector<2x12x8xf32>
      %c0_91 = arith.constant 0 : index
      %c0_92 = arith.constant 0 : index
      %c0_93 = arith.constant 0 : index
      %331 = vector.load %arg16[%c0_91, %c0_92, %c0_93] : memref<20x12x8xf32, #tpu.memory_space<vmem>>, vector<2x12x8xf32>
      tpu.vector_store %arg16[%c0_91, %c0_92, %c0_93], %330 {strides = array<i32>} : memref<20x12x8xf32, #tpu.memory_space<vmem>>, vector<2x12x8xf32>,
    } else {
    }
    %c0_i32_31 = arith.constant 0 : i32
    %28 = arith.cmpi eq, %arg1, %c0_i32_31 : i32
    %29 = arith.extui %28 : i1 to i32
    %c0_i32_32 = arith.constant 0 : i32
    %30 = arith.cmpi ne, %29, %c0_i32_32 : i32
    scf.if %30 {
      %cst_86 = arith.constant 0.000000e+00 : f32
      %328 = vector.broadcast %cst_86 : f32 to vector<1x10x8xf32>
      %c17 = arith.constant 17 : index
      %c0_87 = arith.constant 0 : index
      %c0_88 = arith.constant 0 : index
      %329 = vector.load %arg15[%c17, %c0_87, %c0_88] : memref<18x10x8xf32, #tpu.memory_space<vmem>>, vector<1x10x8xf32>
      tpu.vector_store %arg15[%c17, %c0_87, %c0_88], %328 {strides = array<i32>} : memref<18x10x8xf32, #tpu.memory_space<vmem>>, vector<1x10x8xf32>,
      %cst_89 = arith.constant 0.000000e+00 : f32
      %330 = vector.broadcast %cst_89 : f32 to vector<2x12x8xf32>
      %c18 = arith.constant 18 : index
      %c0_90 = arith.constant 0 : index
      %c0_91 = arith.constant 0 : index
      %331 = vector.load %arg16[%c18, %c0_90, %c0_91] : memref<20x12x8xf32, #tpu.memory_space<vmem>>, vector<2x12x8xf32>
      tpu.vector_store %arg16[%c18, %c0_90, %c0_91], %330 {strides = array<i32>} : memref<20x12x8xf32, #tpu.memory_space<vmem>>, vector<2x12x8xf32>,
    } else {
    }
    %c0_33 = arith.constant 0 : index
    %c0_34 = arith.constant 0 : index
    %c0_35 = arith.constant 0 : index
    %31 = vector.load %arg7[%c0_33, %c0_34, %c0_35] : memref<3x3x8xf32, #tpu.memory_space<vmem>>, vector<3x3x8xf32>
    %c0_36 = arith.constant 0 : index
    %c0_37 = arith.constant 0 : index
    %c0_38 = arith.constant 0 : index
    %32 = vector.load %arg9[%c0_36, %c0_37, %c0_38] : memref<5x5x8xf32, #tpu.memory_space<vmem>>, vector<5x5x8xf32>
    %c0_39 = arith.constant 0 : index
    %c0_40 = arith.constant 0 : index
    %c0_41 = arith.constant 0 : index
    %33 = vector.load %arg15[%c0_39, %c0_40, %c0_41] : memref<18x10x8xf32, #tpu.memory_space<vmem>>, vector<18x8x8xf32>
    %c0_42 = arith.constant 0 : index
    %c1_43 = arith.constant 1 : index
    %c0_44 = arith.constant 0 : index
    %34 = vector.load %arg15[%c0_42, %c1_43, %c0_44] : memref<18x10x8xf32, #tpu.memory_space<vmem>>, vector<18x8x8xf32>
    %c0_45 = arith.constant 0 : index
    %c2_46 = arith.constant 2 : index
    %c0_47 = arith.constant 0 : index
    %35 = vector.load %arg15[%c0_45, %c2_46, %c0_47] : memref<18x10x8xf32, #tpu.memory_space<vmem>>, vector<18x8x8xf32>
    %c0_48 = arith.constant 0 : index
    %c0_49 = arith.constant 0 : index
    %c0_50 = arith.constant 0 : index
    %36 = vector.load %arg16[%c0_48, %c0_49, %c0_50] : memref<20x12x8xf32, #tpu.memory_space<vmem>>, vector<20x8x8xf32>
    %c0_51 = arith.constant 0 : index
    %c1_52 = arith.constant 1 : index
    %c0_53 = arith.constant 0 : index
    %37 = vector.load %arg16[%c0_51, %c1_52, %c0_53] : memref<20x12x8xf32, #tpu.memory_space<vmem>>, vector<20x8x8xf32>
    %c0_54 = arith.constant 0 : index
    %c2_55 = arith.constant 2 : index
    %c0_56 = arith.constant 0 : index
    %38 = vector.load %arg16[%c0_54, %c2_55, %c0_56] : memref<20x12x8xf32, #tpu.memory_space<vmem>>, vector<20x8x8xf32>
    %c0_57 = arith.constant 0 : index
    %c3 = arith.constant 3 : index
    %c0_58 = arith.constant 0 : index
    %39 = vector.load %arg16[%c0_57, %c3, %c0_58] : memref<20x12x8xf32, #tpu.memory_space<vmem>>, vector<20x8x8xf32>
    %c0_59 = arith.constant 0 : index
    %c4 = arith.constant 4 : index
    %c0_60 = arith.constant 0 : index
    %40 = vector.load %arg16[%c0_59, %c4, %c0_60] : memref<20x12x8xf32, #tpu.memory_space<vmem>>, vector<20x8x8xf32>
    %41 = vector.extract_strided_slice %33 {offsets = [0, 0, 0], sizes = [16, 8, 8], strides = [1, 1, 1]} : vector<18x8x8xf32> to vector<16x8x8xf32>
    %42 = vector.extract_strided_slice %31 {offsets = [0, 0, 0], sizes = [1, 1, 8], strides = [1, 1, 1]} : vector<3x3x8xf32> to vector<1x1x8xf32>
    %43 = vector.shape_cast %42 : vector<1x1x8xf32> to vector<8xf32>
    %44 = vector.shape_cast %43 : vector<8xf32> to vector<1x1x8xf32>
    %45 = vector.broadcast %44 : vector<1x1x8xf32> to vector<16x8x8xf32>
    %46 = arith.mulf %41, %45 : vector<16x8x8xf32>
    %c0_61 = arith.constant 0 : index
    %c0_62 = arith.constant 0 : index
    %47 = vector.load %arg8[%c0_61, %c0_62] : memref<1x8xf32, #tpu.memory_space<vmem>>, vector<1x8xf32>
    %48 = vector.shape_cast %47 : vector<1x8xf32> to vector<1x1x8xf32>
    %49 = vector.broadcast %48 : vector<1x1x8xf32> to vector<16x8x8xf32>
    %50 = arith.addf %46, %49 : vector<16x8x8xf32>
    %51 = vector.extract_strided_slice %34 {offsets = [0, 0, 0], sizes = [16, 8, 8], strides = [1, 1, 1]} : vector<18x8x8xf32> to vector<16x8x8xf32>
    %52 = vector.extract_strided_slice %31 {offsets = [0, 1, 0], sizes = [1, 1, 8], strides = [1, 1, 1]} : vector<3x3x8xf32> to vector<1x1x8xf32>
    %53 = vector.shape_cast %52 : vector<1x1x8xf32> to vector<8xf32>
    %54 = vector.shape_cast %53 : vector<8xf32> to vector<1x1x8xf32>
    %55 = vector.broadcast %54 : vector<1x1x8xf32> to vector<16x8x8xf32>
    %56 = arith.mulf %51, %55 : vector<16x8x8xf32>
    %57 = arith.addf %50, %56 : vector<16x8x8xf32>
    %58 = vector.extract_strided_slice %35 {offsets = [0, 0, 0], sizes = [16, 8, 8], strides = [1, 1, 1]} : vector<18x8x8xf32> to vector<16x8x8xf32>
    %59 = vector.extract_strided_slice %31 {offsets = [0, 2, 0], sizes = [1, 1, 8], strides = [1, 1, 1]} : vector<3x3x8xf32> to vector<1x1x8xf32>
    %60 = vector.shape_cast %59 : vector<1x1x8xf32> to vector<8xf32>
    %61 = vector.shape_cast %60 : vector<8xf32> to vector<1x1x8xf32>
    %62 = vector.broadcast %61 : vector<1x1x8xf32> to vector<16x8x8xf32>
    %63 = arith.mulf %58, %62 : vector<16x8x8xf32>
    %64 = arith.addf %57, %63 : vector<16x8x8xf32>
    %65 = vector.extract_strided_slice %33 {offsets = [1, 0, 0], sizes = [16, 8, 8], strides = [1, 1, 1]} : vector<18x8x8xf32> to vector<16x8x8xf32>
    %66 = vector.extract_strided_slice %31 {offsets = [1, 0, 0], sizes = [1, 1, 8], strides = [1, 1, 1]} : vector<3x3x8xf32> to vector<1x1x8xf32>
    %67 = vector.shape_cast %66 : vector<1x1x8xf32> to vector<8xf32>
    %68 = vector.shape_cast %67 : vector<8xf32> to vector<1x1x8xf32>
    %69 = vector.broadcast %68 : vector<1x1x8xf32> to vector<16x8x8xf32>
    %70 = arith.mulf %65, %69 : vector<16x8x8xf32>
    %71 = arith.addf %64, %70 : vector<16x8x8xf32>
    %72 = vector.extract_strided_slice %34 {offsets = [1, 0, 0], sizes = [16, 8, 8], strides = [1, 1, 1]} : vector<18x8x8xf32> to vector<16x8x8xf32>
    %73 = vector.extract_strided_slice %31 {offsets = [1, 1, 0], sizes = [1, 1, 8], strides = [1, 1, 1]} : vector<3x3x8xf32> to vector<1x1x8xf32>
    %74 = vector.shape_cast %73 : vector<1x1x8xf32> to vector<8xf32>
    %75 = vector.shape_cast %74 : vector<8xf32> to vector<1x1x8xf32>
    %76 = vector.broadcast %75 : vector<1x1x8xf32> to vector<16x8x8xf32>
    %77 = arith.mulf %72, %76 : vector<16x8x8xf32>
    %78 = arith.addf %71, %77 : vector<16x8x8xf32>
    %79 = vector.extract_strided_slice %35 {offsets = [1, 0, 0], sizes = [16, 8, 8], strides = [1, 1, 1]} : vector<18x8x8xf32> to vector<16x8x8xf32>
    %80 = vector.extract_strided_slice %31 {offsets = [1, 2, 0], sizes = [1, 1, 8], strides = [1, 1, 1]} : vector<3x3x8xf32> to vector<1x1x8xf32>
    %81 = vector.shape_cast %80 : vector<1x1x8xf32> to vector<8xf32>
    %82 = vector.shape_cast %81 : vector<8xf32> to vector<1x1x8xf32>
    %83 = vector.broadcast %82 : vector<1x1x8xf32> to vector<16x8x8xf32>
    %84 = arith.mulf %79, %83 : vector<16x8x8xf32>
    %85 = arith.addf %78, %84 : vector<16x8x8xf32>
    %86 = vector.extract_strided_slice %33 {offsets = [2, 0, 0], sizes = [16, 8, 8], strides = [1, 1, 1]} : vector<18x8x8xf32> to vector<16x8x8xf32>
    %87 = vector.extract_strided_slice %31 {offsets = [2, 0, 0], sizes = [1, 1, 8], strides = [1, 1, 1]} : vector<3x3x8xf32> to vector<1x1x8xf32>
    %88 = vector.shape_cast %87 : vector<1x1x8xf32> to vector<8xf32>
    %89 = vector.shape_cast %88 : vector<8xf32> to vector<1x1x8xf32>
    %90 = vector.broadcast %89 : vector<1x1x8xf32> to vector<16x8x8xf32>
    %91 = arith.mulf %86, %90 : vector<16x8x8xf32>
    %92 = arith.addf %85, %91 : vector<16x8x8xf32>
    %93 = vector.extract_strided_slice %34 {offsets = [2, 0, 0], sizes = [16, 8, 8], strides = [1, 1, 1]} : vector<18x8x8xf32> to vector<16x8x8xf32>
    %94 = vector.extract_strided_slice %31 {offsets = [2, 1, 0], sizes = [1, 1, 8], strides = [1, 1, 1]} : vector<3x3x8xf32> to vector<1x1x8xf32>
    %95 = vector.shape_cast %94 : vector<1x1x8xf32> to vector<8xf32>
    %96 = vector.shape_cast %95 : vector<8xf32> to vector<1x1x8xf32>
    %97 = vector.broadcast %96 : vector<1x1x8xf32> to vector<16x8x8xf32>
    %98 = arith.mulf %93, %97 : vector<16x8x8xf32>
    %99 = arith.addf %92, %98 : vector<16x8x8xf32>
    %100 = vector.extract_strided_slice %35 {offsets = [2, 0, 0], sizes = [16, 8, 8], strides = [1, 1, 1]} : vector<18x8x8xf32> to vector<16x8x8xf32>
    %101 = vector.extract_strided_slice %31 {offsets = [2, 2, 0], sizes = [1, 1, 8], strides = [1, 1, 1]} : vector<3x3x8xf32> to vector<1x1x8xf32>
    %102 = vector.shape_cast %101 : vector<1x1x8xf32> to vector<8xf32>
    %103 = vector.shape_cast %102 : vector<8xf32> to vector<1x1x8xf32>
    %104 = vector.broadcast %103 : vector<1x1x8xf32> to vector<16x8x8xf32>
    %105 = arith.mulf %100, %104 : vector<16x8x8xf32>
    %106 = arith.addf %99, %105 : vector<16x8x8xf32>
    %107 = vector.extract_strided_slice %36 {offsets = [0, 0, 0], sizes = [16, 8, 8], strides = [1, 1, 1]} : vector<20x8x8xf32> to vector<16x8x8xf32>
    %108 = vector.extract_strided_slice %32 {offsets = [0, 0, 0], sizes = [1, 1, 8], strides = [1, 1, 1]} : vector<5x5x8xf32> to vector<1x1x8xf32>
    %109 = vector.shape_cast %108 : vector<1x1x8xf32> to vector<8xf32>
    %110 = vector.shape_cast %109 : vector<8xf32> to vector<1x1x8xf32>
    %111 = vector.broadcast %110 : vector<1x1x8xf32> to vector<16x8x8xf32>
    %112 = arith.mulf %107, %111 : vector<16x8x8xf32>
    %c0_63 = arith.constant 0 : index
    %c0_64 = arith.constant 0 : index
    %113 = vector.load %arg10[%c0_63, %c0_64] : memref<1x8xf32, #tpu.memory_space<vmem>>, vector<1x8xf32>
    %114 = vector.shape_cast %113 : vector<1x8xf32> to vector<1x1x8xf32>
    %115 = vector.broadcast %114 : vector<1x1x8xf32> to vector<16x8x8xf32>
    %116 = arith.addf %112, %115 : vector<16x8x8xf32>
    %117 = vector.extract_strided_slice %37 {offsets = [0, 0, 0], sizes = [16, 8, 8], strides = [1, 1, 1]} : vector<20x8x8xf32> to vector<16x8x8xf32>
    %118 = vector.extract_strided_slice %32 {offsets = [0, 1, 0], sizes = [1, 1, 8], strides = [1, 1, 1]} : vector<5x5x8xf32> to vector<1x1x8xf32>
    %119 = vector.shape_cast %118 : vector<1x1x8xf32> to vector<8xf32>
    %120 = vector.shape_cast %119 : vector<8xf32> to vector<1x1x8xf32>
    %121 = vector.broadcast %120 : vector<1x1x8xf32> to vector<16x8x8xf32>
    %122 = arith.mulf %117, %121 : vector<16x8x8xf32>
    %123 = arith.addf %116, %122 : vector<16x8x8xf32>
    %124 = vector.extract_strided_slice %38 {offsets = [0, 0, 0], sizes = [16, 8, 8], strides = [1, 1, 1]} : vector<20x8x8xf32> to vector<16x8x8xf32>
    %125 = vector.extract_strided_slice %32 {offsets = [0, 2, 0], sizes = [1, 1, 8], strides = [1, 1, 1]} : vector<5x5x8xf32> to vector<1x1x8xf32>
    %126 = vector.shape_cast %125 : vector<1x1x8xf32> to vector<8xf32>
    %127 = vector.shape_cast %126 : vector<8xf32> to vector<1x1x8xf32>
    %128 = vector.broadcast %127 : vector<1x1x8xf32> to vector<16x8x8xf32>
    %129 = arith.mulf %124, %128 : vector<16x8x8xf32>
    %130 = arith.addf %123, %129 : vector<16x8x8xf32>
    %131 = vector.extract_strided_slice %39 {offsets = [0, 0, 0], sizes = [16, 8, 8], strides = [1, 1, 1]} : vector<20x8x8xf32> to vector<16x8x8xf32>
    %132 = vector.extract_strided_slice %32 {offsets = [0, 3, 0], sizes = [1, 1, 8], strides = [1, 1, 1]} : vector<5x5x8xf32> to vector<1x1x8xf32>
    %133 = vector.shape_cast %132 : vector<1x1x8xf32> to vector<8xf32>
    %134 = vector.shape_cast %133 : vector<8xf32> to vector<1x1x8xf32>
    %135 = vector.broadcast %134 : vector<1x1x8xf32> to vector<16x8x8xf32>
    %136 = arith.mulf %131, %135 : vector<16x8x8xf32>
    %137 = arith.addf %130, %136 : vector<16x8x8xf32>
    %138 = vector.extract_strided_slice %40 {offsets = [0, 0, 0], sizes = [16, 8, 8], strides = [1, 1, 1]} : vector<20x8x8xf32> to vector<16x8x8xf32>
    %139 = vector.extract_strided_slice %32 {offsets = [0, 4, 0], sizes = [1, 1, 8], strides = [1, 1, 1]} : vector<5x5x8xf32> to vector<1x1x8xf32>
    %140 = vector.shape_cast %139 : vector<1x1x8xf32> to vector<8xf32>
    %141 = vector.shape_cast %140 : vector<8xf32> to vector<1x1x8xf32>
    %142 = vector.broadcast %141 : vector<1x1x8xf32> to vector<16x8x8xf32>
    %143 = arith.mulf %138, %142 : vector<16x8x8xf32>
    %144 = arith.addf %137, %143 : vector<16x8x8xf32>
    %145 = vector.extract_strided_slice %36 {offsets = [1, 0, 0], sizes = [16, 8, 8], strides = [1, 1, 1]} : vector<20x8x8xf32> to vector<16x8x8xf32>
    %146 = vector.extract_strided_slice %32 {offsets = [1, 0, 0], sizes = [1, 1, 8], strides = [1, 1, 1]} : vector<5x5x8xf32> to vector<1x1x8xf32>
    %147 = vector.shape_cast %146 : vector<1x1x8xf32> to vector<8xf32>
    %148 = vector.shape_cast %147 : vector<8xf32> to vector<1x1x8xf32>
    %149 = vector.broadcast %148 : vector<1x1x8xf32> to vector<16x8x8xf32>
    %150 = arith.mulf %145, %149 : vector<16x8x8xf32>
    %151 = arith.addf %144, %150 : vector<16x8x8xf32>
    %152 = vector.extract_strided_slice %37 {offsets = [1, 0, 0], sizes = [16, 8, 8], strides = [1, 1, 1]} : vector<20x8x8xf32> to vector<16x8x8xf32>
    %153 = vector.extract_strided_slice %32 {offsets = [1, 1, 0], sizes = [1, 1, 8], strides = [1, 1, 1]} : vector<5x5x8xf32> to vector<1x1x8xf32>
    %154 = vector.shape_cast %153 : vector<1x1x8xf32> to vector<8xf32>
    %155 = vector.shape_cast %154 : vector<8xf32> to vector<1x1x8xf32>
    %156 = vector.broadcast %155 : vector<1x1x8xf32> to vector<16x8x8xf32>
    %157 = arith.mulf %152, %156 : vector<16x8x8xf32>
    %158 = arith.addf %151, %157 : vector<16x8x8xf32>
    %159 = vector.extract_strided_slice %38 {offsets = [1, 0, 0], sizes = [16, 8, 8], strides = [1, 1, 1]} : vector<20x8x8xf32> to vector<16x8x8xf32>
    %160 = vector.extract_strided_slice %32 {offsets = [1, 2, 0], sizes = [1, 1, 8], strides = [1, 1, 1]} : vector<5x5x8xf32> to vector<1x1x8xf32>
    %161 = vector.shape_cast %160 : vector<1x1x8xf32> to vector<8xf32>
    %162 = vector.shape_cast %161 : vector<8xf32> to vector<1x1x8xf32>
    %163 = vector.broadcast %162 : vector<1x1x8xf32> to vector<16x8x8xf32>
    %164 = arith.mulf %159, %163 : vector<16x8x8xf32>
    %165 = arith.addf %158, %164 : vector<16x8x8xf32>
    %166 = vector.extract_strided_slice %39 {offsets = [1, 0, 0], sizes = [16, 8, 8], strides = [1, 1, 1]} : vector<20x8x8xf32> to vector<16x8x8xf32>
    %167 = vector.extract_strided_slice %32 {offsets = [1, 3, 0], sizes = [1, 1, 8], strides = [1, 1, 1]} : vector<5x5x8xf32> to vector<1x1x8xf32>
    %168 = vector.shape_cast %167 : vector<1x1x8xf32> to vector<8xf32>
    %169 = vector.shape_cast %168 : vector<8xf32> to vector<1x1x8xf32>
    %170 = vector.broadcast %169 : vector<1x1x8xf32> to vector<16x8x8xf32>
    %171 = arith.mulf %166, %170 : vector<16x8x8xf32>
    %172 = arith.addf %165, %171 : vector<16x8x8xf32>
    %173 = vector.extract_strided_slice %40 {offsets = [1, 0, 0], sizes = [16, 8, 8], strides = [1, 1, 1]} : vector<20x8x8xf32> to vector<16x8x8xf32>
    %174 = vector.extract_strided_slice %32 {offsets = [1, 4, 0], sizes = [1, 1, 8], strides = [1, 1, 1]} : vector<5x5x8xf32> to vector<1x1x8xf32>
    %175 = vector.shape_cast %174 : vector<1x1x8xf32> to vector<8xf32>
    %176 = vector.shape_cast %175 : vector<8xf32> to vector<1x1x8xf32>
    %177 = vector.broadcast %176 : vector<1x1x8xf32> to vector<16x8x8xf32>
    %178 = arith.mulf %173, %177 : vector<16x8x8xf32>
    %179 = arith.addf %172, %178 : vector<16x8x8xf32>
    %180 = vector.extract_strided_slice %36 {offsets = [2, 0, 0], sizes = [16, 8, 8], strides = [1, 1, 1]} : vector<20x8x8xf32> to vector<16x8x8xf32>
    %181 = vector.extract_strided_slice %32 {offsets = [2, 0, 0], sizes = [1, 1, 8], strides = [1, 1, 1]} : vector<5x5x8xf32> to vector<1x1x8xf32>
    %182 = vector.shape_cast %181 : vector<1x1x8xf32> to vector<8xf32>
    %183 = vector.shape_cast %182 : vector<8xf32> to vector<1x1x8xf32>
    %184 = vector.broadcast %183 : vector<1x1x8xf32> to vector<16x8x8xf32>
    %185 = arith.mulf %180, %184 : vector<16x8x8xf32>
    %186 = arith.addf %179, %185 : vector<16x8x8xf32>
    %187 = vector.extract_strided_slice %37 {offsets = [2, 0, 0], sizes = [16, 8, 8], strides = [1, 1, 1]} : vector<20x8x8xf32> to vector<16x8x8xf32>
    %188 = vector.extract_strided_slice %32 {offsets = [2, 1, 0], sizes = [1, 1, 8], strides = [1, 1, 1]} : vector<5x5x8xf32> to vector<1x1x8xf32>
    %189 = vector.shape_cast %188 : vector<1x1x8xf32> to vector<8xf32>
    %190 = vector.shape_cast %189 : vector<8xf32> to vector<1x1x8xf32>
    %191 = vector.broadcast %190 : vector<1x1x8xf32> to vector<16x8x8xf32>
    %192 = arith.mulf %187, %191 : vector<16x8x8xf32>
    %193 = arith.addf %186, %192 : vector<16x8x8xf32>
    %194 = vector.extract_strided_slice %38 {offsets = [2, 0, 0], sizes = [16, 8, 8], strides = [1, 1, 1]} : vector<20x8x8xf32> to vector<16x8x8xf32>
    %195 = vector.extract_strided_slice %32 {offsets = [2, 2, 0], sizes = [1, 1, 8], strides = [1, 1, 1]} : vector<5x5x8xf32> to vector<1x1x8xf32>
    %196 = vector.shape_cast %195 : vector<1x1x8xf32> to vector<8xf32>
    %197 = vector.shape_cast %196 : vector<8xf32> to vector<1x1x8xf32>
    %198 = vector.broadcast %197 : vector<1x1x8xf32> to vector<16x8x8xf32>
    %199 = arith.mulf %194, %198 : vector<16x8x8xf32>
    %200 = arith.addf %193, %199 : vector<16x8x8xf32>
    %201 = vector.extract_strided_slice %39 {offsets = [2, 0, 0], sizes = [16, 8, 8], strides = [1, 1, 1]} : vector<20x8x8xf32> to vector<16x8x8xf32>
    %202 = vector.extract_strided_slice %32 {offsets = [2, 3, 0], sizes = [1, 1, 8], strides = [1, 1, 1]} : vector<5x5x8xf32> to vector<1x1x8xf32>
    %203 = vector.shape_cast %202 : vector<1x1x8xf32> to vector<8xf32>
    %204 = vector.shape_cast %203 : vector<8xf32> to vector<1x1x8xf32>
    %205 = vector.broadcast %204 : vector<1x1x8xf32> to vector<16x8x8xf32>
    %206 = arith.mulf %201, %205 : vector<16x8x8xf32>
    %207 = arith.addf %200, %206 : vector<16x8x8xf32>
    %208 = vector.extract_strided_slice %40 {offsets = [2, 0, 0], sizes = [16, 8, 8], strides = [1, 1, 1]} : vector<20x8x8xf32> to vector<16x8x8xf32>
    %209 = vector.extract_strided_slice %32 {offsets = [2, 4, 0], sizes = [1, 1, 8], strides = [1, 1, 1]} : vector<5x5x8xf32> to vector<1x1x8xf32>
    %210 = vector.shape_cast %209 : vector<1x1x8xf32> to vector<8xf32>
    %211 = vector.shape_cast %210 : vector<8xf32> to vector<1x1x8xf32>
    %212 = vector.broadcast %211 : vector<1x1x8xf32> to vector<16x8x8xf32>
    %213 = arith.mulf %208, %212 : vector<16x8x8xf32>
    %214 = arith.addf %207, %213 : vector<16x8x8xf32>
    %215 = vector.extract_strided_slice %36 {offsets = [3, 0, 0], sizes = [16, 8, 8], strides = [1, 1, 1]} : vector<20x8x8xf32> to vector<16x8x8xf32>
    %216 = vector.extract_strided_slice %32 {offsets = [3, 0, 0], sizes = [1, 1, 8], strides = [1, 1, 1]} : vector<5x5x8xf32> to vector<1x1x8xf32>
    %217 = vector.shape_cast %216 : vector<1x1x8xf32> to vector<8xf32>
    %218 = vector.shape_cast %217 : vector<8xf32> to vector<1x1x8xf32>
    %219 = vector.broadcast %218 : vector<1x1x8xf32> to vector<16x8x8xf32>
    %220 = arith.mulf %215, %219 : vector<16x8x8xf32>
    %221 = arith.addf %214, %220 : vector<16x8x8xf32>
    %222 = vector.extract_strided_slice %37 {offsets = [3, 0, 0], sizes = [16, 8, 8], strides = [1, 1, 1]} : vector<20x8x8xf32> to vector<16x8x8xf32>
    %223 = vector.extract_strided_slice %32 {offsets = [3, 1, 0], sizes = [1, 1, 8], strides = [1, 1, 1]} : vector<5x5x8xf32> to vector<1x1x8xf32>
    %224 = vector.shape_cast %223 : vector<1x1x8xf32> to vector<8xf32>
    %225 = vector.shape_cast %224 : vector<8xf32> to vector<1x1x8xf32>
    %226 = vector.broadcast %225 : vector<1x1x8xf32> to vector<16x8x8xf32>
    %227 = arith.mulf %222, %226 : vector<16x8x8xf32>
    %228 = arith.addf %221, %227 : vector<16x8x8xf32>
    %229 = vector.extract_strided_slice %38 {offsets = [3, 0, 0], sizes = [16, 8, 8], strides = [1, 1, 1]} : vector<20x8x8xf32> to vector<16x8x8xf32>
    %230 = vector.extract_strided_slice %32 {offsets = [3, 2, 0], sizes = [1, 1, 8], strides = [1, 1, 1]} : vector<5x5x8xf32> to vector<1x1x8xf32>
    %231 = vector.shape_cast %230 : vector<1x1x8xf32> to vector<8xf32>
    %232 = vector.shape_cast %231 : vector<8xf32> to vector<1x1x8xf32>
    %233 = vector.broadcast %232 : vector<1x1x8xf32> to vector<16x8x8xf32>
    %234 = arith.mulf %229, %233 : vector<16x8x8xf32>
    %235 = arith.addf %228, %234 : vector<16x8x8xf32>
    %236 = vector.extract_strided_slice %39 {offsets = [3, 0, 0], sizes = [16, 8, 8], strides = [1, 1, 1]} : vector<20x8x8xf32> to vector<16x8x8xf32>
    %237 = vector.extract_strided_slice %32 {offsets = [3, 3, 0], sizes = [1, 1, 8], strides = [1, 1, 1]} : vector<5x5x8xf32> to vector<1x1x8xf32>
    %238 = vector.shape_cast %237 : vector<1x1x8xf32> to vector<8xf32>
    %239 = vector.shape_cast %238 : vector<8xf32> to vector<1x1x8xf32>
    %240 = vector.broadcast %239 : vector<1x1x8xf32> to vector<16x8x8xf32>
    %241 = arith.mulf %236, %240 : vector<16x8x8xf32>
    %242 = arith.addf %235, %241 : vector<16x8x8xf32>
    %243 = vector.extract_strided_slice %40 {offsets = [3, 0, 0], sizes = [16, 8, 8], strides = [1, 1, 1]} : vector<20x8x8xf32> to vector<16x8x8xf32>
    %244 = vector.extract_strided_slice %32 {offsets = [3, 4, 0], sizes = [1, 1, 8], strides = [1, 1, 1]} : vector<5x5x8xf32> to vector<1x1x8xf32>
    %245 = vector.shape_cast %244 : vector<1x1x8xf32> to vector<8xf32>
    %246 = vector.shape_cast %245 : vector<8xf32> to vector<1x1x8xf32>
    %247 = vector.broadcast %246 : vector<1x1x8xf32> to vector<16x8x8xf32>
    %248 = arith.mulf %243, %247 : vector<16x8x8xf32>
    %249 = arith.addf %242, %248 : vector<16x8x8xf32>
    %250 = vector.extract_strided_slice %36 {offsets = [4, 0, 0], sizes = [16, 8, 8], strides = [1, 1, 1]} : vector<20x8x8xf32> to vector<16x8x8xf32>
    %251 = vector.extract_strided_slice %32 {offsets = [4, 0, 0], sizes = [1, 1, 8], strides = [1, 1, 1]} : vector<5x5x8xf32> to vector<1x1x8xf32>
    %252 = vector.shape_cast %251 : vector<1x1x8xf32> to vector<8xf32>
    %253 = vector.shape_cast %252 : vector<8xf32> to vector<1x1x8xf32>
    %254 = vector.broadcast %253 : vector<1x1x8xf32> to vector<16x8x8xf32>
    %255 = arith.mulf %250, %254 : vector<16x8x8xf32>
    %256 = arith.addf %249, %255 : vector<16x8x8xf32>
    %257 = vector.extract_strided_slice %37 {offsets = [4, 0, 0], sizes = [16, 8, 8], strides = [1, 1, 1]} : vector<20x8x8xf32> to vector<16x8x8xf32>
    %258 = vector.extract_strided_slice %32 {offsets = [4, 1, 0], sizes = [1, 1, 8], strides = [1, 1, 1]} : vector<5x5x8xf32> to vector<1x1x8xf32>
    %259 = vector.shape_cast %258 : vector<1x1x8xf32> to vector<8xf32>
    %260 = vector.shape_cast %259 : vector<8xf32> to vector<1x1x8xf32>
    %261 = vector.broadcast %260 : vector<1x1x8xf32> to vector<16x8x8xf32>
    %262 = arith.mulf %257, %261 : vector<16x8x8xf32>
    %263 = arith.addf %256, %262 : vector<16x8x8xf32>
    %264 = vector.extract_strided_slice %38 {offsets = [4, 0, 0], sizes = [16, 8, 8], strides = [1, 1, 1]} : vector<20x8x8xf32> to vector<16x8x8xf32>
    %265 = vector.extract_strided_slice %32 {offsets = [4, 2, 0], sizes = [1, 1, 8], strides = [1, 1, 1]} : vector<5x5x8xf32> to vector<1x1x8xf32>
    %266 = vector.shape_cast %265 : vector<1x1x8xf32> to vector<8xf32>
    %267 = vector.shape_cast %266 : vector<8xf32> to vector<1x1x8xf32>
    %268 = vector.broadcast %267 : vector<1x1x8xf32> to vector<16x8x8xf32>
    %269 = arith.mulf %264, %268 : vector<16x8x8xf32>
    %270 = arith.addf %263, %269 : vector<16x8x8xf32>
    %271 = vector.extract_strided_slice %39 {offsets = [4, 0, 0], sizes = [16, 8, 8], strides = [1, 1, 1]} : vector<20x8x8xf32> to vector<16x8x8xf32>
    %272 = vector.extract_strided_slice %32 {offsets = [4, 3, 0], sizes = [1, 1, 8], strides = [1, 1, 1]} : vector<5x5x8xf32> to vector<1x1x8xf32>
    %273 = vector.shape_cast %272 : vector<1x1x8xf32> to vector<8xf32>
    %274 = vector.shape_cast %273 : vector<8xf32> to vector<1x1x8xf32>
    %275 = vector.broadcast %274 : vector<1x1x8xf32> to vector<16x8x8xf32>
    %276 = arith.mulf %271, %275 : vector<16x8x8xf32>
    %277 = arith.addf %270, %276 : vector<16x8x8xf32>
    %278 = vector.extract_strided_slice %40 {offsets = [4, 0, 0], sizes = [16, 8, 8], strides = [1, 1, 1]} : vector<20x8x8xf32> to vector<16x8x8xf32>
    %279 = vector.extract_strided_slice %32 {offsets = [4, 4, 0], sizes = [1, 1, 8], strides = [1, 1, 1]} : vector<5x5x8xf32> to vector<1x1x8xf32>
    %280 = vector.shape_cast %279 : vector<1x1x8xf32> to vector<8xf32>
    %281 = vector.shape_cast %280 : vector<8xf32> to vector<1x1x8xf32>
    %282 = vector.broadcast %281 : vector<1x1x8xf32> to vector<16x8x8xf32>
    %283 = arith.mulf %278, %282 : vector<16x8x8xf32>
    %284 = arith.addf %277, %283 : vector<16x8x8xf32>
    %285 = arith.mulf %106, %106 : vector<16x8x8xf32>
    %286 = arith.mulf %106, %285 : vector<16x8x8xf32>
    %cst_65 = arith.constant 4.471500e-02 : f32
    %287 = vector.broadcast %cst_65 : f32 to vector<16x8x8xf32>
    %288 = arith.mulf %287, %286 : vector<16x8x8xf32>
    %289 = arith.addf %106, %288 : vector<16x8x8xf32>
    %cst_66 = arith.constant 0.797884583 : f32
    %290 = vector.broadcast %cst_66 : f32 to vector<16x8x8xf32>
    %291 = arith.mulf %290, %289 : vector<16x8x8xf32>
    %292 = math.tanh %291 : vector<16x8x8xf32>
    %cst_67 = arith.constant 1.000000e+00 : f32
    %293 = vector.broadcast %cst_67 : f32 to vector<16x8x8xf32>
    %294 = arith.addf %293, %292 : vector<16x8x8xf32>
    %cst_68 = arith.constant 5.000000e-01 : f32
    %295 = vector.broadcast %cst_68 : f32 to vector<16x8x8xf32>
    %296 = arith.mulf %295, %294 : vector<16x8x8xf32>
    %297 = arith.mulf %106, %296 : vector<16x8x8xf32>
    %298 = arith.mulf %284, %284 : vector<16x8x8xf32>
    %299 = arith.mulf %284, %298 : vector<16x8x8xf32>
    %cst_69 = arith.constant 4.471500e-02 : f32
    %300 = vector.broadcast %cst_69 : f32 to vector<16x8x8xf32>
    %301 = arith.mulf %300, %299 : vector<16x8x8xf32>
    %302 = arith.addf %284, %301 : vector<16x8x8xf32>
    %cst_70 = arith.constant 0.797884583 : f32
    %303 = vector.broadcast %cst_70 : f32 to vector<16x8x8xf32>
    %304 = arith.mulf %303, %302 : vector<16x8x8xf32>
    %305 = math.tanh %304 : vector<16x8x8xf32>
    %cst_71 = arith.constant 1.000000e+00 : f32
    %306 = vector.broadcast %cst_71 : f32 to vector<16x8x8xf32>
    %307 = arith.addf %306, %305 : vector<16x8x8xf32>
    %cst_72 = arith.constant 5.000000e-01 : f32
    %308 = vector.broadcast %cst_72 : f32 to vector<16x8x8xf32>
    %309 = arith.mulf %308, %307 : vector<16x8x8xf32>
    %310 = arith.mulf %284, %309 : vector<16x8x8xf32>
    %311 = vector.shape_cast %297 : vector<16x8x8xf32> to vector<128x8xf32>
    %312 = arith.truncf %311 : vector<128x8xf32> to vector<128x8xbf16>
    %313 = vector.shape_cast %310 : vector<16x8x8xf32> to vector<128x8xf32>
    %314 = arith.truncf %313 : vector<128x8xf32> to vector<128x8xbf16>
    %c0_73 = arith.constant 0 : index
    %c0_74 = arith.constant 0 : index
    %315 = vector.load %arg11[%c0_73, %c0_74] : memref<8x4xbf16, #tpu.memory_space<vmem>>, vector<8x4xbf16>
    %cst_75 = arith.constant dense<0.000000e+00> : vector<128x4xf32>
    %316 = tpu.matmul %312, %315, %cst_75 {dimension_numbers = #tpu.dot_dimension_numbers<[1], [0], [0], [1], [0, 0, 1, 1], [], []>} : vector<128x8xbf16>, vector<8x4xbf16>, vector<128x4xf32> -> vector<128x4xf32>
    %c0_76 = arith.constant 0 : index
    %c0_77 = arith.constant 0 : index
    %317 = vector.load %arg12[%c0_76, %c0_77] : memref<8x4xbf16, #tpu.memory_space<vmem>>, vector<8x4xbf16>
    %cst_78 = arith.constant dense<0.000000e+00> : vector<128x4xf32>
    %318 = tpu.matmul %314, %317, %cst_78 {dimension_numbers = #tpu.dot_dimension_numbers<[1], [0], [0], [1], [0, 0, 1, 1], [], []>} : vector<128x8xbf16>, vector<8x4xbf16>, vector<128x4xf32> -> vector<128x4xf32>
    %319 = arith.addf %316, %318 : vector<128x4xf32>
    %c0_79 = arith.constant 0 : index
    %c0_80 = arith.constant 0 : index
    %c0_81 = arith.constant 0 : index
    %320 = vector.load %arg13[%c0_79, %c0_80, %c0_81] : memref<1x1x4xf32, #tpu.memory_space<vmem>>, vector<1x1x4xf32>
    %321 = vector.shape_cast %320 : vector<1x1x4xf32> to vector<1x4xf32>
    %322 = vector.broadcast %321 : vector<1x4xf32> to vector<128x4xf32>
    %323 = arith.addf %319, %322 : vector<128x4xf32>
    %324 = vector.shape_cast %323 : vector<128x4xf32> to vector<16x8x4xf32>
    %c0_82 = arith.constant 0 : index
    %c0_83 = arith.constant 0 : index
    %c0_84 = arith.constant 0 : index
    %c0_85 = arith.constant 0 : index
    %325 = vector.load %arg14[%c0_82, %c0_83, %c0_84, %c0_85] : memref<1x16x8x4xf32, #tpu.memory_space<vmem>>, vector<1x16x8x4xf32>
    %326 = vector.shape_cast %325 : vector<1x16x8x4xf32> to vector<16x8x4xf32>
    %327 = vector.shape_cast %324 : vector<16x8x4xf32> to vector<1x16x8x4xf32>
    tpu.vector_store %arg14[%c0_82, %c0_83, %c0_84, %c0_85], %327 {strides = array<i32>} : memref<1x16x8x4xf32, #tpu.memory_space<vmem>>, vector<1x16x8x4xf32>,
    return
  }
  func.func @transform_0(%arg0: i32, %arg1: i32) -> (i32, i32, i32, i32) {
    %c0_i32 = arith.constant 0 : i32
    %c0_i32_0 = arith.constant 0 : i32
    %c0_i32_1 = arith.constant 0 : i32
    %c0_i32_2 = arith.constant 0 : i32
    return %arg0, %c0_i32, %c0_i32_0, %c0_i32_1 : i32, i32, i32, i32
  }
  func.func @transform_1(%arg0: i32, %arg1: i32) -> (i32, i32) {
    %c0_i32 = arith.constant 0 : i32
    %c0_i32_0 = arith.constant 0 : i32
    %c0_i32_1 = arith.constant 0 : i32
    return %c0_i32, %c0_i32_0 : i32, i32
  }
  func.func @transform_2(%arg0: i32, %arg1: i32) -> (i32, i32) {
    %c0_i32 = arith.constant 0 : i32
    %c0_i32_0 = arith.constant 0 : i32
    %c0_i32_1 = arith.constant 0 : i32
    return %c0_i32, %c0_i32_0 : i32, i32
  }
  func.func @transform_3(%arg0: i32, %arg1: i32) -> (i32, i32) {
    %c0_i32 = arith.constant 0 : i32
    %c0_i32_0 = arith.constant 0 : i32
    %c0_i32_1 = arith.constant 0 : i32
    return %c0_i32, %c0_i32_0 : i32, i32
  }
  func.func @transform_4(%arg0: i32, %arg1: i32) -> (i32, i32) {
    %c0_i32 = arith.constant 0 : i32
    %c0_i32_0 = arith.constant 0 : i32
    %c0_i32_1 = arith.constant 0 : i32
    return %c0_i32, %c0_i32_0 : i32, i32
  }
  func.func @transform_5(%arg0: i32, %arg1: i32) -> (i32, i32, i32) {
    %c0_i32 = arith.constant 0 : i32
    %c0_i32_0 = arith.constant 0 : i32
    %c0_i32_1 = arith.constant 0 : i32
    %c0_i32_2 = arith.constant 0 : i32
    return %c0_i32, %c0_i32_0, %c0_i32_1 : i32, i32, i32
  }
  func.func @transform_6(%arg0: i32, %arg1: i32) -> (i32, i32) {
    %c0_i32 = arith.constant 0 : i32
    %c0_i32_0 = arith.constant 0 : i32
    %c0_i32_1 = arith.constant 0 : i32
    return %c0_i32, %c0_i32_0 : i32, i32
  }
  func.func @transform_7(%arg0: i32, %arg1: i32) -> (i32, i32, i32) {
    %c0_i32 = arith.constant 0 : i32
    %c0_i32_0 = arith.constant 0 : i32
    %c0_i32_1 = arith.constant 0 : i32
    %c0_i32_2 = arith.constant 0 : i32
    return %c0_i32, %c0_i32_0, %c0_i32_1 : i32, i32, i32
  }
  func.func @transform_8(%arg0: i32, %arg1: i32) -> (i32, i32) {
    %c0_i32 = arith.constant 0 : i32
    %c0_i32_0 = arith.constant 0 : i32
    %c0_i32_1 = arith.constant 0 : i32
    return %c0_i32, %c0_i32_0 : i32, i32
  }
  func.func @transform_9(%arg0: i32, %arg1: i32) -> (i32, i32) {
    %c0_i32 = arith.constant 0 : i32
    %c0_i32_0 = arith.constant 0 : i32
    %c0_i32_1 = arith.constant 0 : i32
    return %c0_i32, %c0_i32_0 : i32, i32
  }
  func.func @transform_10(%arg0: i32, %arg1: i32) -> (i32, i32) {
    %c0_i32 = arith.constant 0 : i32
    %c0_i32_0 = arith.constant 0 : i32
    %c0_i32_1 = arith.constant 0 : i32
    return %c0_i32, %c0_i32_0 : i32, i32
  }
  func.func @transform_11(%arg0: i32, %arg1: i32) -> (i32, i32, i32) {
    %c0_i32 = arith.constant 0 : i32
    %c0_i32_0 = arith.constant 0 : i32
    %c0_i32_1 = arith.constant 0 : i32
    return %arg0, %c0_i32, %c0_i32_0 : i32, i32, i32
  }
  func.func @transform_12(%arg0: i32, %arg1: i32) -> (i32, i32, i32, i32) {
    %c0_i32 = arith.constant 0 : i32
    %c0_i32_0 = arith.constant 0 : i32
    %c0_i32_1 = arith.constant 0 : i32
    return %arg0, %arg1, %c0_i32, %c0_i32_0 : i32, i32, i32, i32
  }
}

</mosaic_0001>

<llo_original>
// kernel: tpu_custom_call.1
$region0: #{tpu_custom_call.1}
  #allocation0 [shape = 'u32[]', space=smem, size = 0x4, offset = 0x4, fixed_abs, tag = 'smem constant byte address 0x4 - core index']
  #allocation1 [shape = 'u32[144,128]{1,0:T(1,128)}', space=vmem, size = 0x12000, scoped, tag = 'internal scratch']
  #allocation2 [shape = 'f32[18,10,8]{2,1,0:T(8,128)}', space=vmem, size = 0x24000, scoped, tag = 'scratch operand']
  #allocation3 [shape = 'f32[20,12,8]{2,1,0:T(8,128)}', space=vmem, size = 0x28000, scoped, tag = 'scratch operand']
  %s0 = inlined_call_operand.hbm [shape: bf16[2,16,8,4], index: 0, kind: input, shape index: {}]
  %s1 = inlined_call_operand.hbm [shape: bf16[4,8], index: 1, kind: input, shape index: {}]
  %s2 = inlined_call_operand.hbm [shape: f32[1,8], index: 2, kind: input, shape index: {}]
  %s3 = inlined_call_operand.hbm [shape: bf16[4,8], index: 3, kind: input, shape index: {}]
  %s4 = inlined_call_operand.hbm [shape: f32[1,8], index: 4, kind: input, shape index: {}]
  %s5 = inlined_call_operand.hbm [shape: f32[3,3,8], index: 5, kind: input, shape index: {}]
  %s6 = inlined_call_operand.hbm [shape: f32[1,8], index: 6, kind: input, shape index: {}]
  %s7 = inlined_call_operand.hbm [shape: f32[5,5,8], index: 7, kind: input, shape index: {}]
  %s8 = inlined_call_operand.hbm [shape: f32[1,8], index: 8, kind: input, shape index: {}]
  %s9 = inlined_call_operand.hbm [shape: bf16[8,4], index: 9, kind: input, shape index: {}]
  %s10 = inlined_call_operand.hbm [shape: bf16[8,4], index: 10, kind: input, shape index: {}]
  %s11 = inlined_call_operand.hbm [shape: f32[2,1,4], index: 11, kind: input, shape index: {}]
  %s12 = inlined_call_operand.hbm [shape: f32[2,16,8,4], index: 12, kind: output, shape index: {}]
  %s13 = sld [smem:[#allocation0]]
  $region133: #{tpu_custom_call.1} parent=0
    _
  %s15 = ssub.s32 1, %s13
  %s16 = scalar_select 0, %s15, %s13
  $region1: #{tpu_custom_call.1} parent=0
    #allocation4 [shape = 'u8[65536]{0}', space=vmem, size = 0x10000, scoped, tag = 'input window, operand 0']
    #allocation5 [shape = 's32[2]{0}', space=sflag, size = 0x8, scoped, tag = 'scoped memory for tpu_custom_call.1']
    #allocation6 [shape = 's32[2]{0}', space=sflag, size = 0x8, scoped, tag = 'scoped memory for tpu_custom_call.1']
    #allocation7 [shape = 'u8[1024]{0}', space=vmem, size = 0x400, scoped, tag = 'input window, operand 1, single buffered']
    #allocation8 [shape = 's32[1]{0}', space=sflag, size = 0x4, scoped, tag = 'scoped memory for tpu_custom_call.1']
    #allocation9 [shape = 'u8[512]{0}', space=vmem, size = 0x400, scoped, tag = 'input window, operand 2, single buffered']
    #allocation10 [shape = 'u8[1024]{0}', space=vmem, size = 0x400, scoped, tag = 'input window, operand 3, single buffered']
    #allocation11 [shape = 's32[1]{0}', space=sflag, size = 0x4, scoped, tag = 'scoped memory for tpu_custom_call.1']
    #allocation12 [shape = 'u8[512]{0}', space=vmem, size = 0x400, scoped, tag = 'input window, operand 4, single buffered']
    #allocation13 [shape = 'u8[6144]{0}', space=vmem, size = 0x1800, scoped, tag = 'input window, operand 5, single buffered']
    #allocation14 [shape = 's32[1]{0}', space=sflag, size = 0x4, scoped, tag = 'scoped memory for tpu_custom_call.1']
    #allocation15 [shape = 'u8[512]{0}', space=vmem, size = 0x400, scoped, tag = 'input window, operand 6, single buffered']
    #allocation16 [shape = 'u8[20480]{0}', space=vmem, size = 0x5000, scoped, tag = 'input window, operand 7, single buffered']
    #allocation17 [shape = 's32[1]{0}', space=sflag, size = 0x4, scoped, tag = 'scoped memory for tpu_custom_call.1']
    #allocation18 [shape = 'u8[512]{0}', space=vmem, size = 0x400, scoped, tag = 'input window, operand 8, single buffered']
    #allocation19 [shape = 'u8[2048]{0}', space=vmem, size = 0x800, scoped, tag = 'input window, operand 9, single buffered']
    #allocation20 [shape = 's32[1]{0}', space=sflag, size = 0x4, scoped, tag = 'scoped memory for tpu_custom_call.1']
    #allocation21 [shape = 'u8[2048]{0}', space=vmem, size = 0x800, scoped, tag = 'input window, operand 10, single buffered']
    #allocation22 [shape = 'u8[1024]{0}', space=vmem, size = 0x400, scoped, tag = 'input window, operand 11']
    #allocation23 [shape = 's32[2]{0}', space=sflag, size = 0x8, scoped, tag = 'scoped memory for tpu_custom_call.1']
    #allocation24 [shape = 'u8[131072]{0}', space=vmem, size = 0x20000, scoped, tag = 'output window, operand 0']
    %17 = vsyncpa [#allocation5], 0
    %s18 = scalar_lea.sflag [#allocation5], 1
    %19 = vsyncpa %s18, 0
    %20 = vsyncpa [#allocation8], 0
    %21 = vsyncpa [#allocation11], 0
    %22 = vsyncpa [#allocation14], 0
    %23 = vsyncpa [#allocation17], 0
    %24 = vsyncpa [#allocation20], 0
    %25 = vsyncpa [#allocation23], 0
    %s26 = scalar_lea.sflag [#allocation23], 1
    %27 = vsyncpa %s26, 0
    %28 = vsyncpa [#allocation6], 0
    %s29 = scalar_lea.sflag [#allocation6], 1
    %30 = vsyncpa %s29, 0
    loop: start=0, step=1, limit=4
    $region2: #{tpu_custom_call.1} parent=1 // loop_pre_header
      _
    $region3: #{tpu_custom_call.1} parent=1 // loop_header
      %s32 = sphi 0, %s36
      %p33 = scmp.ge.s32.totalorder %s32, 4
      %s39 = sphi 0, %s51
      %s40 = sphi 0, %s47
      %s41 = sphi 0, %s39
      %s42 = sphi 0, %s40
      %s43 = sphi 0, %s41
      %s44 = sphi 0, %s42
      %s54 = sphi 0, %s56
      %s57 = sphi 0, %s54
      %s58 = sphi 0, %s57
      %s74 = sphi 0, %s58
      %s78 = sphi 0, %s78
      %s80 = sphi 0, %s78
      %s81 = sphi 0, %s80
      %s95 = sphi 0, %s81
      %s99 = sphi 0, %s99
      %s101 = sphi 0, %s99
      %s102 = sphi 0, %s101
      %s116 = sphi 0, %s102
      %s120 = sphi 0, %s120
      %s122 = sphi 0, %s120
      %s123 = sphi 0, %s122
      %s137 = sphi 0, %s123
      %s141 = sphi 0, %s141
      %s143 = sphi 0, %s141
      %s144 = sphi 0, %s143
      %s158 = sphi 0, %s144
      %s162 = sphi 0, %s162
      %s164 = sphi 0, %s162
      %s165 = sphi 0, %s164
      %s179 = sphi 0, %s165
      %s183 = sphi 0, %s183
      %s185 = sphi 0, %s183
      %s186 = sphi 0, %s185
      %s200 = sphi 0, %s186
      %s204 = sphi 0, %s204
      %s206 = sphi 0, %s204
      %s207 = sphi 0, %s206
      %s221 = sphi 0, %s207
      %s225 = sphi 0, %s225
      %s227 = sphi 0, %s225
      %s228 = sphi 0, %s227
      %s242 = sphi 0, %s228
      %s246 = sphi 0, %s246
      %s248 = sphi 0, %s246
      %s249 = sphi 0, %s248
      %s263 = sphi 0, %s249
      %s267 = sphi 0, %s267
      %s269 = sphi 0, %s267
      %s270 = sphi 0, %s269
      %s284 = sphi 0, %s270
      %s290 = sphi 0, %s292
      %s293 = sphi 0, %s290
      %s294 = sphi 0, %s293
      %s310 = sphi 0, %s294
      %s318 = sphi 0, %s320
      %s321 = sphi 0, %s318
      %s322 = sphi 0, %s321
      %s338 = sphi 0, %s322
    $region4: #{tpu_custom_call.1} parent=1 // loop_header_branch
      %35 = sbr.rel (%p33) target = $region8
    $region5: #{tpu_custom_call.1} parent=1 // loop_body
      %s37 = ssub.s32 %s32, 1
      %s38 = ssub.s32 %s32, 2
      %s45 = sadd.s32 1, %s40
      %p46 = scmp.ge.s32.totalorder %s45, 1
      %s47 = scalar_select %p46, 0, %s45
      %s48 = sadd.s32 1, %s39
      %s49 = scalar_select %p46, %s48, %s39
      %p50 = scmp.ge.s32.totalorder %s49, 2
      %s51 = scalar_select %p50, 0, %s49
      %s52 = ssub.s32 %s39, %s51
      %p53 = scmp.eq.s32.totalorder %s52, 0
      %s55 = sadd.s32 %s54, 1
      %s56 = scalar_select %p53, %s54, %s55
      %p59 = pneg %p53
      %p60 = scmp.eq.s32.totalorder %s32, 1
      %p61 = por %p59, %p60
      %p62 = scmp.ne.s32.totalorder %s54, %s57
      %p63 = scmp.eq.s32.totalorder %s32, 0
      %p64 = por %p62, %p63
      %p65 = scmp.ne.s32.totalorder %s54, %s57
      %p66 = scmp.eq.s32.totalorder %s37, 1
      %p67 = por %p65, %p66
      %p68 = scmp.ne.s32.totalorder %s57, %s58
      %p69 = scmp.eq.s32.totalorder %s37, 0
      %p70 = por %p68, %p69
      %p71 = scmp.ne.s32.totalorder %s57, %s58
      %p72 = scmp.eq.s32.totalorder %s38, 1
      %p73 = por %p71, %p72
      %p75 = scmp.ne.s32.totalorder %s58, %s74
      %p76 = scmp.eq.s32.totalorder %s38, 0
      %p77 = por %p75, %p76
      %s79 = sadd.s32 %s78, 1
      %p82 = scmp.eq.s32.totalorder %s32, 1
      %p83 = scmp.ne.s32.totalorder %s78, %s80
      %p84 = scmp.eq.s32.totalorder %s32, 0
      %p85 = por %p83, %p84
      %p86 = scmp.ne.s32.totalorder %s78, %s80
      %p87 = scmp.eq.s32.totalorder %s37, 1
      %p88 = por %p86, %p87
      %p89 = scmp.ne.s32.totalorder %s80, %s81
      %p90 = scmp.eq.s32.totalorder %s37, 0
      %p91 = por %p89, %p90
      %p92 = scmp.ne.s32.totalorder %s80, %s81
      %p93 = scmp.eq.s32.totalorder %s38, 1
      %p94 = por %p92, %p93
      %p96 = scmp.ne.s32.totalorder %s81, %s95
      %p97 = scmp.eq.s32.totalorder %s38, 0
      %p98 = por %p96, %p97
      %s100 = sadd.s32 %s99, 1
      %p103 = scmp.eq.s32.totalorder %s32, 1
      %p104 = scmp.ne.s32.totalorder %s99, %s101
      %p105 = scmp.eq.s32.totalorder %s32, 0
      %p106 = por %p104, %p105
      %p107 = scmp.ne.s32.totalorder %s99, %s101
      %p108 = scmp.eq.s32.totalorder %s37, 1
      %p109 = por %p107, %p108
      %p110 = scmp.ne.s32.totalorder %s101, %s102
      %p111 = scmp.eq.s32.totalorder %s37, 0
      %p112 = por %p110, %p111
      %p113 = scmp.ne.s32.totalorder %s101, %s102
      %p114 = scmp.eq.s32.totalorder %s38, 1
      %p115 = por %p113, %p114
      %p117 = scmp.ne.s32.totalorder %s102, %s116
      %p118 = scmp.eq.s32.totalorder %s38, 0
      %p119 = por %p117, %p118
      %s121 = sadd.s32 %s120, 1
      %p124 = scmp.eq.s32.totalorder %s32, 1
      %p125 = scmp.ne.s32.totalorder %s120, %s122
      %p126 = scmp.eq.s32.totalorder %s32, 0
      %p127 = por %p125, %p126
      %p128 = scmp.ne.s32.totalorder %s120, %s122
      %p129 = scmp.eq.s32.totalorder %s37, 1
      %p130 = por %p128, %p129
      %p131 = scmp.ne.s32.totalorder %s122, %s123
      %p132 = scmp.eq.s32.totalorder %s37, 0
      %p133 = por %p131, %p132
      %p134 = scmp.ne.s32.totalorder %s122, %s123
      %p135 = scmp.eq.s32.totalorder %s38, 1
      %p136 = por %p134, %p135
      %p138 = scmp.ne.s32.totalorder %s123, %s137
      %p139 = scmp.eq.s32.totalorder %s38, 0
      %p140 = por %p138, %p139
      %s142 = sadd.s32 %s141, 1
      %p145 = scmp.eq.s32.totalorder %s32, 1
      %p146 = scmp.ne.s32.totalorder %s141, %s143
      %p147 = scmp.eq.s32.totalorder %s32, 0
      %p148 = por %p146, %p147
      %p149 = scmp.ne.s32.totalorder %s141, %s143
      %p150 = scmp.eq.s32.totalorder %s37, 1
      %p151 = por %p149, %p150
      %p152 = scmp.ne.s32.totalorder %s143, %s144
      %p153 = scmp.eq.s32.totalorder %s37, 0
      %p154 = por %p152, %p153
      %p155 = scmp.ne.s32.totalorder %s143, %s144
      %p156 = scmp.eq.s32.totalorder %s38, 1
      %p157 = por %p155, %p156
      %p159 = scmp.ne.s32.totalorder %s144, %s158
      %p160 = scmp.eq.s32.totalorder %s38, 0
      %p161 = por %p159, %p160
      %s163 = sadd.s32 %s162, 1
      %p166 = scmp.eq.s32.totalorder %s32, 1
      %p167 = scmp.ne.s32.totalorder %s162, %s164
      %p168 = scmp.eq.s32.totalorder %s32, 0
      %p169 = por %p167, %p168
      %p170 = scmp.ne.s32.totalorder %s162, %s164
      %p171 = scmp.eq.s32.totalorder %s37, 1
      %p172 = por %p170, %p171
      %p173 = scmp.ne.s32.totalorder %s164, %s165
      %p174 = scmp.eq.s32.totalorder %s37, 0
      %p175 = por %p173, %p174
      %p176 = scmp.ne.s32.totalorder %s164, %s165
      %p177 = scmp.eq.s32.totalorder %s38, 1
      %p178 = por %p176, %p177
      %p180 = scmp.ne.s32.totalorder %s165, %s179
      %p181 = scmp.eq.s32.totalorder %s38, 0
      %p182 = por %p180, %p181
      %s184 = sadd.s32 %s183, 1
      %p187 = scmp.eq.s32.totalorder %s32, 1
      %p188 = scmp.ne.s32.totalorder %s183, %s185
      %p189 = scmp.eq.s32.totalorder %s32, 0
      %p190 = por %p188, %p189
      %p191 = scmp.ne.s32.totalorder %s183, %s185
      %p192 = scmp.eq.s32.totalorder %s37, 1
      %p193 = por %p191, %p192
      %p194 = scmp.ne.s32.totalorder %s185, %s186
      %p195 = scmp.eq.s32.totalorder %s37, 0
      %p196 = por %p194, %p195
      %p197 = scmp.ne.s32.totalorder %s185, %s186
      %p198 = scmp.eq.s32.totalorder %s38, 1
      %p199 = por %p197, %p198
      %p201 = scmp.ne.s32.totalorder %s186, %s200
      %p202 = scmp.eq.s32.totalorder %s38, 0
      %p203 = por %p201, %p202
      %s205 = sadd.s32 %s204, 1
      %p208 = scmp.eq.s32.totalorder %s32, 1
      %p209 = scmp.ne.s32.totalorder %s204, %s206
      %p210 = scmp.eq.s32.totalorder %s32, 0
      %p211 = por %p209, %p210
      %p212 = scmp.ne.s32.totalorder %s204, %s206
      %p213 = scmp.eq.s32.totalorder %s37, 1
      %p214 = por %p212, %p213
      %p215 = scmp.ne.s32.totalorder %s206, %s207
      %p216 = scmp.eq.s32.totalorder %s37, 0
      %p217 = por %p215, %p216
      %p218 = scmp.ne.s32.totalorder %s206, %s207
      %p219 = scmp.eq.s32.totalorder %s38, 1
      %p220 = por %p218, %p219
      %p222 = scmp.ne.s32.totalorder %s207, %s221
      %p223 = scmp.eq.s32.totalorder %s38, 0
      %p224 = por %p222, %p223
      %s226 = sadd.s32 %s225, 1
      %p229 = scmp.eq.s32.totalorder %s32, 1
      %p230 = scmp.ne.s32.totalorder %s225, %s227
      %p231 = scmp.eq.s32.totalorder %s32, 0
      %p232 = por %p230, %p231
      %p233 = scmp.ne.s32.totalorder %s225, %s227
      %p234 = scmp.eq.s32.totalorder %s37, 1
      %p235 = por %p233, %p234
      %p236 = scmp.ne.s32.totalorder %s227, %s228
      %p237 = scmp.eq.s32.totalorder %s37, 0
      %p238 = por %p236, %p237
      %p239 = scmp.ne.s32.totalorder %s227, %s228
      %p240 = scmp.eq.s32.totalorder %s38, 1
      %p241 = por %p239, %p240
      %p243 = scmp.ne.s32.totalorder %s228, %s242
      %p244 = scmp.eq.s32.totalorder %s38, 0
      %p245 = por %p243, %p244
      %s247 = sadd.s32 %s246, 1
      %p250 = scmp.eq.s32.totalorder %s32, 1
      %p251 = scmp.ne.s32.totalorder %s246, %s248
      %p252 = scmp.eq.s32.totalorder %s32, 0
      %p253 = por %p251, %p252
      %p254 = scmp.ne.s32.totalorder %s246, %s248
      %p255 = scmp.eq.s32.totalorder %s37, 1
      %p256 = por %p254, %p255
      %p257 = scmp.ne.s32.totalorder %s248, %s249
      %p258 = scmp.eq.s32.totalorder %s37, 0
      %p259 = por %p257, %p258
      %p260 = scmp.ne.s32.totalorder %s248, %s249
      %p261 = scmp.eq.s32.totalorder %s38, 1
      %p262 = por %p260, %p261
      %p264 = scmp.ne.s32.totalorder %s249, %s263
      %p265 = scmp.eq.s32.totalorder %s38, 0
      %p266 = por %p264, %p265
      %s268 = sadd.s32 %s267, 1
      %p271 = scmp.eq.s32.totalorder %s32, 1
      %p272 = scmp.ne.s32.totalorder %s267, %s269
      %p273 = scmp.eq.s32.totalorder %s32, 0
      %p274 = por %p272, %p273
      %p275 = scmp.ne.s32.totalorder %s267, %s269
      %p276 = scmp.eq.s32.totalorder %s37, 1
      %p277 = por %p275, %p276
      %p278 = scmp.ne.s32.totalorder %s269, %s270
      %p279 = scmp.eq.s32.totalorder %s37, 0
      %p280 = por %p278, %p279
      %p281 = scmp.ne.s32.totalorder %s269, %s270
      %p282 = scmp.eq.s32.totalorder %s38, 1
      %p283 = por %p281, %p282
      %p285 = scmp.ne.s32.totalorder %s270, %s284
      %p286 = scmp.eq.s32.totalorder %s38, 0
      %p287 = por %p285, %p286
      %s288 = ssub.s32 %s39, %s51
      %p289 = scmp.eq.s32.totalorder %s288, 0
      %s291 = sadd.s32 %s290, 1
      %s292 = scalar_select %p289, %s290, %s291
      %p295 = pneg %p289
      %p296 = scmp.eq.s32.totalorder %s32, 1
      %p297 = por %p295, %p296
      %p298 = scmp.ne.s32.totalorder %s290, %s293
      %p299 = scmp.eq.s32.totalorder %s32, 0
      %p300 = por %p298, %p299
      %p301 = scmp.ne.s32.totalorder %s290, %s293
      %p302 = scmp.eq.s32.totalorder %s37, 1
      %p303 = por %p301, %p302
      %p304 = scmp.ne.s32.totalorder %s293, %s294
      %p305 = scmp.eq.s32.totalorder %s37, 0
      %p306 = por %p304, %p305
      %p307 = scmp.ne.s32.totalorder %s293, %s294
      %p308 = scmp.eq.s32.totalorder %s38, 1
      %p309 = por %p307, %p308
      %p311 = scmp.ne.s32.totalorder %s294, %s310
      %p312 = scmp.eq.s32.totalorder %s38, 0
      %p313 = por %p311, %p312
      %s314 = ssub.s32 %s39, %s51
      %s315 = ssub.s32 %s40, %s47
      %s316 = sor.u32 %s314, %s315
      %p317 = scmp.eq.s32.totalorder %s316, 0
      %s319 = sadd.s32 %s318, 1
      %s320 = scalar_select %p317, %s318, %s319
      %p323 = pneg %p317
      %p324 = scmp.eq.s32.totalorder %s32, 1
      %p325 = por %p323, %p324
      %p326 = scmp.ne.s32.totalorder %s318, %s321
      %p327 = scmp.eq.s32.totalorder %s32, 0
      %p328 = por %p326, %p327
      %p329 = scmp.ne.s32.totalorder %s318, %s321
      %p330 = scmp.eq.s32.totalorder %s37, 1
      %p331 = por %p329, %p330
      %p332 = scmp.ne.s32.totalorder %s321, %s322
      %p333 = scmp.eq.s32.totalorder %s37, 0
      %p334 = por %p332, %p333
      %p335 = scmp.ne.s32.totalorder %s321, %s322
      %p336 = scmp.eq.s32.totalorder %s38, 1
      %p337 = por %p335, %p336
      %p339 = scmp.ne.s32.totalorder %s322, %s338
      %p340 = scmp.eq.s32.totalorder %s38, 0
      %p341 = por %p339, %p340
      %p342 = scmp.le.s32.totalorder 1, %s32
      %p343 = scmp.lt.s32.totalorder %s32, 3
      %p344 = pnand %p342, %p343
      %p345 = pneg %p344
      // Predicated region
      $region9: #{tpu_custom_call.1} parent=5 // pred_check
        _
      $region10: #{tpu_custom_call.1} parent=5 // pred_check_branch
        %347 = sbr.rel (%p344) target = $region12
      $region11: #{tpu_custom_call.1} parent=5 // pred_region
        %s348 = ssub.s32 %s32, 1
        // Predicated region
        $region13: #{tpu_custom_call.1} parent=11 // pred_check
          %p349 = pneg %p91
        $region14: #{tpu_custom_call.1} parent=11 // pred_check_branch
          %351 = sbr.rel (%p349) target = $region16
        $region15: #{tpu_custom_call.1} parent=11 // pred_region
          %s353 = ssub.s32 32, 32
          %354 = vsyncadd [#allocation8], %s353
          %s356 = sshll.u32 [#allocation7], 4
          %s357 = int_to_ptr.vmem [resolvable:$true] %s356
          %359 = dma.hbm_to_vmem [thread:$0]  %s1, 32, %s357, [#allocation8]
        $region16: #{tpu_custom_call.1} parent=11 // pred_fallthru
          _
        // Predicated region
        $region17: #{tpu_custom_call.1} parent=11 // pred_check
          %p360 = pneg %p112
        $region18: #{tpu_custom_call.1} parent=11 // pred_check_branch
          %362 = sbr.rel (%p360) target = $region20
        $region19: #{tpu_custom_call.1} parent=11 // pred_region
          %s364 = ssub.s32 16, 16
          %365 = vsyncadd [#allocation8], %s364
          %s367 = sshll.u32 [#allocation9], 4
          %s368 = int_to_ptr.vmem [resolvable:$true] %s367
          %370 = dma.hbm_to_vmem [thread:$0]  %s2, 16, %s368, [#allocation8]
        $region20: #{tpu_custom_call.1} parent=11 // pred_fallthru
          _
        // Predicated region
        $region21: #{tpu_custom_call.1} parent=11 // pred_check
          %p371 = pneg %p133
        $region22: #{tpu_custom_call.1} parent=11 // pred_check_branch
          %373 = sbr.rel (%p371) target = $region24
        $region23: #{tpu_custom_call.1} parent=11 // pred_region
          %s375 = ssub.s32 32, 32
          %376 = vsyncadd [#allocation11], %s375
          %s378 = sshll.u32 [#allocation10], 4
          %s379 = int_to_ptr.vmem [resolvable:$true] %s378
          %381 = dma.hbm_to_vmem [thread:$0]  %s3, 32, %s379, [#allocation11]
        $region24: #{tpu_custom_call.1} parent=11 // pred_fallthru
          _
        // Predicated region
        $region25: #{tpu_custom_call.1} parent=11 // pred_check
          %p382 = pneg %p154
        $region26: #{tpu_custom_call.1} parent=11 // pred_check_branch
          %384 = sbr.rel (%p382) target = $region28
        $region27: #{tpu_custom_call.1} parent=11 // pred_region
          %s386 = ssub.s32 16, 16
          %387 = vsyncadd [#allocation11], %s386
          %s389 = sshll.u32 [#allocation12], 4
          %s390 = int_to_ptr.vmem [resolvable:$true] %s389
          %392 = dma.hbm_to_vmem [thread:$0]  %s4, 16, %s390, [#allocation11]
        $region28: #{tpu_custom_call.1} parent=11 // pred_fallthru
          _
        // Predicated region
        $region29: #{tpu_custom_call.1} parent=11 // pred_check
          %p393 = pneg %p175
        $region30: #{tpu_custom_call.1} parent=11 // pred_check_branch
          %395 = sbr.rel (%p393) target = $region32
        $region31: #{tpu_custom_call.1} parent=11 // pred_region
          %s397 = ssub.s32 192, 192
          %398 = vsyncadd [#allocation14], %s397
          %s399 = sshll.u32 [#allocation13], 4
          %s400 = int_to_ptr.vmem [resolvable:$true] %s399
          %405 = dma.hbm_to_vmem [thread:$0]  %s5, 192, %s400, [#allocation14], 64, 64, 4
        $region32: #{tpu_custom_call.1} parent=11 // pred_fallthru
          _
        // Predicated region
        $region33: #{tpu_custom_call.1} parent=11 // pred_check
          %p406 = pneg %p196
        $region34: #{tpu_custom_call.1} parent=11 // pred_check_branch
          %408 = sbr.rel (%p406) target = $region36
        $region35: #{tpu_custom_call.1} parent=11 // pred_region
          %s410 = ssub.s32 16, 16
          %411 = vsyncadd [#allocation14], %s410
          %s413 = sshll.u32 [#allocation15], 4
          %s414 = int_to_ptr.vmem [resolvable:$true] %s413
          %416 = dma.hbm_to_vmem [thread:$0]  %s6, 16, %s414, [#allocation14]
        $region36: #{tpu_custom_call.1} parent=11 // pred_fallthru
          _
        // Predicated region
        $region37: #{tpu_custom_call.1} parent=11 // pred_check
          %p417 = pneg %p217
        $region38: #{tpu_custom_call.1} parent=11 // pred_check_branch
          %419 = sbr.rel (%p417) target = $region40
        $region39: #{tpu_custom_call.1} parent=11 // pred_region
          %s421 = ssub.s32 640, 640
          %422 = vsyncadd [#allocation17], %s421
          %s423 = sshll.u32 [#allocation16], 4
          %s424 = int_to_ptr.vmem [resolvable:$true] %s423
          %429 = dma.hbm_to_vmem [thread:$0]  %s7, 640, %s424, [#allocation17], 128, 128, 8
        $region40: #{tpu_custom_call.1} parent=11 // pred_fallthru
          _
        // Predicated region
        $region41: #{tpu_custom_call.1} parent=11 // pred_check
          %p430 = pneg %p238
        $region42: #{tpu_custom_call.1} parent=11 // pred_check_branch
          %432 = sbr.rel (%p430) target = $region44
        $region43: #{tpu_custom_call.1} parent=11 // pred_region
          %s434 = ssub.s32 16, 16
          %435 = vsyncadd [#allocation17], %s434
          %s437 = sshll.u32 [#allocation18], 4
          %s438 = int_to_ptr.vmem [resolvable:$true] %s437
          %440 = dma.hbm_to_vmem [thread:$0]  %s8, 16, %s438, [#allocation17]
        $region44: #{tpu_custom_call.1} parent=11 // pred_fallthru
          _
        // Predicated region
        $region45: #{tpu_custom_call.1} parent=11 // pred_check
          %p441 = pneg %p259
        $region46: #{tpu_custom_call.1} parent=11 // pred_check_branch
          %443 = sbr.rel (%p441) target = $region48
        $region47: #{tpu_custom_call.1} parent=11 // pred_region
          %s445 = ssub.s32 64, 64
          %446 = vsyncadd [#allocation20], %s445
          %s448 = sshll.u32 [#allocation19], 4
          %s449 = int_to_ptr.vmem [resolvable:$true] %s448
          %451 = dma.hbm_to_vmem [thread:$0]  %s9, 64, %s449, [#allocation20]
        $region48: #{tpu_custom_call.1} parent=11 // pred_fallthru
          _
        // Predicated region
        $region49: #{tpu_custom_call.1} parent=11 // pred_check
          %p452 = pneg %p280
        $region50: #{tpu_custom_call.1} parent=11 // pred_check_branch
          %454 = sbr.rel (%p452) target = $region52
        $region51: #{tpu_custom_call.1} parent=11 // pred_region
          %s456 = ssub.s32 64, 64
          %457 = vsyncadd [#allocation20], %s456
          %s459 = sshll.u32 [#allocation21], 4
          %s460 = int_to_ptr.vmem [resolvable:$true] %s459
          %462 = dma.hbm_to_vmem [thread:$0]  %s10, 64, %s460, [#allocation20]
        $region52: #{tpu_custom_call.1} parent=11 // pred_fallthru
          _
      $region12: #{tpu_custom_call.1} parent=5 // pred_fallthru
        _
      %p463 = scmp.lt.s32.totalorder %s32, 2
      // Predicated region
      $region53: #{tpu_custom_call.1} parent=5 // pred_check
        %p464 = pneg %p463
      $region54: #{tpu_custom_call.1} parent=5 // pred_check_branch
        %466 = sbr.rel (%p464) target = $region56
      $region55: #{tpu_custom_call.1} parent=5 // pred_region
        // Predicated region
        $region57: #{tpu_custom_call.1} parent=55 // pred_check
          %p467 = pneg %p64
        $region58: #{tpu_custom_call.1} parent=55 // pred_check_branch
          %469 = sbr.rel (%p467) target = $region60
        $region59: #{tpu_custom_call.1} parent=55 // pred_region
          %s470 = sand.u32 %s54, 1
          %s471 = scalar_lea.sflag [#allocation5], %s470
          %s472 = sand.u32 %s54, 1
          %s473 = smul.addr %s472, 64
          %s474 = scalar_lea.vmem [#allocation4], %s473
          %s476 = ssub.s32 1024, 1024
          %477 = vsyncadd %s471, %s476
          %s478 = smul.addr %s39, 16
          %s479 = smul.addr %s478, 64
          %s480 = scalar_lea.hbm %s0, %s479
          %s481 = sshll.u32 %s474, 4
          %s482 = int_to_ptr.vmem [resolvable:$true] %s481
          %487 = dma.hbm_to_vmem [thread:$0]  %s480, 1024, %s482, %s471, 64, 64, 4
        $region60: #{tpu_custom_call.1} parent=55 // pred_fallthru
          _
        // Predicated region
        $region61: #{tpu_custom_call.1} parent=55 // pred_check
          %p488 = pneg %p300
        $region62: #{tpu_custom_call.1} parent=55 // pred_check_branch
          %490 = sbr.rel (%p488) target = $region64
        $region63: #{tpu_custom_call.1} parent=55 // pred_region
          %s491 = sand.u32 %s290, 1
          %s492 = scalar_lea.sflag [#allocation23], %s491
          %s493 = sand.u32 %s290, 1
          %s494 = scalar_lea.vmem [#allocation22], %s493
          %s496 = ssub.s32 16, 16
          %497 = vsyncadd %s492, %s496
          %s498 = smul.addr %s39, 16
          %s499 = scalar_lea.hbm %s11, %s498
          %s501 = sshll.u32 %s494, 4
          %s502 = int_to_ptr.vmem [resolvable:$true] %s501
          %504 = dma.hbm_to_vmem [thread:$0]  %s499, 16, %s502, %s492
        $region64: #{tpu_custom_call.1} parent=55 // pred_fallthru
          _
      $region56: #{tpu_custom_call.1} parent=5 // pred_fallthru
        _
      %p505 = scmp.le.s32.totalorder 1, %s32
      %p506 = scmp.lt.s32.totalorder %s32, 3
      %p507 = pnand %p505, %p506
      %p508 = pneg %p507
      // Predicated region
      $region65: #{tpu_custom_call.1} parent=5 // pred_check
        _
      $region66: #{tpu_custom_call.1} parent=5 // pred_check_branch
        %510 = sbr.rel (%p507) target = $region68
      $region67: #{tpu_custom_call.1} parent=5 // pred_region
        %s511 = ssub.s32 %s32, 1
        %s512 = sand.u32 %s57, 1
        %s513 = scalar_lea.sflag [#allocation5], %s512
        %s514 = sand.u32 %s57, 1
        %s515 = smul.addr %s514, 64
        %s516 = scalar_lea.vmem [#allocation4], %s515
        // Predicated region
        $region69: #{tpu_custom_call.1} parent=67 // pred_check
          %p517 = pneg %p70
        $region70: #{tpu_custom_call.1} parent=67 // pred_check_branch
          %519 = sbr.rel (%p517) target = $region72
        $region71: #{tpu_custom_call.1} parent=67 // pred_region
          %520 = dma.done %s513, 1024
        $region72: #{tpu_custom_call.1} parent=67 // pred_fallthru
          _
        // Predicated region
        $region73: #{tpu_custom_call.1} parent=67 // pred_check
          %p521 = pneg %p91
        $region74: #{tpu_custom_call.1} parent=67 // pred_check_branch
          %523 = sbr.rel (%p521) target = $region76
        $region75: #{tpu_custom_call.1} parent=67 // pred_region
          %524 = dma.done [#allocation8], 32
        $region76: #{tpu_custom_call.1} parent=67 // pred_fallthru
          _
        // Predicated region
        $region77: #{tpu_custom_call.1} parent=67 // pred_check
          %p525 = pneg %p112
        $region78: #{tpu_custom_call.1} parent=67 // pred_check_branch
          %527 = sbr.rel (%p525) target = $region80
        $region79: #{tpu_custom_call.1} parent=67 // pred_region
          %528 = dma.done [#allocation8], 16
        $region80: #{tpu_custom_call.1} parent=67 // pred_fallthru
          _
        // Predicated region
        $region81: #{tpu_custom_call.1} parent=67 // pred_check
          %p529 = pneg %p133
        $region82: #{tpu_custom_call.1} parent=67 // pred_check_branch
          %531 = sbr.rel (%p529) target = $region84
        $region83: #{tpu_custom_call.1} parent=67 // pred_region
          %532 = dma.done [#allocation11], 32
        $region84: #{tpu_custom_call.1} parent=67 // pred_fallthru
          _
        // Predicated region
        $region85: #{tpu_custom_call.1} parent=67 // pred_check
          %p533 = pneg %p154
        $region86: #{tpu_custom_call.1} parent=67 // pred_check_branch
          %535 = sbr.rel (%p533) target = $region88
        $region87: #{tpu_custom_call.1} parent=67 // pred_region
          %536 = dma.done [#allocation11], 16
        $region88: #{tpu_custom_call.1} parent=67 // pred_fallthru
          _
        // Predicated region
        $region89: #{tpu_custom_call.1} parent=67 // pred_check
          %p537 = pneg %p175
        $region90: #{tpu_custom_call.1} parent=67 // pred_check_branch
          %539 = sbr.rel (%p537) target = $region92
        $region91: #{tpu_custom_call.1} parent=67 // pred_region
          %540 = dma.done [#allocation14], 192
        $region92: #{tpu_custom_call.1} parent=67 // pred_fallthru
          _
        // Predicated region
        $region93: #{tpu_custom_call.1} parent=67 // pred_check
          %p541 = pneg %p196
        $region94: #{tpu_custom_call.1} parent=67 // pred_check_branch
          %543 = sbr.rel (%p541) target = $region96
        $region95: #{tpu_custom_call.1} parent=67 // pred_region
          %544 = dma.done [#allocation14], 16
        $region96: #{tpu_custom_call.1} parent=67 // pred_fallthru
          _
        // Predicated region
        $region97: #{tpu_custom_call.1} parent=67 // pred_check
          %p545 = pneg %p217
        $region98: #{tpu_custom_call.1} parent=67 // pred_check_branch
          %547 = sbr.rel (%p545) target = $region100
        $region99: #{tpu_custom_call.1} parent=67 // pred_region
          %548 = dma.done [#allocation17], 640
        $region100: #{tpu_custom_call.1} parent=67 // pred_fallthru
          _
        // Predicated region
        $region101: #{tpu_custom_call.1} parent=67 // pred_check
          %p549 = pneg %p238
        $region102: #{tpu_custom_call.1} parent=67 // pred_check_branch
          %551 = sbr.rel (%p549) target = $region104
        $region103: #{tpu_custom_call.1} parent=67 // pred_region
          %552 = dma.done [#allocation17], 16
        $region104: #{tpu_custom_call.1} parent=67 // pred_fallthru
          _
        // Predicated region
        $region105: #{tpu_custom_call.1} parent=67 // pred_check
          %p553 = pneg %p259
        $region106: #{tpu_custom_call.1} parent=67 // pred_check_branch
          %555 = sbr.rel (%p553) target = $region108
        $region107: #{tpu_custom_call.1} parent=67 // pred_region
          %556 = dma.done [#allocation20], 64
        $region108: #{tpu_custom_call.1} parent=67 // pred_fallthru
          _
        // Predicated region
        $region109: #{tpu_custom_call.1} parent=67 // pred_check
          %p557 = pneg %p280
        $region110: #{tpu_custom_call.1} parent=67 // pred_check_branch
          %559 = sbr.rel (%p557) target = $region112
        $region111: #{tpu_custom_call.1} parent=67 // pred_region
          %560 = dma.done [#allocation20], 64
        $region112: #{tpu_custom_call.1} parent=67 // pred_fallthru
          _
        %s561 = sand.u32 %s293, 1
        %s562 = scalar_lea.sflag [#allocation23], %s561
        %s563 = sand.u32 %s293, 1
        %s564 = scalar_lea.vmem [#allocation22], %s563
        // Predicated region
        $region113: #{tpu_custom_call.1} parent=67 // pred_check
          %p565 = pneg %p306
        $region114: #{tpu_custom_call.1} parent=67 // pred_check_branch
          %567 = sbr.rel (%p565) target = $region116
        $region115: #{tpu_custom_call.1} parent=67 // pred_region
          %568 = dma.done %s562, 16
        $region116: #{tpu_custom_call.1} parent=67 // pred_fallthru
          _
        %s569 = sand.u32 %s57, 1
        %s570 = scalar_lea.sflag [#allocation5], %s569
        %s571 = sand.u32 %s57, 1
        %s572 = smul.addr %s571, 64
        %s573 = scalar_lea.vmem [#allocation4], %s572
        %p574 = pneg %p70
        %p575 = pneg %p67
        %p576 = pneg %p91
        %p577 = pneg %p88
        %p578 = pneg %p112
        %p579 = pneg %p109
        %p580 = pneg %p133
        %p581 = pneg %p130
        %p582 = pneg %p154
        %p583 = pneg %p151
        %p584 = pneg %p175
        %p585 = pneg %p172
        %p586 = pneg %p196
        %p587 = pneg %p193
        %p588 = pneg %p217
        %p589 = pneg %p214
        %p590 = pneg %p238
        %p591 = pneg %p235
        %p592 = pneg %p259
        %p593 = pneg %p256
        %p594 = pneg %p280
        %p595 = pneg %p277
        %s596 = sand.u32 %s293, 1
        %s597 = scalar_lea.sflag [#allocation23], %s596
        %s598 = sand.u32 %s293, 1
        %s599 = scalar_lea.vmem [#allocation22], %s598
        %p600 = pneg %p306
        %p601 = pneg %p303
        %p602 = pneg %p334
        %p603 = pneg %p331
        %s604 = sand.u32 %s321, 1
        %s605 = scalar_lea.sflag [#allocation6], %s604
        %s606 = sand.u32 %s321, 1
        %s607 = smul.addr %s606, 128
        %s608 = scalar_lea.vmem [#allocation24], %s607
        %s609 = smul.u32 16, %s42
        %v611 = vld [vmem:[%s516] sm:$0xf]
        %v612 = vld [vmem:[%s516 + $0x4] sm:$0xf]
        %v613 = vld [vmem:[%s516 + $0x8] sm:$0xf]
        %v614 = vld [vmem:[%s516 + $0xc] sm:$0xf]
        %v615 = vld [vmem:[%s516 + $0x10] sm:$0xf]
        %v616 = vld [vmem:[%s516 + $0x14] sm:$0xf]
        %v617 = vld [vmem:[%s516 + $0x18] sm:$0xf]
        %v618 = vld [vmem:[%s516 + $0x1c] sm:$0xf]
        %v619 = vld [vmem:[%s516 + $0x20] sm:$0xf]
        %v620 = vld [vmem:[%s516 + $0x24] sm:$0xf]
        %v621 = vld [vmem:[%s516 + $0x28] sm:$0xf]
        %v622 = vld [vmem:[%s516 + $0x2c] sm:$0xf]
        %v623 = vld [vmem:[%s516 + $0x30] sm:$0xf]
        %v624 = vld [vmem:[%s516 + $0x34] sm:$0xf]
        %v625 = vld [vmem:[%s516 + $0x38] sm:$0xf]
        %v626 = vld [vmem:[%s516 + $0x3c] sm:$0xf]
        %v627 = vld [vmem:[#allocation7] sm:$0x3]
        %v628 = vld [vmem:[#allocation9] sm:$0x1]
        %v630 = vlaneseq
        %v631 = vshrl.u32 %v630, 7
        %v632 = vsub.s32 0, %v631
        %v633 = vrot.slane %v628, %v632
        %v651 = vunpack.c.l.b16 %v611
        %v652 = vunpack.c.l.b16 %v612
        %v653 = vunpack.c.l.b16 %v613
        %v654 = vunpack.c.l.b16 %v614
        %v655 = vunpack.c.l.b16 %v615
        %v656 = vunpack.c.l.b16 %v616
        %v657 = vunpack.c.l.b16 %v617
        %v658 = vunpack.c.l.b16 %v618
        %v659 = vunpack.c.l.b16 %v619
        %v660 = vunpack.c.l.b16 %v620
        %v661 = vunpack.c.l.b16 %v621
        %v662 = vunpack.c.l.b16 %v622
        %v663 = vunpack.c.l.b16 %v623
        %v664 = vunpack.c.l.b16 %v624
        %v665 = vunpack.c.l.b16 %v625
        %v666 = vunpack.c.l.b16 %v626
        %v667 = vpack.c.b16 %v652, %v651
        %v668 = vpack.c.b16 %v654, %v653
        %v669 = vpack.c.b16 %v656, %v655
        %v670 = vpack.c.b16 %v658, %v657
        %v671 = vpack.c.b16 %v660, %v659
        %v672 = vpack.c.b16 %v662, %v661
        %v673 = vpack.c.b16 %v664, %v663
        %v674 = vpack.c.b16 %v666, %v665
        %vm675 = vcmask 31744
        %v677 = vsel %vm675, %v667, 0
        %v680 = vsel %vm675, %v668, 0
        %v683 = vsel %vm675, %v669, 0
        %v686 = vsel %vm675, %v670, 0
        %v689 = vsel %vm675, %v671, 0
        %v692 = vsel %vm675, %v672, 0
        %v695 = vsel %vm675, %v673, 0
        %v698 = vsel %vm675, %v674, 0
        %vm700 = vcmask 1041408
        %v702 = vsel %vm700, %v627, 0
        %704 = vmatprep.subr.bf16.mxu0 0
        %705 = vmatpush1.bf16.msra.mxu0 %v702
        %706 = vmatprep.subr.bf16.mxu0 0
        %707 = vmatpush1.bf16.msra.mxu0 0
        %708 = vmatprep.subr.bf16.mxu0 0
        %709 = vmatpush1.bf16.msra.mxu0 0
        %710 = vmatprep.subr.bf16.mxu0 0
        %711 = vmatpush1.bf16.msra.mxu0 0
        %712 = vmatprep.subr.bf16.mxu0 0
        %713 = vmatpush1.bf16.msra.mxu0 0
        %714 = vmatprep.subr.bf16.mxu0 0
        %715 = vmatpush1.bf16.msra.mxu0 0
        %716 = vmatprep.subr.bf16.mxu0 0
        %717 = vmatpush1.bf16.msra.mxu0 0
        %718 = vmatprep.subr.bf16.mxu0 0
        %719 = vmatpush1.bf16.msra.mxu0 0
        %720 = vmatprep.subr.bf16.mxu0 0
        %721 = vmatpush1.bf16.msra.mxu0 0
        %722 = vmatprep.subr.bf16.mxu0 0
        %723 = vmatpush1.bf16.msra.mxu0 0
        %724 = vmatprep.subr.bf16.mxu0 0
        %725 = vmatpush1.bf16.msra.mxu0 0
        %726 = vmatprep.subr.bf16.mxu0 0
        %727 = vmatpush1.bf16.msra.mxu0 0
        %728 = vmatprep.subr.bf16.mxu0 0
        %729 = vmatpush1.bf16.msra.mxu0 0
        %730 = vmatprep.subr.bf16.mxu0 0
        %731 = vmatpush1.bf16.msra.mxu0 0
        %732 = vmatprep.subr.bf16.mxu0 0
        %733 = vmatpush1.bf16.msra.mxu0 0
        %734 = vmatprep.subr.bf16.mxu0 0
        %735 = vmatpush1.bf16.msra.mxu0 0
        %736 = vmatprep.mubr.bf16.mxu0 0
        %737 = vmatmul.mubr.bf16.gmra.mrb[0].mxu0 %v677
        %v738 = vpop.f32.mrb[0].mxu0
        %v739 = vadd.f32 %v633, %v738
        %v740 = vpop.f32.mrb[0].mxu0
        %v741 = vpop.f32.mrb[0].mxu0
        %v742 = vadd.f32 %v633, %v741
        %v743 = vpop.f32.mrb[0].mxu0
        %744 = vmatprep.mubr.bf16.mxu0 0
        %745 = vmatmul.mubr.bf16.gmra.mrb[0].mxu0 %v680
        %v746 = vpop.f32.mrb[0].mxu0
        %v747 = vadd.f32 %v633, %v746
        %v748 = vpop.f32.mrb[0].mxu0
        %v749 = vpop.f32.mrb[0].mxu0
        %v750 = vadd.f32 %v633, %v749
        %v751 = vpop.f32.mrb[0].mxu0
        %752 = vmatprep.mubr.bf16.mxu0 0
        %753 = vmatmul.mubr.bf16.gmra.mrb[0].mxu0 %v683
        %v754 = vpop.f32.mrb[0].mxu0
        %v755 = vadd.f32 %v633, %v754
        %v756 = vpop.f32.mrb[0].mxu0
        %v757 = vpop.f32.mrb[0].mxu0
        %v758 = vadd.f32 %v633, %v757
        %v759 = vpop.f32.mrb[0].mxu0
        %760 = vmatprep.mubr.bf16.mxu0 0
        %761 = vmatmul.mubr.bf16.gmra.mrb[0].mxu0 %v686
        %v762 = vpop.f32.mrb[0].mxu0
        %v763 = vadd.f32 %v633, %v762
        %v764 = vpop.f32.mrb[0].mxu0
        %v765 = vpop.f32.mrb[0].mxu0
        %v766 = vadd.f32 %v633, %v765
        %v767 = vpop.f32.mrb[0].mxu0
        %768 = vmatprep.mubr.bf16.mxu0 0
        %769 = vmatmul.mubr.bf16.gmra.mrb[0].mxu0 %v689
        %v770 = vpop.f32.mrb[0].mxu0
        %v771 = vadd.f32 %v633, %v770
        %v772 = vpop.f32.mrb[0].mxu0
        %v773 = vpop.f32.mrb[0].mxu0
        %v774 = vadd.f32 %v633, %v773
        %v775 = vpop.f32.mrb[0].mxu0
        %776 = vmatprep.mubr.bf16.mxu0 0
        %777 = vmatmul.mubr.bf16.gmra.mrb[0].mxu0 %v692
        %v778 = vpop.f32.mrb[0].mxu0
        %v779 = vadd.f32 %v633, %v778
        %v780 = vpop.f32.mrb[0].mxu0
        %v781 = vpop.f32.mrb[0].mxu0
        %v782 = vadd.f32 %v633, %v781
        %v783 = vpop.f32.mrb[0].mxu0
        %784 = vmatprep.mubr.bf16.mxu0 0
        %785 = vmatmul.mubr.bf16.gmra.mrb[0].mxu0 %v695
        %v786 = vpop.f32.mrb[0].mxu0
        %v787 = vadd.f32 %v633, %v786
        %v788 = vpop.f32.mrb[0].mxu0
        %v789 = vpop.f32.mrb[0].mxu0
        %v790 = vadd.f32 %v633, %v789
        %v791 = vpop.f32.mrb[0].mxu0
        %792 = vmatprep.mubr.bf16.mxu0 0
        %793 = vmatmul.mubr.bf16.gmra.mrb[0].mxu0 %v698
        %v794 = vpop.f32.mrb[0].mxu0
        %v795 = vadd.f32 %v633, %v794
        %v796 = vpop.f32.mrb[0].mxu0
        %v797 = vpop.f32.mrb[0].mxu0
        %v798 = vadd.f32 %v633, %v797
        %v799 = vpop.f32.mrb[0].mxu0
        %800 = vdwg.mxu0
        %v801 = vld [vmem:[#allocation10] sm:$0x3]
        %v802 = vld [vmem:[#allocation12] sm:$0x1]
        %v804 = vlaneseq
        %v805 = vshrl.u32 %v804, 7
        %v806 = vsub.s32 0, %v805
        %v807 = vrot.slane %v802, %v806
        %v810 = vsel %vm700, %v801, 0
        %812 = vmatprep.subr.bf16.mxu0 0
        %813 = vmatpush1.bf16.msra.mxu0 %v810
        %814 = vmatprep.subr.bf16.mxu0 0
        %815 = vmatpush1.bf16.msra.mxu0 0
        %816 = vmatprep.subr.bf16.mxu0 0
        %817 = vmatpush1.bf16.msra.mxu0 0
        %818 = vmatprep.subr.bf16.mxu0 0
        %819 = vmatpush1.bf16.msra.mxu0 0
        %820 = vmatprep.subr.bf16.mxu0 0
        %821 = vmatpush1.bf16.msra.mxu0 0
        %822 = vmatprep.subr.bf16.mxu0 0
        %823 = vmatpush1.bf16.msra.mxu0 0
        %824 = vmatprep.subr.bf16.mxu0 0
        %825 = vmatpush1.bf16.msra.mxu0 0
        %826 = vmatprep.subr.bf16.mxu0 0
        %827 = vmatpush1.bf16.msra.mxu0 0
        %828 = vmatprep.subr.bf16.mxu0 0
        %829 = vmatpush1.bf16.msra.mxu0 0
        %830 = vmatprep.subr.bf16.mxu0 0
        %831 = vmatpush1.bf16.msra.mxu0 0
        %832 = vmatprep.subr.bf16.mxu0 0
        %833 = vmatpush1.bf16.msra.mxu0 0
        %834 = vmatprep.subr.bf16.mxu0 0
        %835 = vmatpush1.bf16.msra.mxu0 0
        %836 = vmatprep.subr.bf16.mxu0 0
        %837 = vmatpush1.bf16.msra.mxu0 0
        %838 = vmatprep.subr.bf16.mxu0 0
        %839 = vmatpush1.bf16.msra.mxu0 0
        %840 = vmatprep.subr.bf16.mxu0 0
        %841 = vmatpush1.bf16.msra.mxu0 0
        %842 = vmatprep.subr.bf16.mxu0 0
        %843 = vmatpush1.bf16.msra.mxu0 0
        %844 = vmatprep.mubr.bf16.mxu0 0
        %845 = vmatmul.mubr.bf16.gmra.mrb[0].mxu0 %v677
        %v846 = vpop.f32.mrb[0].mxu0
        %v847 = vadd.f32 %v807, %v846
        %v848 = vpop.f32.mrb[0].mxu0
        %v849 = vpop.f32.mrb[0].mxu0
        %v850 = vadd.f32 %v807, %v849
        %v851 = vpop.f32.mrb[0].mxu0
        %852 = vmatprep.mubr.bf16.mxu0 0
        %853 = vmatmul.mubr.bf16.gmra.mrb[0].mxu0 %v680
        %v854 = vpop.f32.mrb[0].mxu0
        %v855 = vadd.f32 %v807, %v854
        %v856 = vpop.f32.mrb[0].mxu0
        %v857 = vpop.f32.mrb[0].mxu0
        %v858 = vadd.f32 %v807, %v857
        %v859 = vpop.f32.mrb[0].mxu0
        %860 = vmatprep.mubr.bf16.mxu0 0
        %861 = vmatmul.mubr.bf16.gmra.mrb[0].mxu0 %v683
        %v862 = vpop.f32.mrb[0].mxu0
        %v863 = vadd.f32 %v807, %v862
        %v864 = vpop.f32.mrb[0].mxu0
        %v865 = vpop.f32.mrb[0].mxu0
        %v866 = vadd.f32 %v807, %v865
        %v867 = vpop.f32.mrb[0].mxu0
        %868 = vmatprep.mubr.bf16.mxu0 0
        %869 = vmatmul.mubr.bf16.gmra.mrb[0].mxu0 %v686
        %v870 = vpop.f32.mrb[0].mxu0
        %v871 = vadd.f32 %v807, %v870
        %v872 = vpop.f32.mrb[0].mxu0
        %v873 = vpop.f32.mrb[0].mxu0
        %v874 = vadd.f32 %v807, %v873
        %v875 = vpop.f32.mrb[0].mxu0
        %876 = vmatprep.mubr.bf16.mxu0 0
        %877 = vmatmul.mubr.bf16.gmra.mrb[0].mxu0 %v689
        %v878 = vpop.f32.mrb[0].mxu0
        %v879 = vadd.f32 %v807, %v878
        %v880 = vpop.f32.mrb[0].mxu0
        %v881 = vpop.f32.mrb[0].mxu0
        %v882 = vadd.f32 %v807, %v881
        %v883 = vpop.f32.mrb[0].mxu0
        %884 = vmatprep.mubr.bf16.mxu0 0
        %885 = vmatmul.mubr.bf16.gmra.mrb[0].mxu0 %v692
        %v886 = vpop.f32.mrb[0].mxu0
        %v887 = vadd.f32 %v807, %v886
        %v888 = vpop.f32.mrb[0].mxu0
        %v889 = vpop.f32.mrb[0].mxu0
        %v890 = vadd.f32 %v807, %v889
        %v891 = vpop.f32.mrb[0].mxu0
        %892 = vmatprep.mubr.bf16.mxu0 0
        %893 = vmatmul.mubr.bf16.gmra.mrb[0].mxu0 %v695
        %v894 = vpop.f32.mrb[0].mxu0
        %v895 = vadd.f32 %v807, %v894
        %v896 = vpop.f32.mrb[0].mxu0
        %v897 = vpop.f32.mrb[0].mxu0
        %v898 = vadd.f32 %v807, %v897
        %v899 = vpop.f32.mrb[0].mxu0
        %900 = vmatprep.mubr.bf16.mxu0 0
        %901 = vmatmul.mubr.bf16.gmra.mrb[0].mxu0 %v698
        %v902 = vpop.f32.mrb[0].mxu0
        %v903 = vadd.f32 %v807, %v902
        %v904 = vpop.f32.mrb[0].mxu0
        %v905 = vpop.f32.mrb[0].mxu0
        %v906 = vadd.f32 %v807, %v905
        %v907 = vpop.f32.mrb[0].mxu0
        %908 = vdwg.mxu0
        %s909 = scalar_lea.vmem [#allocation2], 16
        %vm910 = vcmask 64512
        %911 = vst.msk [vmem:[%s909 + $0x1] sm:$0xff] %vm910, %v739
        %912 = vst.msk [vmem:[%s909 + $0x11] sm:$0xff] %vm910, %v742
        %913 = vst.msk [vmem:[%s909 + $0x21] sm:$0xff] %vm910, %v747
        %914 = vst.msk [vmem:[%s909 + $0x31] sm:$0xff] %vm910, %v750
        %915 = vst.msk [vmem:[%s909 + $0x41] sm:$0xff] %vm910, %v755
        %916 = vst.msk [vmem:[%s909 + $0x51] sm:$0xff] %vm910, %v758
        %917 = vst.msk [vmem:[%s909 + $0x61] sm:$0xff] %vm910, %v763
        %918 = vst.msk [vmem:[%s909 + $0x71] sm:$0xff] %vm910, %v766
        %919 = vst.msk [vmem:[%s909 + $0x81] sm:$0xff] %vm910, %v771
        %920 = vst.msk [vmem:[%s909 + $0x91] sm:$0xff] %vm910, %v774
        %921 = vst.msk [vmem:[%s909 + $0xa1] sm:$0xff] %vm910, %v779
        %922 = vst.msk [vmem:[%s909 + $0xb1] sm:$0xff] %vm910, %v782
        %923 = vst.msk [vmem:[%s909 + $0xc1] sm:$0xff] %vm910, %v787
        %924 = vst.msk [vmem:[%s909 + $0xd1] sm:$0xff] %vm910, %v790
        %925 = vst.msk [vmem:[%s909 + $0xe1] sm:$0xff] %vm910, %v795
        %926 = vst.msk [vmem:[%s909 + $0xf1] sm:$0xff] %vm910, %v798
        %s927 = scalar_lea.vmem [#allocation3], 32
        %928 = vst.msk [vmem:[%s927 + $0x2] sm:$0xff] %vm910, %v847
        %929 = vst.msk [vmem:[%s927 + $0x12] sm:$0xff] %vm910, %v850
        %930 = vst.msk [vmem:[%s927 + $0x22] sm:$0xff] %vm910, %v855
        %931 = vst.msk [vmem:[%s927 + $0x32] sm:$0xff] %vm910, %v858
        %932 = vst.msk [vmem:[%s927 + $0x42] sm:$0xff] %vm910, %v863
        %933 = vst.msk [vmem:[%s927 + $0x52] sm:$0xff] %vm910, %v866
        %934 = vst.msk [vmem:[%s927 + $0x62] sm:$0xff] %vm910, %v871
        %935 = vst.msk [vmem:[%s927 + $0x72] sm:$0xff] %vm910, %v874
        %936 = vst.msk [vmem:[%s927 + $0x82] sm:$0xff] %vm910, %v879
        %937 = vst.msk [vmem:[%s927 + $0x92] sm:$0xff] %vm910, %v882
        %938 = vst.msk [vmem:[%s927 + $0xa2] sm:$0xff] %vm910, %v887
        %939 = vst.msk [vmem:[%s927 + $0xb2] sm:$0xff] %vm910, %v890
        %940 = vst.msk [vmem:[%s927 + $0xc2] sm:$0xff] %vm910, %v895
        %941 = vst.msk [vmem:[%s927 + $0xd2] sm:$0xff] %vm910, %v898
        %942 = vst.msk [vmem:[%s927 + $0xe2] sm:$0xff] %vm910, %v903
        %943 = vst.msk [vmem:[%s927 + $0xf2] sm:$0xff] %vm910, %v906
        %vm944 = vcmask 57344
        %945 = vst.msk [vmem:[#allocation2] sm:$0x1] %vm944, 0.0
        %946 = vst.msk [vmem:[#allocation2 + $0x10] sm:$0x1] %vm944, 0.0
        %947 = vst.msk [vmem:[#allocation2 + $0x20] sm:$0x1] %vm944, 0.0
        %948 = vst.msk [vmem:[#allocation2 + $0x30] sm:$0x1] %vm944, 0.0
        %949 = vst.msk [vmem:[#allocation2 + $0x40] sm:$0x1] %vm944, 0.0
        %950 = vst.msk [vmem:[#allocation2 + $0x50] sm:$0x1] %vm944, 0.0
        %951 = vst.msk [vmem:[#allocation2 + $0x60] sm:$0x1] %vm944, 0.0
        %952 = vst.msk [vmem:[#allocation2 + $0x70] sm:$0x1] %vm944, 0.0
        %953 = vst.msk [vmem:[#allocation2 + $0x80] sm:$0x1] %vm944, 0.0
        %954 = vst.msk [vmem:[#allocation2 + $0x90] sm:$0x1] %vm944, 0.0
        %955 = vst.msk [vmem:[#allocation2 + $0xa0] sm:$0x1] %vm944, 0.0
        %956 = vst.msk [vmem:[#allocation2 + $0xb0] sm:$0x1] %vm944, 0.0
        %957 = vst.msk [vmem:[#allocation2 + $0xc0] sm:$0x1] %vm944, 0.0
        %958 = vst.msk [vmem:[#allocation2 + $0xd0] sm:$0x1] %vm944, 0.0
        %959 = vst.msk [vmem:[#allocation2 + $0xe0] sm:$0x1] %vm944, 0.0
        %960 = vst.msk [vmem:[#allocation2 + $0xf0] sm:$0x1] %vm944, 0.0
        %961 = vst.msk [vmem:[#allocation2 + $0x100] sm:$0x1] %vm944, 0.0
        %962 = vst.msk [vmem:[#allocation2 + $0x110] sm:$0x1] %vm944, 0.0
        %963 = vst.msk [vmem:[#allocation2 + $0x9] sm:$0x1] %vm944, 0.0
        %964 = vst.msk [vmem:[#allocation2 + $0x19] sm:$0x1] %vm944, 0.0
        %965 = vst.msk [vmem:[#allocation2 + $0x29] sm:$0x1] %vm944, 0.0
        %966 = vst.msk [vmem:[#allocation2 + $0x39] sm:$0x1] %vm944, 0.0
        %967 = vst.msk [vmem:[#allocation2 + $0x49] sm:$0x1] %vm944, 0.0
        %968 = vst.msk [vmem:[#allocation2 + $0x59] sm:$0x1] %vm944, 0.0
        %969 = vst.msk [vmem:[#allocation2 + $0x69] sm:$0x1] %vm944, 0.0
        %970 = vst.msk [vmem:[#allocation2 + $0x79] sm:$0x1] %vm944, 0.0
        %971 = vst.msk [vmem:[#allocation2 + $0x89] sm:$0x1] %vm944, 0.0
        %972 = vst.msk [vmem:[#allocation2 + $0x99] sm:$0x1] %vm944, 0.0
        %973 = vst.msk [vmem:[#allocation2 + $0xa9] sm:$0x1] %vm944, 0.0
        %974 = vst.msk [vmem:[#allocation2 + $0xb9] sm:$0x1] %vm944, 0.0
        %975 = vst.msk [vmem:[#allocation2 + $0xc9] sm:$0x1] %vm944, 0.0
        %976 = vst.msk [vmem:[#allocation2 + $0xd9] sm:$0x1] %vm944, 0.0
        %977 = vst.msk [vmem:[#allocation2 + $0xe9] sm:$0x1] %vm944, 0.0
        %978 = vst.msk [vmem:[#allocation2 + $0xf9] sm:$0x1] %vm944, 0.0
        %979 = vst.msk [vmem:[#allocation2 + $0x109] sm:$0x1] %vm944, 0.0
        %980 = vst.msk [vmem:[#allocation2 + $0x119] sm:$0x1] %vm944, 0.0
        %vm981 = vcmask 58368
        %982 = vst.msk [vmem:[#allocation3] sm:$0x3] %vm981, 0.0
        %983 = vst.msk [vmem:[#allocation3 + $0x10] sm:$0x3] %vm981, 0.0
        %984 = vst.msk [vmem:[#allocation3 + $0x20] sm:$0x3] %vm981, 0.0
        %985 = vst.msk [vmem:[#allocation3 + $0x30] sm:$0x3] %vm981, 0.0
        %986 = vst.msk [vmem:[#allocation3 + $0x40] sm:$0x3] %vm981, 0.0
        %987 = vst.msk [vmem:[#allocation3 + $0x50] sm:$0x3] %vm981, 0.0
        %988 = vst.msk [vmem:[#allocation3 + $0x60] sm:$0x3] %vm981, 0.0
        %989 = vst.msk [vmem:[#allocation3 + $0x70] sm:$0x3] %vm981, 0.0
        %990 = vst.msk [vmem:[#allocation3 + $0x80] sm:$0x3] %vm981, 0.0
        %991 = vst.msk [vmem:[#allocation3 + $0x90] sm:$0x3] %vm981, 0.0
        %992 = vst.msk [vmem:[#allocation3 + $0xa0] sm:$0x3] %vm981, 0.0
        %993 = vst.msk [vmem:[#allocation3 + $0xb0] sm:$0x3] %vm981, 0.0
        %994 = vst.msk [vmem:[#allocation3 + $0xc0] sm:$0x3] %vm981, 0.0
        %995 = vst.msk [vmem:[#allocation3 + $0xd0] sm:$0x3] %vm981, 0.0
        %996 = vst.msk [vmem:[#allocation3 + $0xe0] sm:$0x3] %vm981, 0.0
        %997 = vst.msk [vmem:[#allocation3 + $0xf0] sm:$0x3] %vm981, 0.0
        %998 = vst.msk [vmem:[#allocation3 + $0x100] sm:$0x3] %vm981, 0.0
        %999 = vst.msk [vmem:[#allocation3 + $0x110] sm:$0x3] %vm981, 0.0
        %1000 = vst.msk [vmem:[#allocation3 + $0x120] sm:$0x3] %vm981, 0.0
        %1001 = vst.msk [vmem:[#allocation3 + $0x130] sm:$0x3] %vm981, 0.0
        %1002 = vst.msk [vmem:[#allocation3 + $0xa] sm:$0x3] %vm981, 0.0
        %1003 = vst.msk [vmem:[#allocation3 + $0x1a] sm:$0x3] %vm981, 0.0
        %1004 = vst.msk [vmem:[#allocation3 + $0x2a] sm:$0x3] %vm981, 0.0
        %1005 = vst.msk [vmem:[#allocation3 + $0x3a] sm:$0x3] %vm981, 0.0
        %1006 = vst.msk [vmem:[#allocation3 + $0x4a] sm:$0x3] %vm981, 0.0
        %1007 = vst.msk [vmem:[#allocation3 + $0x5a] sm:$0x3] %vm981, 0.0
        %1008 = vst.msk [vmem:[#allocation3 + $0x6a] sm:$0x3] %vm981, 0.0
        %1009 = vst.msk [vmem:[#allocation3 + $0x7a] sm:$0x3] %vm981, 0.0
        %1010 = vst.msk [vmem:[#allocation3 + $0x8a] sm:$0x3] %vm981, 0.0
        %1011 = vst.msk [vmem:[#allocation3 + $0x9a] sm:$0x3] %vm981, 0.0
        %1012 = vst.msk [vmem:[#allocation3 + $0xaa] sm:$0x3] %vm981, 0.0
        %1013 = vst.msk [vmem:[#allocation3 + $0xba] sm:$0x3] %vm981, 0.0
        %1014 = vst.msk [vmem:[#allocation3 + $0xca] sm:$0x3] %vm981, 0.0
        %1015 = vst.msk [vmem:[#allocation3 + $0xda] sm:$0x3] %vm981, 0.0
        %1016 = vst.msk [vmem:[#allocation3 + $0xea] sm:$0x3] %vm981, 0.0
        %1017 = vst.msk [vmem:[#allocation3 + $0xfa] sm:$0x3] %vm981, 0.0
        %1018 = vst.msk [vmem:[#allocation3 + $0x10a] sm:$0x3] %vm981, 0.0
        %1019 = vst.msk [vmem:[#allocation3 + $0x11a] sm:$0x3] %vm981, 0.0
        %1020 = vst.msk [vmem:[#allocation3 + $0x12a] sm:$0x3] %vm981, 0.0
        %1021 = vst.msk [vmem:[#allocation3 + $0x13a] sm:$0x3] %vm981, 0.0
        %p1022 = scmp.eq.s32.totalorder %s42, 0
        // Predicated region
        $region117: #{tpu_custom_call.1} parent=67 // pred_check
          %p1023 = pneg %p1022
        $region118: #{tpu_custom_call.1} parent=67 // pred_check_branch
          %1025 = sbr.rel (%p1023) target = $region120
        $region119: #{tpu_custom_call.1} parent=67 // pred_region
          %1026 = vst.msk [vmem:[#allocation2] sm:$0xff] %vm910, 0.0
          %1027 = vst.msk [vmem:[#allocation2 + $0x8] sm:$0x3] %vm981, 0.0
          %1028 = vst.msk [vmem:[#allocation3] sm:$0xff] %vm910, 0.0
          %vm1029 = vcmask 60416
          %1030 = vst.msk [vmem:[#allocation3 + $0x8] sm:$0xf] %vm1029, 0.0
          %1031 = vst.msk [vmem:[#allocation3 + $0x10] sm:$0xff] %vm910, 0.0
          %1032 = vst.msk [vmem:[#allocation3 + $0x18] sm:$0xf] %vm1029, 0.0
          %s1033 = scalar_lea.vmem [#allocation2], 272
          %1034 = vst.msk [vmem:[%s1033] sm:$0xff] %vm910, 0.0
          %1035 = vst.msk [vmem:[%s1033 + $0x8] sm:$0x3] %vm981, 0.0
          %s1036 = scalar_lea.vmem [#allocation3], 288
          %1037 = vst.msk [vmem:[%s1036] sm:$0xff] %vm910, 0.0
          %1038 = vst.msk [vmem:[%s1036 + $0x8] sm:$0xf] %vm1029, 0.0
          %1039 = vst.msk [vmem:[%s1036 + $0x10] sm:$0xff] %vm910, 0.0
          %1040 = vst.msk [vmem:[%s1036 + $0x18] sm:$0xf] %vm1029, 0.0
        $region120: #{tpu_custom_call.1} parent=67 // pred_fallthru
          _
        %v1041 = vld [vmem:[#allocation13] sm:$0x7]
        %v1042 = vld [vmem:[#allocation13 + $0x4] sm:$0x7]
        %v1043 = vld [vmem:[#allocation13 + $0x8] sm:$0x7]
        %v1044 = vld [vmem:[#allocation16] sm:$0x1f]
        %v1045 = vld [vmem:[#allocation16 + $0x8] sm:$0x1f]
        %v1046 = vld [vmem:[#allocation16 + $0x10] sm:$0x1f]
        %v1047 = vld [vmem:[#allocation16 + $0x18] sm:$0x1f]
        %v1048 = vld [vmem:[#allocation16 + $0x20] sm:$0x1f]
        %v1049 = vld [vmem:[#allocation2] sm:$0xff]
        %v1050 = vld [vmem:[#allocation2 + $0x10] sm:$0xff]
        %v1051 = vld [vmem:[#allocation2 + $0x20] sm:$0xff]
        %v1052 = vld [vmem:[#allocation2 + $0x30] sm:$0xff]
        %v1053 = vld [vmem:[#allocation2 + $0x40] sm:$0xff]
        %v1054 = vld [vmem:[#allocation2 + $0x50] sm:$0xff]
        %v1055 = vld [vmem:[#allocation2 + $0x60] sm:$0xff]
        %v1056 = vld [vmem:[#allocation2 + $0x70] sm:$0xff]
        %v1057 = vld [vmem:[#allocation2 + $0x80] sm:$0xff]
        %v1058 = vld [vmem:[#allocation2 + $0x90] sm:$0xff]
        %v1059 = vld [vmem:[#allocation2 + $0xa0] sm:$0xff]
        %v1060 = vld [vmem:[#allocation2 + $0xb0] sm:$0xff]
        %v1061 = vld [vmem:[#allocation2 + $0xc0] sm:$0xff]
        %v1062 = vld [vmem:[#allocation2 + $0xd0] sm:$0xff]
        %v1063 = vld [vmem:[#allocation2 + $0xe0] sm:$0xff]
        %v1064 = vld [vmem:[#allocation2 + $0xf0] sm:$0xff]
        %v1065 = vld [vmem:[#allocation2 + $0x100] sm:$0xff]
        %v1066 = vld [vmem:[#allocation2 + $0x110] sm:$0xff]
        %v1067 = vld [vmem:[#allocation2 + $0x1] sm:$0xff]
        %v1068 = vld [vmem:[#allocation2 + $0x11] sm:$0xff]
        %v1069 = vld [vmem:[#allocation2 + $0x21] sm:$0xff]
        %v1070 = vld [vmem:[#allocation2 + $0x31] sm:$0xff]
        %v1071 = vld [vmem:[#allocation2 + $0x41] sm:$0xff]
        %v1072 = vld [vmem:[#allocation2 + $0x51] sm:$0xff]
        %v1073 = vld [vmem:[#allocation2 + $0x61] sm:$0xff]
        %v1074 = vld [vmem:[#allocation2 + $0x71] sm:$0xff]
        %v1075 = vld [vmem:[#allocation2 + $0x81] sm:$0xff]
        %v1076 = vld [vmem:[#allocation2 + $0x91] sm:$0xff]
        %v1077 = vld [vmem:[#allocation2 + $0xa1] sm:$0xff]
        %v1078 = vld [vmem:[#allocation2 + $0xb1] sm:$0xff]
        %v1079 = vld [vmem:[#allocation2 + $0xc1] sm:$0xff]
        %v1080 = vld [vmem:[#allocation2 + $0xd1] sm:$0xff]
        %v1081 = vld [vmem:[#allocation2 + $0xe1] sm:$0xff]
        %v1082 = vld [vmem:[#allocation2 + $0xf1] sm:$0xff]
        %v1083 = vld [vmem:[#allocation2 + $0x101] sm:$0xff]
        %v1084 = vld [vmem:[#allocation2 + $0x111] sm:$0xff]
        %v1085 = vld [vmem:[#allocation2 + $0x2] sm:$0xff]
        %v1086 = vld [vmem:[#allocation2 + $0x12] sm:$0xff]
        %v1087 = vld [vmem:[#allocation2 + $0x22] sm:$0xff]
        %v1088 = vld [vmem:[#allocation2 + $0x32] sm:$0xff]
        %v1089 = vld [vmem:[#allocation2 + $0x42] sm:$0xff]
        %v1090 = vld [vmem:[#allocation2 + $0x52] sm:$0xff]
        %v1091 = vld [vmem:[#allocation2 + $0x62] sm:$0xff]
        %v1092 = vld [vmem:[#allocation2 + $0x72] sm:$0xff]
        %v1093 = vld [vmem:[#allocation2 + $0x82] sm:$0xff]
        %v1094 = vld [vmem:[#allocation2 + $0x92] sm:$0xff]
        %v1095 = vld [vmem:[#allocation2 + $0xa2] sm:$0xff]
        %v1096 = vld [vmem:[#allocation2 + $0xb2] sm:$0xff]
        %v1097 = vld [vmem:[#allocation2 + $0xc2] sm:$0xff]
        %v1098 = vld [vmem:[#allocation2 + $0xd2] sm:$0xff]
        %v1099 = vld [vmem:[#allocation2 + $0xe2] sm:$0xff]
        %v1100 = vld [vmem:[#allocation2 + $0xf2] sm:$0xff]
        %v1101 = vld [vmem:[#allocation2 + $0x102] sm:$0xff]
        %v1102 = vld [vmem:[#allocation2 + $0x112] sm:$0xff]
        %v1103 = vld [vmem:[#allocation3] sm:$0xff]
        %v1104 = vld [vmem:[#allocation3 + $0x10] sm:$0xff]
        %v1105 = vld [vmem:[#allocation3 + $0x20] sm:$0xff]
        %v1106 = vld [vmem:[#allocation3 + $0x30] sm:$0xff]
        %v1107 = vld [vmem:[#allocation3 + $0x40] sm:$0xff]
        %v1108 = vld [vmem:[#allocation3 + $0x50] sm:$0xff]
        %v1109 = vld [vmem:[#allocation3 + $0x60] sm:$0xff]
        %v1110 = vld [vmem:[#allocation3 + $0x70] sm:$0xff]
        %v1111 = vld [vmem:[#allocation3 + $0x80] sm:$0xff]
        %v1112 = vld [vmem:[#allocation3 + $0x90] sm:$0xff]
        %v1113 = vld [vmem:[#allocation3 + $0xa0] sm:$0xff]
        %v1114 = vld [vmem:[#allocation3 + $0xb0] sm:$0xff]
        %v1115 = vld [vmem:[#allocation3 + $0xc0] sm:$0xff]
        %v1116 = vld [vmem:[#allocation3 + $0xd0] sm:$0xff]
        %v1117 = vld [vmem:[#allocation3 + $0xe0] sm:$0xff]
        %v1118 = vld [vmem:[#allocation3 + $0xf0] sm:$0xff]
        %v1119 = vld [vmem:[#allocation3 + $0x100] sm:$0xff]
        %v1120 = vld [vmem:[#allocation3 + $0x110] sm:$0xff]
        %v1121 = vld [vmem:[#allocation3 + $0x120] sm:$0xff]
        %v1122 = vld [vmem:[#allocation3 + $0x130] sm:$0xff]
        %v1123 = vld [vmem:[#allocation3 + $0x1] sm:$0xff]
        %v1124 = vld [vmem:[#allocation3 + $0x11] sm:$0xff]
        %v1125 = vld [vmem:[#allocation3 + $0x21] sm:$0xff]
        %v1126 = vld [vmem:[#allocation3 + $0x31] sm:$0xff]
        %v1127 = vld [vmem:[#allocation3 + $0x41] sm:$0xff]
        %v1128 = vld [vmem:[#allocation3 + $0x51] sm:$0xff]
        %v1129 = vld [vmem:[#allocation3 + $0x61] sm:$0xff]
        %v1130 = vld [vmem:[#allocation3 + $0x71] sm:$0xff]
        %v1131 = vld [vmem:[#allocation3 + $0x81] sm:$0xff]
        %v1132 = vld [vmem:[#allocation3 + $0x91] sm:$0xff]
        %v1133 = vld [vmem:[#allocation3 + $0xa1] sm:$0xff]
        %v1134 = vld [vmem:[#allocation3 + $0xb1] sm:$0xff]
        %v1135 = vld [vmem:[#allocation3 + $0xc1] sm:$0xff]
        %v1136 = vld [vmem:[#allocation3 + $0xd1] sm:$0xff]
        %v1137 = vld [vmem:[#allocation3 + $0xe1] sm:$0xff]
        %v1138 = vld [vmem:[#allocation3 + $0xf1] sm:$0xff]
        %v1139 = vld [vmem:[#allocation3 + $0x101] sm:$0xff]
        %v1140 = vld [vmem:[#allocation3 + $0x111] sm:$0xff]
        %v1141 = vld [vmem:[#allocation3 + $0x121] sm:$0xff]
        %v1142 = vld [vmem:[#allocation3 + $0x131] sm:$0xff]
        %v1143 = vld [vmem:[#allocation3 + $0x2] sm:$0xff]
        %v1144 = vld [vmem:[#allocation3 + $0x12] sm:$0xff]
        %v1145 = vld [vmem:[#allocation3 + $0x22] sm:$0xff]
        %v1146 = vld [vmem:[#allocation3 + $0x32] sm:$0xff]
        %v1147 = vld [vmem:[#allocation3 + $0x42] sm:$0xff]
        %v1148 = vld [vmem:[#allocation3 + $0x52] sm:$0xff]
        %v1149 = vld [vmem:[#allocation3 + $0x62] sm:$0xff]
        %v1150 = vld [vmem:[#allocation3 + $0x72] sm:$0xff]
        %v1151 = vld [vmem:[#allocation3 + $0x82] sm:$0xff]
        %v1152 = vld [vmem:[#allocation3 + $0x92] sm:$0xff]
        %v1153 = vld [vmem:[#allocation3 + $0xa2] sm:$0xff]
        %v1154 = vld [vmem:[#allocation3 + $0xb2] sm:$0xff]
        %v1155 = vld [vmem:[#allocation3 + $0xc2] sm:$0xff]
        %v1156 = vld [vmem:[#allocation3 + $0xd2] sm:$0xff]
        %v1157 = vld [vmem:[#allocation3 + $0xe2] sm:$0xff]
        %v1158 = vld [vmem:[#allocation3 + $0xf2] sm:$0xff]
        %v1159 = vld [vmem:[#allocation3 + $0x102] sm:$0xff]
        %v1160 = vld [vmem:[#allocation3 + $0x112] sm:$0xff]
        %v1161 = vld [vmem:[#allocation3 + $0x122] sm:$0xff]
        %v1162 = vld [vmem:[#allocation3 + $0x132] sm:$0xff]
        %v1163 = vld [vmem:[#allocation3 + $0x3] sm:$0xff]
        %v1164 = vld [vmem:[#allocation3 + $0x13] sm:$0xff]
        %v1165 = vld [vmem:[#allocation3 + $0x23] sm:$0xff]
        %v1166 = vld [vmem:[#allocation3 + $0x33] sm:$0xff]
        %v1167 = vld [vmem:[#allocation3 + $0x43] sm:$0xff]
        %v1168 = vld [vmem:[#allocation3 + $0x53] sm:$0xff]
        %v1169 = vld [vmem:[#allocation3 + $0x63] sm:$0xff]
        %v1170 = vld [vmem:[#allocation3 + $0x73] sm:$0xff]
        %v1171 = vld [vmem:[#allocation3 + $0x83] sm:$0xff]
        %v1172 = vld [vmem:[#allocation3 + $0x93] sm:$0xff]
        %v1173 = vld [vmem:[#allocation3 + $0xa3] sm:$0xff]
        %v1174 = vld [vmem:[#allocation3 + $0xb3] sm:$0xff]
        %v1175 = vld [vmem:[#allocation3 + $0xc3] sm:$0xff]
        %v1176 = vld [vmem:[#allocation3 + $0xd3] sm:$0xff]
        %v1177 = vld [vmem:[#allocation3 + $0xe3] sm:$0xff]
        %v1178 = vld [vmem:[#allocation3 + $0xf3] sm:$0xff]
        %v1179 = vld [vmem:[#allocation3 + $0x103] sm:$0xff]
        %v1180 = vld [vmem:[#allocation3 + $0x113] sm:$0xff]
        %v1181 = vld [vmem:[#allocation3 + $0x123] sm:$0xff]
        %v1182 = vld [vmem:[#allocation3 + $0x133] sm:$0xff]
        %v1183 = vld [vmem:[#allocation3 + $0x4] sm:$0xff]
        %v1184 = vld [vmem:[#allocation3 + $0x14] sm:$0xff]
        %v1185 = vld [vmem:[#allocation3 + $0x24] sm:$0xff]
        %v1186 = vld [vmem:[#allocation3 + $0x34] sm:$0xff]
        %v1187 = vld [vmem:[#allocation3 + $0x44] sm:$0xff]
        %v1188 = vld [vmem:[#allocation3 + $0x54] sm:$0xff]
        %v1189 = vld [vmem:[#allocation3 + $0x64] sm:$0xff]
        %v1190 = vld [vmem:[#allocation3 + $0x74] sm:$0xff]
        %v1191 = vld [vmem:[#allocation3 + $0x84] sm:$0xff]
        %v1192 = vld [vmem:[#allocation3 + $0x94] sm:$0xff]
        %v1193 = vld [vmem:[#allocation3 + $0xa4] sm:$0xff]
        %v1194 = vld [vmem:[#allocation3 + $0xb4] sm:$0xff]
        %v1195 = vld [vmem:[#allocation3 + $0xc4] sm:$0xff]
        %v1196 = vld [vmem:[#allocation3 + $0xd4] sm:$0xff]
        %v1197 = vld [vmem:[#allocation3 + $0xe4] sm:$0xff]
        %v1198 = vld [vmem:[#allocation3 + $0xf4] sm:$0xff]
        %v1199 = vld [vmem:[#allocation3 + $0x104] sm:$0xff]
        %v1200 = vld [vmem:[#allocation3 + $0x114] sm:$0xff]
        %v1201 = vld [vmem:[#allocation3 + $0x124] sm:$0xff]
        %v1202 = vld [vmem:[#allocation3 + $0x134] sm:$0xff]
        %v1203 = vlaneseq
        %v1204 = vshrl.u32 %v1203, 7
        %v1205 = vsub.s32 0, %v1204
        %v1206 = vrot.slane %v1041, %v1205
        %v1207 = vmul.f32 %v1049, %v1206
        %v1208 = vmul.f32 %v1050, %v1206
        %v1209 = vmul.f32 %v1051, %v1206
        %v1210 = vmul.f32 %v1052, %v1206
        %v1211 = vmul.f32 %v1053, %v1206
        %v1212 = vmul.f32 %v1054, %v1206
        %v1213 = vmul.f32 %v1055, %v1206
        %v1214 = vmul.f32 %v1056, %v1206
        %v1215 = vmul.f32 %v1057, %v1206
        %v1216 = vmul.f32 %v1058, %v1206
        %v1217 = vmul.f32 %v1059, %v1206
        %v1218 = vmul.f32 %v1060, %v1206
        %v1219 = vmul.f32 %v1061, %v1206
        %v1220 = vmul.f32 %v1062, %v1206
        %v1221 = vmul.f32 %v1063, %v1206
        %v1222 = vmul.f32 %v1064, %v1206
        %v1223 = vld [vmem:[#allocation15] sm:$0x1]
        %v1225 = vlaneseq
        %v1226 = vshrl.u32 %v1225, 7
        %v1227 = vsub.s32 0, %v1226
        %v1228 = vrot.slane %v1223, %v1227
        %v1230 = vadd.f32 %v1207, %v1228
        %v1231 = vadd.f32 %v1208, %v1228
        %v1232 = vadd.f32 %v1209, %v1228
        %v1233 = vadd.f32 %v1210, %v1228
        %v1234 = vadd.f32 %v1211, %v1228
        %v1235 = vadd.f32 %v1212, %v1228
        %v1236 = vadd.f32 %v1213, %v1228
        %v1237 = vadd.f32 %v1214, %v1228
        %v1238 = vadd.f32 %v1215, %v1228
        %v1239 = vadd.f32 %v1216, %v1228
        %v1240 = vadd.f32 %v1217, %v1228
        %v1241 = vadd.f32 %v1218, %v1228
        %v1242 = vadd.f32 %v1219, %v1228
        %v1243 = vadd.f32 %v1220, %v1228
        %v1244 = vadd.f32 %v1221, %v1228
        %v1245 = vadd.f32 %v1222, %v1228
        %v1246 = vlaneseq
        %v1247 = vshrl.u32 %v1246, 7
        %v1248 = vsub.s32 1, %v1247
        %v1249 = vrot.slane %v1041, %v1248
        %v1250 = vmul.f32 %v1067, %v1249
        %v1251 = vmul.f32 %v1068, %v1249
        %v1252 = vmul.f32 %v1069, %v1249
        %v1253 = vmul.f32 %v1070, %v1249
        %v1254 = vmul.f32 %v1071, %v1249
        %v1255 = vmul.f32 %v1072, %v1249
        %v1256 = vmul.f32 %v1073, %v1249
        %v1257 = vmul.f32 %v1074, %v1249
        %v1258 = vmul.f32 %v1075, %v1249
        %v1259 = vmul.f32 %v1076, %v1249
        %v1260 = vmul.f32 %v1077, %v1249
        %v1261 = vmul.f32 %v1078, %v1249
        %v1262 = vmul.f32 %v1079, %v1249
        %v1263 = vmul.f32 %v1080, %v1249
        %v1264 = vmul.f32 %v1081, %v1249
        %v1265 = vmul.f32 %v1082, %v1249
        %v1266 = vadd.f32 %v1230, %v1250
        %v1267 = vadd.f32 %v1231, %v1251
        %v1268 = vadd.f32 %v1232, %v1252
        %v1269 = vadd.f32 %v1233, %v1253
        %v1270 = vadd.f32 %v1234, %v1254
        %v1271 = vadd.f32 %v1235, %v1255
        %v1272 = vadd.f32 %v1236, %v1256
        %v1273 = vadd.f32 %v1237, %v1257
        %v1274 = vadd.f32 %v1238, %v1258
        %v1275 = vadd.f32 %v1239, %v1259
        %v1276 = vadd.f32 %v1240, %v1260
        %v1277 = vadd.f32 %v1241, %v1261
        %v1278 = vadd.f32 %v1242, %v1262
        %v1279 = vadd.f32 %v1243, %v1263
        %v1280 = vadd.f32 %v1244, %v1264
        %v1281 = vadd.f32 %v1245, %v1265
        %v1282 = vlaneseq
        %v1283 = vshrl.u32 %v1282, 7
        %v1284 = vsub.s32 2, %v1283
        %v1285 = vrot.slane %v1041, %v1284
        %v1286 = vmul.f32 %v1085, %v1285
        %v1287 = vmul.f32 %v1086, %v1285
        %v1288 = vmul.f32 %v1087, %v1285
        %v1289 = vmul.f32 %v1088, %v1285
        %v1290 = vmul.f32 %v1089, %v1285
        %v1291 = vmul.f32 %v1090, %v1285
        %v1292 = vmul.f32 %v1091, %v1285
        %v1293 = vmul.f32 %v1092, %v1285
        %v1294 = vmul.f32 %v1093, %v1285
        %v1295 = vmul.f32 %v1094, %v1285
        %v1296 = vmul.f32 %v1095, %v1285
        %v1297 = vmul.f32 %v1096, %v1285
        %v1298 = vmul.f32 %v1097, %v1285
        %v1299 = vmul.f32 %v1098, %v1285
        %v1300 = vmul.f32 %v1099, %v1285
        %v1301 = vmul.f32 %v1100, %v1285
        %v1302 = vadd.f32 %v1266, %v1286
        %v1303 = vadd.f32 %v1267, %v1287
        %v1304 = vadd.f32 %v1268, %v1288
        %v1305 = vadd.f32 %v1269, %v1289
        %v1306 = vadd.f32 %v1270, %v1290
        %v1307 = vadd.f32 %v1271, %v1291
        %v1308 = vadd.f32 %v1272, %v1292
        %v1309 = vadd.f32 %v1273, %v1293
        %v1310 = vadd.f32 %v1274, %v1294
        %v1311 = vadd.f32 %v1275, %v1295
        %v1312 = vadd.f32 %v1276, %v1296
        %v1313 = vadd.f32 %v1277, %v1297
        %v1314 = vadd.f32 %v1278, %v1298
        %v1315 = vadd.f32 %v1279, %v1299
        %v1316 = vadd.f32 %v1280, %v1300
        %v1317 = vadd.f32 %v1281, %v1301
        %v1318 = vlaneseq
        %v1319 = vshrl.u32 %v1318, 7
        %v1320 = vsub.s32 0, %v1319
        %v1321 = vrot.slane %v1042, %v1320
        %v1322 = vmul.f32 %v1050, %v1321
        %v1323 = vmul.f32 %v1051, %v1321
        %v1324 = vmul.f32 %v1052, %v1321
        %v1325 = vmul.f32 %v1053, %v1321
        %v1326 = vmul.f32 %v1054, %v1321
        %v1327 = vmul.f32 %v1055, %v1321
        %v1328 = vmul.f32 %v1056, %v1321
        %v1329 = vmul.f32 %v1057, %v1321
        %v1330 = vmul.f32 %v1058, %v1321
        %v1331 = vmul.f32 %v1059, %v1321
        %v1332 = vmul.f32 %v1060, %v1321
        %v1333 = vmul.f32 %v1061, %v1321
        %v1334 = vmul.f32 %v1062, %v1321
        %v1335 = vmul.f32 %v1063, %v1321
        %v1336 = vmul.f32 %v1064, %v1321
        %v1337 = vmul.f32 %v1065, %v1321
        %v1338 = vadd.f32 %v1302, %v1322
        %v1339 = vadd.f32 %v1303, %v1323
        %v1340 = vadd.f32 %v1304, %v1324
        %v1341 = vadd.f32 %v1305, %v1325
        %v1342 = vadd.f32 %v1306, %v1326
        %v1343 = vadd.f32 %v1307, %v1327
        %v1344 = vadd.f32 %v1308, %v1328
        %v1345 = vadd.f32 %v1309, %v1329
        %v1346 = vadd.f32 %v1310, %v1330
        %v1347 = vadd.f32 %v1311, %v1331
        %v1348 = vadd.f32 %v1312, %v1332
        %v1349 = vadd.f32 %v1313, %v1333
        %v1350 = vadd.f32 %v1314, %v1334
        %v1351 = vadd.f32 %v1315, %v1335
        %v1352 = vadd.f32 %v1316, %v1336
        %v1353 = vadd.f32 %v1317, %v1337
        %v1354 = vlaneseq
        %v1355 = vshrl.u32 %v1354, 7
        %v1356 = vsub.s32 1, %v1355
        %v1357 = vrot.slane %v1042, %v1356
        %v1358 = vmul.f32 %v1068, %v1357
        %v1359 = vmul.f32 %v1069, %v1357
        %v1360 = vmul.f32 %v1070, %v1357
        %v1361 = vmul.f32 %v1071, %v1357
        %v1362 = vmul.f32 %v1072, %v1357
        %v1363 = vmul.f32 %v1073, %v1357
        %v1364 = vmul.f32 %v1074, %v1357
        %v1365 = vmul.f32 %v1075, %v1357
        %v1366 = vmul.f32 %v1076, %v1357
        %v1367 = vmul.f32 %v1077, %v1357
        %v1368 = vmul.f32 %v1078, %v1357
        %v1369 = vmul.f32 %v1079, %v1357
        %v1370 = vmul.f32 %v1080, %v1357
        %v1371 = vmul.f32 %v1081, %v1357
        %v1372 = vmul.f32 %v1082, %v1357
        %v1373 = vmul.f32 %v1083, %v1357
        %v1374 = vadd.f32 %v1338, %v1358
        %v1375 = vadd.f32 %v1339, %v1359
        %v1376 = vadd.f32 %v1340, %v1360
        %v1377 = vadd.f32 %v1341, %v1361
        %v1378 = vadd.f32 %v1342, %v1362
        %v1379 = vadd.f32 %v1343, %v1363
        %v1380 = vadd.f32 %v1344, %v1364
        %v1381 = vadd.f32 %v1345, %v1365
        %v1382 = vadd.f32 %v1346, %v1366
        %v1383 = vadd.f32 %v1347, %v1367
        %v1384 = vadd.f32 %v1348, %v1368
        %v1385 = vadd.f32 %v1349, %v1369
        %v1386 = vadd.f32 %v1350, %v1370
        %v1387 = vadd.f32 %v1351, %v1371
        %v1388 = vadd.f32 %v1352, %v1372
        %v1389 = vadd.f32 %v1353, %v1373
        %v1390 = vlaneseq
        %v1391 = vshrl.u32 %v1390, 7
        %v1392 = vsub.s32 2, %v1391
        %v1393 = vrot.slane %v1042, %v1392
        %v1394 = vmul.f32 %v1086, %v1393
        %v1395 = vmul.f32 %v1087, %v1393
        %v1396 = vmul.f32 %v1088, %v1393
        %v1397 = vmul.f32 %v1089, %v1393
        %v1398 = vmul.f32 %v1090, %v1393
        %v1399 = vmul.f32 %v1091, %v1393
        %v1400 = vmul.f32 %v1092, %v1393
        %v1401 = vmul.f32 %v1093, %v1393
        %v1402 = vmul.f32 %v1094, %v1393
        %v1403 = vmul.f32 %v1095, %v1393
        %v1404 = vmul.f32 %v1096, %v1393
        %v1405 = vmul.f32 %v1097, %v1393
        %v1406 = vmul.f32 %v1098, %v1393
        %v1407 = vmul.f32 %v1099, %v1393
        %v1408 = vmul.f32 %v1100, %v1393
        %v1409 = vmul.f32 %v1101, %v1393
        %v1410 = vadd.f32 %v1374, %v1394
        %v1411 = vadd.f32 %v1375, %v1395
        %v1412 = vadd.f32 %v1376, %v1396
        %v1413 = vadd.f32 %v1377, %v1397
        %v1414 = vadd.f32 %v1378, %v1398
        %v1415 = vadd.f32 %v1379, %v1399
        %v1416 = vadd.f32 %v1380, %v1400
        %v1417 = vadd.f32 %v1381, %v1401
        %v1418 = vadd.f32 %v1382, %v1402
        %v1419 = vadd.f32 %v1383, %v1403
        %v1420 = vadd.f32 %v1384, %v1404
        %v1421 = vadd.f32 %v1385, %v1405
        %v1422 = vadd.f32 %v1386, %v1406
        %v1423 = vadd.f32 %v1387, %v1407
        %v1424 = vadd.f32 %v1388, %v1408
        %v1425 = vadd.f32 %v1389, %v1409
        %v1426 = vlaneseq
        %v1427 = vshrl.u32 %v1426, 7
        %v1428 = vsub.s32 0, %v1427
        %v1429 = vrot.slane %v1043, %v1428
        %v1430 = vmul.f32 %v1051, %v1429
        %v1431 = vmul.f32 %v1052, %v1429
        %v1432 = vmul.f32 %v1053, %v1429
        %v1433 = vmul.f32 %v1054, %v1429
        %v1434 = vmul.f32 %v1055, %v1429
        %v1435 = vmul.f32 %v1056, %v1429
        %v1436 = vmul.f32 %v1057, %v1429
        %v1437 = vmul.f32 %v1058, %v1429
        %v1438 = vmul.f32 %v1059, %v1429
        %v1439 = vmul.f32 %v1060, %v1429
        %v1440 = vmul.f32 %v1061, %v1429
        %v1441 = vmul.f32 %v1062, %v1429
        %v1442 = vmul.f32 %v1063, %v1429
        %v1443 = vmul.f32 %v1064, %v1429
        %v1444 = vmul.f32 %v1065, %v1429
        %v1445 = vmul.f32 %v1066, %v1429
        %v1446 = vadd.f32 %v1410, %v1430
        %v1447 = vadd.f32 %v1411, %v1431
        %v1448 = vadd.f32 %v1412, %v1432
        %v1449 = vadd.f32 %v1413, %v1433
        %v1450 = vadd.f32 %v1414, %v1434
        %v1451 = vadd.f32 %v1415, %v1435
        %v1452 = vadd.f32 %v1416, %v1436
        %v1453 = vadd.f32 %v1417, %v1437
        %v1454 = vadd.f32 %v1418, %v1438
        %v1455 = vadd.f32 %v1419, %v1439
        %v1456 = vadd.f32 %v1420, %v1440
        %v1457 = vadd.f32 %v1421, %v1441
        %v1458 = vadd.f32 %v1422, %v1442
        %v1459 = vadd.f32 %v1423, %v1443
        %v1460 = vadd.f32 %v1424, %v1444
        %v1461 = vadd.f32 %v1425, %v1445
        %v1462 = vlaneseq
        %v1463 = vshrl.u32 %v1462, 7
        %v1464 = vsub.s32 1, %v1463
        %v1465 = vrot.slane %v1043, %v1464
        %v1466 = vmul.f32 %v1069, %v1465
        %v1467 = vmul.f32 %v1070, %v1465
        %v1468 = vmul.f32 %v1071, %v1465
        %v1469 = vmul.f32 %v1072, %v1465
        %v1470 = vmul.f32 %v1073, %v1465
        %v1471 = vmul.f32 %v1074, %v1465
        %v1472 = vmul.f32 %v1075, %v1465
        %v1473 = vmul.f32 %v1076, %v1465
        %v1474 = vmul.f32 %v1077, %v1465
        %v1475 = vmul.f32 %v1078, %v1465
        %v1476 = vmul.f32 %v1079, %v1465
        %v1477 = vmul.f32 %v1080, %v1465
        %v1478 = vmul.f32 %v1081, %v1465
        %v1479 = vmul.f32 %v1082, %v1465
        %v1480 = vmul.f32 %v1083, %v1465
        %v1481 = vmul.f32 %v1084, %v1465
        %v1482 = vadd.f32 %v1446, %v1466
        %v1483 = vadd.f32 %v1447, %v1467
        %v1484 = vadd.f32 %v1448, %v1468
        %v1485 = vadd.f32 %v1449, %v1469
        %v1486 = vadd.f32 %v1450, %v1470
        %v1487 = vadd.f32 %v1451, %v1471
        %v1488 = vadd.f32 %v1452, %v1472
        %v1489 = vadd.f32 %v1453, %v1473
        %v1490 = vadd.f32 %v1454, %v1474
        %v1491 = vadd.f32 %v1455, %v1475
        %v1492 = vadd.f32 %v1456, %v1476
        %v1493 = vadd.f32 %v1457, %v1477
        %v1494 = vadd.f32 %v1458, %v1478
        %v1495 = vadd.f32 %v1459, %v1479
        %v1496 = vadd.f32 %v1460, %v1480
        %v1497 = vadd.f32 %v1461, %v1481
        %v1498 = vlaneseq
        %v1499 = vshrl.u32 %v1498, 7
        %v1500 = vsub.s32 2, %v1499
        %v1501 = vrot.slane %v1043, %v1500
        %v1502 = vmul.f32 %v1087, %v1501
        %v1503 = vmul.f32 %v1088, %v1501
        %v1504 = vmul.f32 %v1089, %v1501
        %v1505 = vmul.f32 %v1090, %v1501
        %v1506 = vmul.f32 %v1091, %v1501
        %v1507 = vmul.f32 %v1092, %v1501
        %v1508 = vmul.f32 %v1093, %v1501
        %v1509 = vmul.f32 %v1094, %v1501
        %v1510 = vmul.f32 %v1095, %v1501
        %v1511 = vmul.f32 %v1096, %v1501
        %v1512 = vmul.f32 %v1097, %v1501
        %v1513 = vmul.f32 %v1098, %v1501
        %v1514 = vmul.f32 %v1099, %v1501
        %v1515 = vmul.f32 %v1100, %v1501
        %v1516 = vmul.f32 %v1101, %v1501
        %v1517 = vmul.f32 %v1102, %v1501
        %v1518 = vadd.f32 %v1482, %v1502
        %v1519 = vadd.f32 %v1483, %v1503
        %v1520 = vadd.f32 %v1484, %v1504
        %v1521 = vadd.f32 %v1485, %v1505
        %v1522 = vadd.f32 %v1486, %v1506
        %v1523 = vadd.f32 %v1487, %v1507
        %v1524 = vadd.f32 %v1488, %v1508
        %v1525 = vadd.f32 %v1489, %v1509
        %v1526 = vadd.f32 %v1490, %v1510
        %v1527 = vadd.f32 %v1491, %v1511
        %v1528 = vadd.f32 %v1492, %v1512
        %v1529 = vadd.f32 %v1493, %v1513
        %v1530 = vadd.f32 %v1494, %v1514
        %v1531 = vadd.f32 %v1495, %v1515
        %v1532 = vadd.f32 %v1496, %v1516
        %v1533 = vadd.f32 %v1497, %v1517
        %v1534 = vlaneseq
        %v1535 = vshrl.u32 %v1534, 7
        %v1536 = vsub.s32 0, %v1535
        %v1537 = vrot.slane %v1044, %v1536
        %v1538 = vmul.f32 %v1103, %v1537
        %v1539 = vmul.f32 %v1104, %v1537
        %v1540 = vmul.f32 %v1105, %v1537
        %v1541 = vmul.f32 %v1106, %v1537
        %v1542 = vmul.f32 %v1107, %v1537
        %v1543 = vmul.f32 %v1108, %v1537
        %v1544 = vmul.f32 %v1109, %v1537
        %v1545 = vmul.f32 %v1110, %v1537
        %v1546 = vmul.f32 %v1111, %v1537
        %v1547 = vmul.f32 %v1112, %v1537
        %v1548 = vmul.f32 %v1113, %v1537
        %v1549 = vmul.f32 %v1114, %v1537
        %v1550 = vmul.f32 %v1115, %v1537
        %v1551 = vmul.f32 %v1116, %v1537
        %v1552 = vmul.f32 %v1117, %v1537
        %v1553 = vmul.f32 %v1118, %v1537
        %v1554 = vld [vmem:[#allocation18] sm:$0x1]
        %v1556 = vlaneseq
        %v1557 = vshrl.u32 %v1556, 7
        %v1558 = vsub.s32 0, %v1557
        %v1559 = vrot.slane %v1554, %v1558
        %v1561 = vadd.f32 %v1538, %v1559
        %v1562 = vadd.f32 %v1539, %v1559
        %v1563 = vadd.f32 %v1540, %v1559
        %v1564 = vadd.f32 %v1541, %v1559
        %v1565 = vadd.f32 %v1542, %v1559
        %v1566 = vadd.f32 %v1543, %v1559
        %v1567 = vadd.f32 %v1544, %v1559
        %v1568 = vadd.f32 %v1545, %v1559
        %v1569 = vadd.f32 %v1546, %v1559
        %v1570 = vadd.f32 %v1547, %v1559
        %v1571 = vadd.f32 %v1548, %v1559
        %v1572 = vadd.f32 %v1549, %v1559
        %v1573 = vadd.f32 %v1550, %v1559
        %v1574 = vadd.f32 %v1551, %v1559
        %v1575 = vadd.f32 %v1552, %v1559
        %v1576 = vadd.f32 %v1553, %v1559
        %v1577 = vlaneseq
        %v1578 = vshrl.u32 %v1577, 7
        %v1579 = vsub.s32 1, %v1578
        %v1580 = vrot.slane %v1044, %v1579
        %v1581 = vmul.f32 %v1123, %v1580
        %v1582 = vmul.f32 %v1124, %v1580
        %v1583 = vmul.f32 %v1125, %v1580
        %v1584 = vmul.f32 %v1126, %v1580
        %v1585 = vmul.f32 %v1127, %v1580
        %v1586 = vmul.f32 %v1128, %v1580
        %v1587 = vmul.f32 %v1129, %v1580
        %v1588 = vmul.f32 %v1130, %v1580
        %v1589 = vmul.f32 %v1131, %v1580
        %v1590 = vmul.f32 %v1132, %v1580
        %v1591 = vmul.f32 %v1133, %v1580
        %v1592 = vmul.f32 %v1134, %v1580
        %v1593 = vmul.f32 %v1135, %v1580
        %v1594 = vmul.f32 %v1136, %v1580
        %v1595 = vmul.f32 %v1137, %v1580
        %v1596 = vmul.f32 %v1138, %v1580
        %v1597 = vadd.f32 %v1561, %v1581
        %v1598 = vadd.f32 %v1562, %v1582
        %v1599 = vadd.f32 %v1563, %v1583
        %v1600 = vadd.f32 %v1564, %v1584
        %v1601 = vadd.f32 %v1565, %v1585
        %v1602 = vadd.f32 %v1566, %v1586
        %v1603 = vadd.f32 %v1567, %v1587
        %v1604 = vadd.f32 %v1568, %v1588
        %v1605 = vadd.f32 %v1569, %v1589
        %v1606 = vadd.f32 %v1570, %v1590
        %v1607 = vadd.f32 %v1571, %v1591
        %v1608 = vadd.f32 %v1572, %v1592
        %v1609 = vadd.f32 %v1573, %v1593
        %v1610 = vadd.f32 %v1574, %v1594
        %v1611 = vadd.f32 %v1575, %v1595
        %v1612 = vadd.f32 %v1576, %v1596
        %v1613 = vlaneseq
        %v1614 = vshrl.u32 %v1613, 7
        %v1615 = vsub.s32 2, %v1614
        %v1616 = vrot.slane %v1044, %v1615
        %v1617 = vmul.f32 %v1143, %v1616
        %v1618 = vmul.f32 %v1144, %v1616
        %v1619 = vmul.f32 %v1145, %v1616
        %v1620 = vmul.f32 %v1146, %v1616
        %v1621 = vmul.f32 %v1147, %v1616
        %v1622 = vmul.f32 %v1148, %v1616
        %v1623 = vmul.f32 %v1149, %v1616
        %v1624 = vmul.f32 %v1150, %v1616
        %v1625 = vmul.f32 %v1151, %v1616
        %v1626 = vmul.f32 %v1152, %v1616
        %v1627 = vmul.f32 %v1153, %v1616
        %v1628 = vmul.f32 %v1154, %v1616
        %v1629 = vmul.f32 %v1155, %v1616
        %v1630 = vmul.f32 %v1156, %v1616
        %v1631 = vmul.f32 %v1157, %v1616
        %v1632 = vmul.f32 %v1158, %v1616
        %v1633 = vadd.f32 %v1597, %v1617
        %v1634 = vadd.f32 %v1598, %v1618
        %v1635 = vadd.f32 %v1599, %v1619
        %v1636 = vadd.f32 %v1600, %v1620
        %v1637 = vadd.f32 %v1601, %v1621
        %v1638 = vadd.f32 %v1602, %v1622
        %v1639 = vadd.f32 %v1603, %v1623
        %v1640 = vadd.f32 %v1604, %v1624
        %v1641 = vadd.f32 %v1605, %v1625
        %v1642 = vadd.f32 %v1606, %v1626
        %v1643 = vadd.f32 %v1607, %v1627
        %v1644 = vadd.f32 %v1608, %v1628
        %v1645 = vadd.f32 %v1609, %v1629
        %v1646 = vadd.f32 %v1610, %v1630
        %v1647 = vadd.f32 %v1611, %v1631
        %v1648 = vadd.f32 %v1612, %v1632
        %v1649 = vlaneseq
        %v1650 = vshrl.u32 %v1649, 7
        %v1651 = vsub.s32 3, %v1650
        %v1652 = vrot.slane %v1044, %v1651
        %v1653 = vmul.f32 %v1163, %v1652
        %v1654 = vmul.f32 %v1164, %v1652
        %v1655 = vmul.f32 %v1165, %v1652
        %v1656 = vmul.f32 %v1166, %v1652
        %v1657 = vmul.f32 %v1167, %v1652
        %v1658 = vmul.f32 %v1168, %v1652
        %v1659 = vmul.f32 %v1169, %v1652
        %v1660 = vmul.f32 %v1170, %v1652
        %v1661 = vmul.f32 %v1171, %v1652
        %v1662 = vmul.f32 %v1172, %v1652
        %v1663 = vmul.f32 %v1173, %v1652
        %v1664 = vmul.f32 %v1174, %v1652
        %v1665 = vmul.f32 %v1175, %v1652
        %v1666 = vmul.f32 %v1176, %v1652
        %v1667 = vmul.f32 %v1177, %v1652
        %v1668 = vmul.f32 %v1178, %v1652
        %v1669 = vadd.f32 %v1633, %v1653
        %v1670 = vadd.f32 %v1634, %v1654
        %v1671 = vadd.f32 %v1635, %v1655
        %v1672 = vadd.f32 %v1636, %v1656
        %v1673 = vadd.f32 %v1637, %v1657
        %v1674 = vadd.f32 %v1638, %v1658
        %v1675 = vadd.f32 %v1639, %v1659
        %v1676 = vadd.f32 %v1640, %v1660
        %v1677 = vadd.f32 %v1641, %v1661
        %v1678 = vadd.f32 %v1642, %v1662
        %v1679 = vadd.f32 %v1643, %v1663
        %v1680 = vadd.f32 %v1644, %v1664
        %v1681 = vadd.f32 %v1645, %v1665
        %v1682 = vadd.f32 %v1646, %v1666
        %v1683 = vadd.f32 %v1647, %v1667
        %v1684 = vadd.f32 %v1648, %v1668
        %v1685 = vlaneseq
        %v1686 = vshrl.u32 %v1685, 7
        %v1687 = vsub.s32 4, %v1686
        %v1688 = vrot.slane %v1044, %v1687
        %v1689 = vmul.f32 %v1183, %v1688
        %v1690 = vmul.f32 %v1184, %v1688
        %v1691 = vmul.f32 %v1185, %v1688
        %v1692 = vmul.f32 %v1186, %v1688
        %v1693 = vmul.f32 %v1187, %v1688
        %v1694 = vmul.f32 %v1188, %v1688
        %v1695 = vmul.f32 %v1189, %v1688
        %v1696 = vmul.f32 %v1190, %v1688
        %v1697 = vmul.f32 %v1191, %v1688
        %v1698 = vmul.f32 %v1192, %v1688
        %v1699 = vmul.f32 %v1193, %v1688
        %v1700 = vmul.f32 %v1194, %v1688
        %v1701 = vmul.f32 %v1195, %v1688
        %v1702 = vmul.f32 %v1196, %v1688
        %v1703 = vmul.f32 %v1197, %v1688
        %v1704 = vmul.f32 %v1198, %v1688
        %v1705 = vadd.f32 %v1669, %v1689
        %v1706 = vadd.f32 %v1670, %v1690
        %v1707 = vadd.f32 %v1671, %v1691
        %v1708 = vadd.f32 %v1672, %v1692
        %v1709 = vadd.f32 %v1673, %v1693
        %v1710 = vadd.f32 %v1674, %v1694
        %v1711 = vadd.f32 %v1675, %v1695
        %v1712 = vadd.f32 %v1676, %v1696
        %v1713 = vadd.f32 %v1677, %v1697
        %v1714 = vadd.f32 %v1678, %v1698
        %v1715 = vadd.f32 %v1679, %v1699
        %v1716 = vadd.f32 %v1680, %v1700
        %v1717 = vadd.f32 %v1681, %v1701
        %v1718 = vadd.f32 %v1682, %v1702
        %v1719 = vadd.f32 %v1683, %v1703
        %v1720 = vadd.f32 %v1684, %v1704
        %v1721 = vlaneseq
        %v1722 = vshrl.u32 %v1721, 7
        %v1723 = vsub.s32 0, %v1722
        %v1724 = vrot.slane %v1045, %v1723
        %v1725 = vmul.f32 %v1104, %v1724
        %v1726 = vmul.f32 %v1105, %v1724
        %v1727 = vmul.f32 %v1106, %v1724
        %v1728 = vmul.f32 %v1107, %v1724
        %v1729 = vmul.f32 %v1108, %v1724
        %v1730 = vmul.f32 %v1109, %v1724
        %v1731 = vmul.f32 %v1110, %v1724
        %v1732 = vmul.f32 %v1111, %v1724
        %v1733 = vmul.f32 %v1112, %v1724
        %v1734 = vmul.f32 %v1113, %v1724
        %v1735 = vmul.f32 %v1114, %v1724
        %v1736 = vmul.f32 %v1115, %v1724
        %v1737 = vmul.f32 %v1116, %v1724
        %v1738 = vmul.f32 %v1117, %v1724
        %v1739 = vmul.f32 %v1118, %v1724
        %v1740 = vmul.f32 %v1119, %v1724
        %v1741 = vadd.f32 %v1705, %v1725
        %v1742 = vadd.f32 %v1706, %v1726
        %v1743 = vadd.f32 %v1707, %v1727
        %v1744 = vadd.f32 %v1708, %v1728
        %v1745 = vadd.f32 %v1709, %v1729
        %v1746 = vadd.f32 %v1710, %v1730
        %v1747 = vadd.f32 %v1711, %v1731
        %v1748 = vadd.f32 %v1712, %v1732
        %v1749 = vadd.f32 %v1713, %v1733
        %v1750 = vadd.f32 %v1714, %v1734
        %v1751 = vadd.f32 %v1715, %v1735
        %v1752 = vadd.f32 %v1716, %v1736
        %v1753 = vadd.f32 %v1717, %v1737
        %v1754 = vadd.f32 %v1718, %v1738
        %v1755 = vadd.f32 %v1719, %v1739
        %v1756 = vadd.f32 %v1720, %v1740
        %v1757 = vlaneseq
        %v1758 = vshrl.u32 %v1757, 7
        %v1759 = vsub.s32 1, %v1758
        %v1760 = vrot.slane %v1045, %v1759
        %v1761 = vmul.f32 %v1124, %v1760
        %v1762 = vmul.f32 %v1125, %v1760
        %v1763 = vmul.f32 %v1126, %v1760
        %v1764 = vmul.f32 %v1127, %v1760
        %v1765 = vmul.f32 %v1128, %v1760
        %v1766 = vmul.f32 %v1129, %v1760
        %v1767 = vmul.f32 %v1130, %v1760
        %v1768 = vmul.f32 %v1131, %v1760
        %v1769 = vmul.f32 %v1132, %v1760
        %v1770 = vmul.f32 %v1133, %v1760
        %v1771 = vmul.f32 %v1134, %v1760
        %v1772 = vmul.f32 %v1135, %v1760
        %v1773 = vmul.f32 %v1136, %v1760
        %v1774 = vmul.f32 %v1137, %v1760
        %v1775 = vmul.f32 %v1138, %v1760
        %v1776 = vmul.f32 %v1139, %v1760
        %v1777 = vadd.f32 %v1741, %v1761
        %v1778 = vadd.f32 %v1742, %v1762
        %v1779 = vadd.f32 %v1743, %v1763
        %v1780 = vadd.f32 %v1744, %v1764
        %v1781 = vadd.f32 %v1745, %v1765
        %v1782 = vadd.f32 %v1746, %v1766
        %v1783 = vadd.f32 %v1747, %v1767
        %v1784 = vadd.f32 %v1748, %v1768
        %v1785 = vadd.f32 %v1749, %v1769
        %v1786 = vadd.f32 %v1750, %v1770
        %v1787 = vadd.f32 %v1751, %v1771
        %v1788 = vadd.f32 %v1752, %v1772
        %v1789 = vadd.f32 %v1753, %v1773
        %v1790 = vadd.f32 %v1754, %v1774
        %v1791 = vadd.f32 %v1755, %v1775
        %v1792 = vadd.f32 %v1756, %v1776
        %v1793 = vlaneseq
        %v1794 = vshrl.u32 %v1793, 7
        %v1795 = vsub.s32 2, %v1794
        %v1796 = vrot.slane %v1045, %v1795
        %v1797 = vmul.f32 %v1144, %v1796
        %v1798 = vmul.f32 %v1145, %v1796
        %v1799 = vmul.f32 %v1146, %v1796
        %v1800 = vmul.f32 %v1147, %v1796
        %v1801 = vmul.f32 %v1148, %v1796
        %v1802 = vmul.f32 %v1149, %v1796
        %v1803 = vmul.f32 %v1150, %v1796
        %v1804 = vmul.f32 %v1151, %v1796
        %v1805 = vmul.f32 %v1152, %v1796
        %v1806 = vmul.f32 %v1153, %v1796
        %v1807 = vmul.f32 %v1154, %v1796
        %v1808 = vmul.f32 %v1155, %v1796
        %v1809 = vmul.f32 %v1156, %v1796
        %v1810 = vmul.f32 %v1157, %v1796
        %v1811 = vmul.f32 %v1158, %v1796
        %v1812 = vmul.f32 %v1159, %v1796
        %v1813 = vadd.f32 %v1777, %v1797
        %v1814 = vadd.f32 %v1778, %v1798
        %v1815 = vadd.f32 %v1779, %v1799
        %v1816 = vadd.f32 %v1780, %v1800
        %v1817 = vadd.f32 %v1781, %v1801
        %v1818 = vadd.f32 %v1782, %v1802
        %v1819 = vadd.f32 %v1783, %v1803
        %v1820 = vadd.f32 %v1784, %v1804
        %v1821 = vadd.f32 %v1785, %v1805
        %v1822 = vadd.f32 %v1786, %v1806
        %v1823 = vadd.f32 %v1787, %v1807
        %v1824 = vadd.f32 %v1788, %v1808
        %v1825 = vadd.f32 %v1789, %v1809
        %v1826 = vadd.f32 %v1790, %v1810
        %v1827 = vadd.f32 %v1791, %v1811
        %v1828 = vadd.f32 %v1792, %v1812
        %v1829 = vlaneseq
        %v1830 = vshrl.u32 %v1829, 7
        %v1831 = vsub.s32 3, %v1830
        %v1832 = vrot.slane %v1045, %v1831
        %v1833 = vmul.f32 %v1164, %v1832
        %v1834 = vmul.f32 %v1165, %v1832
        %v1835 = vmul.f32 %v1166, %v1832
        %v1836 = vmul.f32 %v1167, %v1832
        %v1837 = vmul.f32 %v1168, %v1832
        %v1838 = vmul.f32 %v1169, %v1832
        %v1839 = vmul.f32 %v1170, %v1832
        %v1840 = vmul.f32 %v1171, %v1832
        %v1841 = vmul.f32 %v1172, %v1832
        %v1842 = vmul.f32 %v1173, %v1832
        %v1843 = vmul.f32 %v1174, %v1832
        %v1844 = vmul.f32 %v1175, %v1832
        %v1845 = vmul.f32 %v1176, %v1832
        %v1846 = vmul.f32 %v1177, %v1832
        %v1847 = vmul.f32 %v1178, %v1832
        %v1848 = vmul.f32 %v1179, %v1832
        %v1849 = vadd.f32 %v1813, %v1833
        %v1850 = vadd.f32 %v1814, %v1834
        %v1851 = vadd.f32 %v1815, %v1835
        %v1852 = vadd.f32 %v1816, %v1836
        %v1853 = vadd.f32 %v1817, %v1837
        %v1854 = vadd.f32 %v1818, %v1838
        %v1855 = vadd.f32 %v1819, %v1839
        %v1856 = vadd.f32 %v1820, %v1840
        %v1857 = vadd.f32 %v1821, %v1841
        %v1858 = vadd.f32 %v1822, %v1842
        %v1859 = vadd.f32 %v1823, %v1843
        %v1860 = vadd.f32 %v1824, %v1844
        %v1861 = vadd.f32 %v1825, %v1845
        %v1862 = vadd.f32 %v1826, %v1846
        %v1863 = vadd.f32 %v1827, %v1847
        %v1864 = vadd.f32 %v1828, %v1848
        %v1865 = vlaneseq
        %v1866 = vshrl.u32 %v1865, 7
        %v1867 = vsub.s32 4, %v1866
        %v1868 = vrot.slane %v1045, %v1867
        %v1869 = vmul.f32 %v1184, %v1868
        %v1870 = vmul.f32 %v1185, %v1868
        %v1871 = vmul.f32 %v1186, %v1868
        %v1872 = vmul.f32 %v1187, %v1868
        %v1873 = vmul.f32 %v1188, %v1868
        %v1874 = vmul.f32 %v1189, %v1868
        %v1875 = vmul.f32 %v1190, %v1868
        %v1876 = vmul.f32 %v1191, %v1868
        %v1877 = vmul.f32 %v1192, %v1868
        %v1878 = vmul.f32 %v1193, %v1868
        %v1879 = vmul.f32 %v1194, %v1868
        %v1880 = vmul.f32 %v1195, %v1868
        %v1881 = vmul.f32 %v1196, %v1868
        %v1882 = vmul.f32 %v1197, %v1868
        %v1883 = vmul.f32 %v1198, %v1868
        %v1884 = vmul.f32 %v1199, %v1868
        %v1885 = vadd.f32 %v1849, %v1869
        %v1886 = vadd.f32 %v1850, %v1870
        %v1887 = vadd.f32 %v1851, %v1871
        %v1888 = vadd.f32 %v1852, %v1872
        %v1889 = vadd.f32 %v1853, %v1873
        %v1890 = vadd.f32 %v1854, %v1874
        %v1891 = vadd.f32 %v1855, %v1875
        %v1892 = vadd.f32 %v1856, %v1876
        %v1893 = vadd.f32 %v1857, %v1877
        %v1894 = vadd.f32 %v1858, %v1878
        %v1895 = vadd.f32 %v1859, %v1879
        %v1896 = vadd.f32 %v1860, %v1880
        %v1897 = vadd.f32 %v1861, %v1881
        %v1898 = vadd.f32 %v1862, %v1882
        %v1899 = vadd.f32 %v1863, %v1883
        %v1900 = vadd.f32 %v1864, %v1884
        %v1901 = vlaneseq
        %v1902 = vshrl.u32 %v1901, 7
        %v1903 = vsub.s32 0, %v1902
        %v1904 = vrot.slane %v1046, %v1903
        %v1905 = vmul.f32 %v1105, %v1904
        %v1906 = vmul.f32 %v1106, %v1904
        %v1907 = vmul.f32 %v1107, %v1904
        %v1908 = vmul.f32 %v1108, %v1904
        %v1909 = vmul.f32 %v1109, %v1904
        %v1910 = vmul.f32 %v1110, %v1904
        %v1911 = vmul.f32 %v1111, %v1904
        %v1912 = vmul.f32 %v1112, %v1904
        %v1913 = vmul.f32 %v1113, %v1904
        %v1914 = vmul.f32 %v1114, %v1904
        %v1915 = vmul.f32 %v1115, %v1904
        %v1916 = vmul.f32 %v1116, %v1904
        %v1917 = vmul.f32 %v1117, %v1904
        %v1918 = vmul.f32 %v1118, %v1904
        %v1919 = vmul.f32 %v1119, %v1904
        %v1920 = vmul.f32 %v1120, %v1904
        %v1921 = vadd.f32 %v1885, %v1905
        %v1922 = vadd.f32 %v1886, %v1906
        %v1923 = vadd.f32 %v1887, %v1907
        %v1924 = vadd.f32 %v1888, %v1908
        %v1925 = vadd.f32 %v1889, %v1909
        %v1926 = vadd.f32 %v1890, %v1910
        %v1927 = vadd.f32 %v1891, %v1911
        %v1928 = vadd.f32 %v1892, %v1912
        %v1929 = vadd.f32 %v1893, %v1913
        %v1930 = vadd.f32 %v1894, %v1914
        %v1931 = vadd.f32 %v1895, %v1915
        %v1932 = vadd.f32 %v1896, %v1916
        %v1933 = vadd.f32 %v1897, %v1917
        %v1934 = vadd.f32 %v1898, %v1918
        %v1935 = vadd.f32 %v1899, %v1919
        %v1936 = vadd.f32 %v1900, %v1920
        %v1937 = vlaneseq
        %v1938 = vshrl.u32 %v1937, 7
        %v1939 = vsub.s32 1, %v1938
        %v1940 = vrot.slane %v1046, %v1939
        %v1941 = vmul.f32 %v1125, %v1940
        %v1942 = vmul.f32 %v1126, %v1940
        %v1943 = vmul.f32 %v1127, %v1940
        %v1944 = vmul.f32 %v1128, %v1940
        %v1945 = vmul.f32 %v1129, %v1940
        %v1946 = vmul.f32 %v1130, %v1940
        %v1947 = vmul.f32 %v1131, %v1940
        %v1948 = vmul.f32 %v1132, %v1940
        %v1949 = vmul.f32 %v1133, %v1940
        %v1950 = vmul.f32 %v1134, %v1940
        %v1951 = vmul.f32 %v1135, %v1940
        %v1952 = vmul.f32 %v1136, %v1940
        %v1953 = vmul.f32 %v1137, %v1940
        %v1954 = vmul.f32 %v1138, %v1940
        %v1955 = vmul.f32 %v1139, %v1940
        %v1956 = vmul.f32 %v1140, %v1940
        %v1957 = vadd.f32 %v1921, %v1941
        %v1958 = vadd.f32 %v1922, %v1942
        %v1959 = vadd.f32 %v1923, %v1943
        %v1960 = vadd.f32 %v1924, %v1944
        %v1961 = vadd.f32 %v1925, %v1945
        %v1962 = vadd.f32 %v1926, %v1946
        %v1963 = vadd.f32 %v1927, %v1947
        %v1964 = vadd.f32 %v1928, %v1948
        %v1965 = vadd.f32 %v1929, %v1949
        %v1966 = vadd.f32 %v1930, %v1950
        %v1967 = vadd.f32 %v1931, %v1951
        %v1968 = vadd.f32 %v1932, %v1952
        %v1969 = vadd.f32 %v1933, %v1953
        %v1970 = vadd.f32 %v1934, %v1954
        %v1971 = vadd.f32 %v1935, %v1955
        %v1972 = vadd.f32 %v1936, %v1956
        %v1973 = vlaneseq
        %v1974 = vshrl.u32 %v1973, 7
        %v1975 = vsub.s32 2, %v1974
        %v1976 = vrot.slane %v1046, %v1975
        %v1977 = vmul.f32 %v1145, %v1976
        %v1978 = vmul.f32 %v1146, %v1976
        %v1979 = vmul.f32 %v1147, %v1976
        %v1980 = vmul.f32 %v1148, %v1976
        %v1981 = vmul.f32 %v1149, %v1976
        %v1982 = vmul.f32 %v1150, %v1976
        %v1983 = vmul.f32 %v1151, %v1976
        %v1984 = vmul.f32 %v1152, %v1976
        %v1985 = vmul.f32 %v1153, %v1976
        %v1986 = vmul.f32 %v1154, %v1976
        %v1987 = vmul.f32 %v1155, %v1976
        %v1988 = vmul.f32 %v1156, %v1976
        %v1989 = vmul.f32 %v1157, %v1976
        %v1990 = vmul.f32 %v1158, %v1976
        %v1991 = vmul.f32 %v1159, %v1976
        %v1992 = vmul.f32 %v1160, %v1976
        %v1993 = vadd.f32 %v1957, %v1977
        %v1994 = vadd.f32 %v1958, %v1978
        %v1995 = vadd.f32 %v1959, %v1979
        %v1996 = vadd.f32 %v1960, %v1980
        %v1997 = vadd.f32 %v1961, %v1981
        %v1998 = vadd.f32 %v1962, %v1982
        %v1999 = vadd.f32 %v1963, %v1983
        %v2000 = vadd.f32 %v1964, %v1984
        %v2001 = vadd.f32 %v1965, %v1985
        %v2002 = vadd.f32 %v1966, %v1986
        %v2003 = vadd.f32 %v1967, %v1987
        %v2004 = vadd.f32 %v1968, %v1988
        %v2005 = vadd.f32 %v1969, %v1989
        %v2006 = vadd.f32 %v1970, %v1990
        %v2007 = vadd.f32 %v1971, %v1991
        %v2008 = vadd.f32 %v1972, %v1992
        %v2009 = vlaneseq
        %v2010 = vshrl.u32 %v2009, 7
        %v2011 = vsub.s32 3, %v2010
        %v2012 = vrot.slane %v1046, %v2011
        %v2013 = vmul.f32 %v1165, %v2012
        %v2014 = vmul.f32 %v1166, %v2012
        %v2015 = vmul.f32 %v1167, %v2012
        %v2016 = vmul.f32 %v1168, %v2012
        %v2017 = vmul.f32 %v1169, %v2012
        %v2018 = vmul.f32 %v1170, %v2012
        %v2019 = vmul.f32 %v1171, %v2012
        %v2020 = vmul.f32 %v1172, %v2012
        %v2021 = vmul.f32 %v1173, %v2012
        %v2022 = vmul.f32 %v1174, %v2012
        %v2023 = vmul.f32 %v1175, %v2012
        %v2024 = vmul.f32 %v1176, %v2012
        %v2025 = vmul.f32 %v1177, %v2012
        %v2026 = vmul.f32 %v1178, %v2012
        %v2027 = vmul.f32 %v1179, %v2012
        %v2028 = vmul.f32 %v1180, %v2012
        %v2029 = vadd.f32 %v1993, %v2013
        %v2030 = vadd.f32 %v1994, %v2014
        %v2031 = vadd.f32 %v1995, %v2015
        %v2032 = vadd.f32 %v1996, %v2016
        %v2033 = vadd.f32 %v1997, %v2017
        %v2034 = vadd.f32 %v1998, %v2018
        %v2035 = vadd.f32 %v1999, %v2019
        %v2036 = vadd.f32 %v2000, %v2020
        %v2037 = vadd.f32 %v2001, %v2021
        %v2038 = vadd.f32 %v2002, %v2022
        %v2039 = vadd.f32 %v2003, %v2023
        %v2040 = vadd.f32 %v2004, %v2024
        %v2041 = vadd.f32 %v2005, %v2025
        %v2042 = vadd.f32 %v2006, %v2026
        %v2043 = vadd.f32 %v2007, %v2027
        %v2044 = vadd.f32 %v2008, %v2028
        %v2045 = vlaneseq
        %v2046 = vshrl.u32 %v2045, 7
        %v2047 = vsub.s32 4, %v2046
        %v2048 = vrot.slane %v1046, %v2047
        %v2049 = vmul.f32 %v1185, %v2048
        %v2050 = vmul.f32 %v1186, %v2048
        %v2051 = vmul.f32 %v1187, %v2048
        %v2052 = vmul.f32 %v1188, %v2048
        %v2053 = vmul.f32 %v1189, %v2048
        %v2054 = vmul.f32 %v1190, %v2048
        %v2055 = vmul.f32 %v1191, %v2048
        %v2056 = vmul.f32 %v1192, %v2048
        %v2057 = vmul.f32 %v1193, %v2048
        %v2058 = vmul.f32 %v1194, %v2048
        %v2059 = vmul.f32 %v1195, %v2048
        %v2060 = vmul.f32 %v1196, %v2048
        %v2061 = vmul.f32 %v1197, %v2048
        %v2062 = vmul.f32 %v1198, %v2048
        %v2063 = vmul.f32 %v1199, %v2048
        %v2064 = vmul.f32 %v1200, %v2048
        %v2065 = vadd.f32 %v2029, %v2049
        %v2066 = vadd.f32 %v2030, %v2050
        %v2067 = vadd.f32 %v2031, %v2051
        %v2068 = vadd.f32 %v2032, %v2052
        %v2069 = vadd.f32 %v2033, %v2053
        %v2070 = vadd.f32 %v2034, %v2054
        %v2071 = vadd.f32 %v2035, %v2055
        %v2072 = vadd.f32 %v2036, %v2056
        %v2073 = vadd.f32 %v2037, %v2057
        %v2074 = vadd.f32 %v2038, %v2058
        %v2075 = vadd.f32 %v2039, %v2059
        %v2076 = vadd.f32 %v2040, %v2060
        %v2077 = vadd.f32 %v2041, %v2061
        %v2078 = vadd.f32 %v2042, %v2062
        %v2079 = vadd.f32 %v2043, %v2063
        %v2080 = vadd.f32 %v2044, %v2064
        %v2081 = vlaneseq
        %v2082 = vshrl.u32 %v2081, 7
        %v2083 = vsub.s32 0, %v2082
        %v2084 = vrot.slane %v1047, %v2083
        %v2085 = vmul.f32 %v1106, %v2084
        %v2086 = vmul.f32 %v1107, %v2084
        %v2087 = vmul.f32 %v1108, %v2084
        %v2088 = vmul.f32 %v1109, %v2084
        %v2089 = vmul.f32 %v1110, %v2084
        %v2090 = vmul.f32 %v1111, %v2084
        %v2091 = vmul.f32 %v1112, %v2084
        %v2092 = vmul.f32 %v1113, %v2084
        %v2093 = vmul.f32 %v1114, %v2084
        %v2094 = vmul.f32 %v1115, %v2084
        %v2095 = vmul.f32 %v1116, %v2084
        %v2096 = vmul.f32 %v1117, %v2084
        %v2097 = vmul.f32 %v1118, %v2084
        %v2098 = vmul.f32 %v1119, %v2084
        %v2099 = vmul.f32 %v1120, %v2084
        %v2100 = vmul.f32 %v1121, %v2084
        %v2101 = vadd.f32 %v2065, %v2085
        %v2102 = vadd.f32 %v2066, %v2086
        %v2103 = vadd.f32 %v2067, %v2087
        %v2104 = vadd.f32 %v2068, %v2088
        %v2105 = vadd.f32 %v2069, %v2089
        %v2106 = vadd.f32 %v2070, %v2090
        %v2107 = vadd.f32 %v2071, %v2091
        %v2108 = vadd.f32 %v2072, %v2092
        %v2109 = vadd.f32 %v2073, %v2093
        %v2110 = vadd.f32 %v2074, %v2094
        %v2111 = vadd.f32 %v2075, %v2095
        %v2112 = vadd.f32 %v2076, %v2096
        %v2113 = vadd.f32 %v2077, %v2097
        %v2114 = vadd.f32 %v2078, %v2098
        %v2115 = vadd.f32 %v2079, %v2099
        %v2116 = vadd.f32 %v2080, %v2100
        %v2117 = vlaneseq
        %v2118 = vshrl.u32 %v2117, 7
        %v2119 = vsub.s32 1, %v2118
        %v2120 = vrot.slane %v1047, %v2119
        %v2121 = vmul.f32 %v1126, %v2120
        %v2122 = vmul.f32 %v1127, %v2120
        %v2123 = vmul.f32 %v1128, %v2120
        %v2124 = vmul.f32 %v1129, %v2120
        %v2125 = vmul.f32 %v1130, %v2120
        %v2126 = vmul.f32 %v1131, %v2120
        %v2127 = vmul.f32 %v1132, %v2120
        %v2128 = vmul.f32 %v1133, %v2120
        %v2129 = vmul.f32 %v1134, %v2120
        %v2130 = vmul.f32 %v1135, %v2120
        %v2131 = vmul.f32 %v1136, %v2120
        %v2132 = vmul.f32 %v1137, %v2120
        %v2133 = vmul.f32 %v1138, %v2120
        %v2134 = vmul.f32 %v1139, %v2120
        %v2135 = vmul.f32 %v1140, %v2120
        %v2136 = vmul.f32 %v1141, %v2120
        %v2137 = vadd.f32 %v2101, %v2121
        %v2138 = vadd.f32 %v2102, %v2122
        %v2139 = vadd.f32 %v2103, %v2123
        %v2140 = vadd.f32 %v2104, %v2124
        %v2141 = vadd.f32 %v2105, %v2125
        %v2142 = vadd.f32 %v2106, %v2126
        %v2143 = vadd.f32 %v2107, %v2127
        %v2144 = vadd.f32 %v2108, %v2128
        %v2145 = vadd.f32 %v2109, %v2129
        %v2146 = vadd.f32 %v2110, %v2130
        %v2147 = vadd.f32 %v2111, %v2131
        %v2148 = vadd.f32 %v2112, %v2132
        %v2149 = vadd.f32 %v2113, %v2133
        %v2150 = vadd.f32 %v2114, %v2134
        %v2151 = vadd.f32 %v2115, %v2135
        %v2152 = vadd.f32 %v2116, %v2136
        %v2153 = vlaneseq
        %v2154 = vshrl.u32 %v2153, 7
        %v2155 = vsub.s32 2, %v2154
        %v2156 = vrot.slane %v1047, %v2155
        %v2157 = vmul.f32 %v1146, %v2156
        %v2158 = vmul.f32 %v1147, %v2156
        %v2159 = vmul.f32 %v1148, %v2156
        %v2160 = vmul.f32 %v1149, %v2156
        %v2161 = vmul.f32 %v1150, %v2156
        %v2162 = vmul.f32 %v1151, %v2156
        %v2163 = vmul.f32 %v1152, %v2156
        %v2164 = vmul.f32 %v1153, %v2156
        %v2165 = vmul.f32 %v1154, %v2156
        %v2166 = vmul.f32 %v1155, %v2156
        %v2167 = vmul.f32 %v1156, %v2156
        %v2168 = vmul.f32 %v1157, %v2156
        %v2169 = vmul.f32 %v1158, %v2156
        %v2170 = vmul.f32 %v1159, %v2156
        %v2171 = vmul.f32 %v1160, %v2156
        %v2172 = vmul.f32 %v1161, %v2156
        %v2173 = vadd.f32 %v2137, %v2157
        %v2174 = vadd.f32 %v2138, %v2158
        %v2175 = vadd.f32 %v2139, %v2159
        %v2176 = vadd.f32 %v2140, %v2160
        %v2177 = vadd.f32 %v2141, %v2161
        %v2178 = vadd.f32 %v2142, %v2162
        %v2179 = vadd.f32 %v2143, %v2163
        %v2180 = vadd.f32 %v2144, %v2164
        %v2181 = vadd.f32 %v2145, %v2165
        %v2182 = vadd.f32 %v2146, %v2166
        %v2183 = vadd.f32 %v2147, %v2167
        %v2184 = vadd.f32 %v2148, %v2168
        %v2185 = vadd.f32 %v2149, %v2169
        %v2186 = vadd.f32 %v2150, %v2170
        %v2187 = vadd.f32 %v2151, %v2171
        %v2188 = vadd.f32 %v2152, %v2172
        %v2189 = vlaneseq
        %v2190 = vshrl.u32 %v2189, 7
        %v2191 = vsub.s32 3, %v2190
        %v2192 = vrot.slane %v1047, %v2191
        %v2193 = vmul.f32 %v1166, %v2192
        %v2194 = vmul.f32 %v1167, %v2192
        %v2195 = vmul.f32 %v1168, %v2192
        %v2196 = vmul.f32 %v1169, %v2192
        %v2197 = vmul.f32 %v1170, %v2192
        %v2198 = vmul.f32 %v1171, %v2192
        %v2199 = vmul.f32 %v1172, %v2192
        %v2200 = vmul.f32 %v1173, %v2192
        %v2201 = vmul.f32 %v1174, %v2192
        %v2202 = vmul.f32 %v1175, %v2192
        %v2203 = vmul.f32 %v1176, %v2192
        %v2204 = vmul.f32 %v1177, %v2192
        %v2205 = vmul.f32 %v1178, %v2192
        %v2206 = vmul.f32 %v1179, %v2192
        %v2207 = vmul.f32 %v1180, %v2192
        %v2208 = vmul.f32 %v1181, %v2192
        %v2209 = vadd.f32 %v2173, %v2193
        %v2210 = vadd.f32 %v2174, %v2194
        %v2211 = vadd.f32 %v2175, %v2195
        %v2212 = vadd.f32 %v2176, %v2196
        %v2213 = vadd.f32 %v2177, %v2197
        %v2214 = vadd.f32 %v2178, %v2198
        %v2215 = vadd.f32 %v2179, %v2199
        %v2216 = vadd.f32 %v2180, %v2200
        %v2217 = vadd.f32 %v2181, %v2201
        %v2218 = vadd.f32 %v2182, %v2202
        %v2219 = vadd.f32 %v2183, %v2203
        %v2220 = vadd.f32 %v2184, %v2204
        %v2221 = vadd.f32 %v2185, %v2205
        %v2222 = vadd.f32 %v2186, %v2206
        %v2223 = vadd.f32 %v2187, %v2207
        %v2224 = vadd.f32 %v2188, %v2208
        %v2225 = vlaneseq
        %v2226 = vshrl.u32 %v2225, 7
        %v2227 = vsub.s32 4, %v2226
        %v2228 = vrot.slane %v1047, %v2227
        %v2229 = vmul.f32 %v1186, %v2228
        %v2230 = vmul.f32 %v1187, %v2228
        %v2231 = vmul.f32 %v1188, %v2228
        %v2232 = vmul.f32 %v1189, %v2228
        %v2233 = vmul.f32 %v1190, %v2228
        %v2234 = vmul.f32 %v1191, %v2228
        %v2235 = vmul.f32 %v1192, %v2228
        %v2236 = vmul.f32 %v1193, %v2228
        %v2237 = vmul.f32 %v1194, %v2228
        %v2238 = vmul.f32 %v1195, %v2228
        %v2239 = vmul.f32 %v1196, %v2228
        %v2240 = vmul.f32 %v1197, %v2228
        %v2241 = vmul.f32 %v1198, %v2228
        %v2242 = vmul.f32 %v1199, %v2228
        %v2243 = vmul.f32 %v1200, %v2228
        %v2244 = vmul.f32 %v1201, %v2228
        %v2245 = vadd.f32 %v2209, %v2229
        %v2246 = vadd.f32 %v2210, %v2230
        %v2247 = vadd.f32 %v2211, %v2231
        %v2248 = vadd.f32 %v2212, %v2232
        %v2249 = vadd.f32 %v2213, %v2233
        %v2250 = vadd.f32 %v2214, %v2234
        %v2251 = vadd.f32 %v2215, %v2235
        %v2252 = vadd.f32 %v2216, %v2236
        %v2253 = vadd.f32 %v2217, %v2237
        %v2254 = vadd.f32 %v2218, %v2238
        %v2255 = vadd.f32 %v2219, %v2239
        %v2256 = vadd.f32 %v2220, %v2240
        %v2257 = vadd.f32 %v2221, %v2241
        %v2258 = vadd.f32 %v2222, %v2242
        %v2259 = vadd.f32 %v2223, %v2243
        %v2260 = vadd.f32 %v2224, %v2244
        %v2261 = vlaneseq
        %v2262 = vshrl.u32 %v2261, 7
        %v2263 = vsub.s32 0, %v2262
        %v2264 = vrot.slane %v1048, %v2263
        %v2265 = vmul.f32 %v1107, %v2264
        %v2266 = vmul.f32 %v1108, %v2264
        %v2267 = vmul.f32 %v1109, %v2264
        %v2268 = vmul.f32 %v1110, %v2264
        %v2269 = vmul.f32 %v1111, %v2264
        %v2270 = vmul.f32 %v1112, %v2264
        %v2271 = vmul.f32 %v1113, %v2264
        %v2272 = vmul.f32 %v1114, %v2264
        %v2273 = vmul.f32 %v1115, %v2264
        %v2274 = vmul.f32 %v1116, %v2264
        %v2275 = vmul.f32 %v1117, %v2264
        %v2276 = vmul.f32 %v1118, %v2264
        %v2277 = vmul.f32 %v1119, %v2264
        %v2278 = vmul.f32 %v1120, %v2264
        %v2279 = vmul.f32 %v1121, %v2264
        %v2280 = vmul.f32 %v1122, %v2264
        %v2281 = vadd.f32 %v2245, %v2265
        %v2282 = vadd.f32 %v2246, %v2266
        %v2283 = vadd.f32 %v2247, %v2267
        %v2284 = vadd.f32 %v2248, %v2268
        %v2285 = vadd.f32 %v2249, %v2269
        %v2286 = vadd.f32 %v2250, %v2270
        %v2287 = vadd.f32 %v2251, %v2271
        %v2288 = vadd.f32 %v2252, %v2272
        %v2289 = vadd.f32 %v2253, %v2273
        %v2290 = vadd.f32 %v2254, %v2274
        %v2291 = vadd.f32 %v2255, %v2275
        %v2292 = vadd.f32 %v2256, %v2276
        %v2293 = vadd.f32 %v2257, %v2277
        %v2294 = vadd.f32 %v2258, %v2278
        %v2295 = vadd.f32 %v2259, %v2279
        %v2296 = vadd.f32 %v2260, %v2280
        %v2297 = vlaneseq
        %v2298 = vshrl.u32 %v2297, 7
        %v2299 = vsub.s32 1, %v2298
        %v2300 = vrot.slane %v1048, %v2299
        %v2301 = vmul.f32 %v1127, %v2300
        %v2302 = vmul.f32 %v1128, %v2300
        %v2303 = vmul.f32 %v1129, %v2300
        %v2304 = vmul.f32 %v1130, %v2300
        %v2305 = vmul.f32 %v1131, %v2300
        %v2306 = vmul.f32 %v1132, %v2300
        %v2307 = vmul.f32 %v1133, %v2300
        %v2308 = vmul.f32 %v1134, %v2300
        %v2309 = vmul.f32 %v1135, %v2300
        %v2310 = vmul.f32 %v1136, %v2300
        %v2311 = vmul.f32 %v1137, %v2300
        %v2312 = vmul.f32 %v1138, %v2300
        %v2313 = vmul.f32 %v1139, %v2300
        %v2314 = vmul.f32 %v1140, %v2300
        %v2315 = vmul.f32 %v1141, %v2300
        %v2316 = vmul.f32 %v1142, %v2300
        %v2317 = vadd.f32 %v2281, %v2301
        %v2318 = vadd.f32 %v2282, %v2302
        %v2319 = vadd.f32 %v2283, %v2303
        %v2320 = vadd.f32 %v2284, %v2304
        %v2321 = vadd.f32 %v2285, %v2305
        %v2322 = vadd.f32 %v2286, %v2306
        %v2323 = vadd.f32 %v2287, %v2307
        %v2324 = vadd.f32 %v2288, %v2308
        %v2325 = vadd.f32 %v2289, %v2309
        %v2326 = vadd.f32 %v2290, %v2310
        %v2327 = vadd.f32 %v2291, %v2311
        %v2328 = vadd.f32 %v2292, %v2312
        %v2329 = vadd.f32 %v2293, %v2313
        %v2330 = vadd.f32 %v2294, %v2314
        %v2331 = vadd.f32 %v2295, %v2315
        %v2332 = vadd.f32 %v2296, %v2316
        %v2333 = vlaneseq
        %v2334 = vshrl.u32 %v2333, 7
        %v2335 = vsub.s32 2, %v2334
        %v2336 = vrot.slane %v1048, %v2335
        %v2337 = vmul.f32 %v1147, %v2336
        %v2338 = vmul.f32 %v1148, %v2336
        %v2339 = vmul.f32 %v1149, %v2336
        %v2340 = vmul.f32 %v1150, %v2336
        %v2341 = vmul.f32 %v1151, %v2336
        %v2342 = vmul.f32 %v1152, %v2336
        %v2343 = vmul.f32 %v1153, %v2336
        %v2344 = vmul.f32 %v1154, %v2336
        %v2345 = vmul.f32 %v1155, %v2336
        %v2346 = vmul.f32 %v1156, %v2336
        %v2347 = vmul.f32 %v1157, %v2336
        %v2348 = vmul.f32 %v1158, %v2336
        %v2349 = vmul.f32 %v1159, %v2336
        %v2350 = vmul.f32 %v1160, %v2336
        %v2351 = vmul.f32 %v1161, %v2336
        %v2352 = vmul.f32 %v1162, %v2336
        %v2353 = vadd.f32 %v2317, %v2337
        %v2354 = vadd.f32 %v2318, %v2338
        %v2355 = vadd.f32 %v2319, %v2339
        %v2356 = vadd.f32 %v2320, %v2340
        %v2357 = vadd.f32 %v2321, %v2341
        %v2358 = vadd.f32 %v2322, %v2342
        %v2359 = vadd.f32 %v2323, %v2343
        %v2360 = vadd.f32 %v2324, %v2344
        %v2361 = vadd.f32 %v2325, %v2345
        %v2362 = vadd.f32 %v2326, %v2346
        %v2363 = vadd.f32 %v2327, %v2347
        %v2364 = vadd.f32 %v2328, %v2348
        %v2365 = vadd.f32 %v2329, %v2349
        %v2366 = vadd.f32 %v2330, %v2350
        %v2367 = vadd.f32 %v2331, %v2351
        %v2368 = vadd.f32 %v2332, %v2352
        %v2369 = vlaneseq
        %v2370 = vshrl.u32 %v2369, 7
        %v2371 = vsub.s32 3, %v2370
        %v2372 = vrot.slane %v1048, %v2371
        %v2373 = vmul.f32 %v1167, %v2372
        %v2374 = vmul.f32 %v1168, %v2372
        %v2375 = vmul.f32 %v1169, %v2372
        %v2376 = vmul.f32 %v1170, %v2372
        %v2377 = vmul.f32 %v1171, %v2372
        %v2378 = vmul.f32 %v1172, %v2372
        %v2379 = vmul.f32 %v1173, %v2372
        %v2380 = vmul.f32 %v1174, %v2372
        %v2381 = vmul.f32 %v1175, %v2372
        %v2382 = vmul.f32 %v1176, %v2372
        %v2383 = vmul.f32 %v1177, %v2372
        %v2384 = vmul.f32 %v1178, %v2372
        %v2385 = vmul.f32 %v1179, %v2372
        %v2386 = vmul.f32 %v1180, %v2372
        %v2387 = vmul.f32 %v1181, %v2372
        %v2388 = vmul.f32 %v1182, %v2372
        %v2389 = vadd.f32 %v2353, %v2373
        %v2390 = vadd.f32 %v2354, %v2374
        %v2391 = vadd.f32 %v2355, %v2375
        %v2392 = vadd.f32 %v2356, %v2376
        %v2393 = vadd.f32 %v2357, %v2377
        %v2394 = vadd.f32 %v2358, %v2378
        %v2395 = vadd.f32 %v2359, %v2379
        %v2396 = vadd.f32 %v2360, %v2380
        %v2397 = vadd.f32 %v2361, %v2381
        %v2398 = vadd.f32 %v2362, %v2382
        %v2399 = vadd.f32 %v2363, %v2383
        %v2400 = vadd.f32 %v2364, %v2384
        %v2401 = vadd.f32 %v2365, %v2385
        %v2402 = vadd.f32 %v2366, %v2386
        %v2403 = vadd.f32 %v2367, %v2387
        %v2404 = vadd.f32 %v2368, %v2388
        %v2405 = vlaneseq
        %v2406 = vshrl.u32 %v2405, 7
        %v2407 = vsub.s32 4, %v2406
        %v2408 = vrot.slane %v1048, %v2407
        %v2409 = vmul.f32 %v1187, %v2408
        %v2410 = vmul.f32 %v1188, %v2408
        %v2411 = vmul.f32 %v1189, %v2408
        %v2412 = vmul.f32 %v1190, %v2408
        %v2413 = vmul.f32 %v1191, %v2408
        %v2414 = vmul.f32 %v1192, %v2408
        %v2415 = vmul.f32 %v1193, %v2408
        %v2416 = vmul.f32 %v1194, %v2408
        %v2417 = vmul.f32 %v1195, %v2408
        %v2418 = vmul.f32 %v1196, %v2408
        %v2419 = vmul.f32 %v1197, %v2408
        %v2420 = vmul.f32 %v1198, %v2408
        %v2421 = vmul.f32 %v1199, %v2408
        %v2422 = vmul.f32 %v1200, %v2408
        %v2423 = vmul.f32 %v1201, %v2408
        %v2424 = vmul.f32 %v1202, %v2408
        %v2425 = vadd.f32 %v2389, %v2409
        %v2426 = vadd.f32 %v2390, %v2410
        %v2427 = vadd.f32 %v2391, %v2411
        %v2428 = vadd.f32 %v2392, %v2412
        %v2429 = vadd.f32 %v2393, %v2413
        %v2430 = vadd.f32 %v2394, %v2414
        %v2431 = vadd.f32 %v2395, %v2415
        %v2432 = vadd.f32 %v2396, %v2416
        %v2433 = vadd.f32 %v2397, %v2417
        %v2434 = vadd.f32 %v2398, %v2418
        %v2435 = vadd.f32 %v2399, %v2419
        %v2436 = vadd.f32 %v2400, %v2420
        %v2437 = vadd.f32 %v2401, %v2421
        %v2438 = vadd.f32 %v2402, %v2422
        %v2439 = vadd.f32 %v2403, %v2423
        %v2440 = vadd.f32 %v2404, %v2424
        %v2441 = vmul.f32 %v1518, %v1518
        %v2442 = vmul.f32 %v1519, %v1519
        %v2443 = vmul.f32 %v1520, %v1520
        %v2444 = vmul.f32 %v1521, %v1521
        %v2445 = vmul.f32 %v1522, %v1522
        %v2446 = vmul.f32 %v1523, %v1523
        %v2447 = vmul.f32 %v1524, %v1524
        %v2448 = vmul.f32 %v1525, %v1525
        %v2449 = vmul.f32 %v1526, %v1526
        %v2450 = vmul.f32 %v1527, %v1527
        %v2451 = vmul.f32 %v1528, %v1528
        %v2452 = vmul.f32 %v1529, %v1529
        %v2453 = vmul.f32 %v1530, %v1530
        %v2454 = vmul.f32 %v1531, %v1531
        %v2455 = vmul.f32 %v1532, %v1532
        %v2456 = vmul.f32 %v1533, %v1533
        %v2457 = vmul.f32 %v1518, %v2441
        %v2458 = vmul.f32 %v1519, %v2442
        %v2459 = vmul.f32 %v1520, %v2443
        %v2460 = vmul.f32 %v1521, %v2444
        %v2461 = vmul.f32 %v1522, %v2445
        %v2462 = vmul.f32 %v1523, %v2446
        %v2463 = vmul.f32 %v1524, %v2447
        %v2464 = vmul.f32 %v1525, %v2448
        %v2465 = vmul.f32 %v1526, %v2449
        %v2466 = vmul.f32 %v1527, %v2450
        %v2467 = vmul.f32 %v1528, %v2451
        %v2468 = vmul.f32 %v1529, %v2452
        %v2469 = vmul.f32 %v1530, %v2453
        %v2470 = vmul.f32 %v1531, %v2454
        %v2471 = vmul.f32 %v1532, %v2455
        %v2472 = vmul.f32 %v1533, %v2456
        %v2473 = vmul.f32 %v2457, 0.044715
        %v2474 = vmul.f32 %v2458, 0.044715
        %v2475 = vmul.f32 %v2459, 0.044715
        %v2476 = vmul.f32 %v2460, 0.044715
        %v2477 = vmul.f32 %v2461, 0.044715
        %v2478 = vmul.f32 %v2462, 0.044715
        %v2479 = vmul.f32 %v2463, 0.044715
        %v2480 = vmul.f32 %v2464, 0.044715
        %v2481 = vmul.f32 %v2465, 0.044715
        %v2482 = vmul.f32 %v2466, 0.044715
        %v2483 = vmul.f32 %v2467, 0.044715
        %v2484 = vmul.f32 %v2468, 0.044715
        %v2485 = vmul.f32 %v2469, 0.044715
        %v2486 = vmul.f32 %v2470, 0.044715
        %v2487 = vmul.f32 %v2471, 0.044715
        %v2488 = vmul.f32 %v2472, 0.044715
        %v2489 = vadd.f32 %v1518, %v2473
        %v2490 = vadd.f32 %v1519, %v2474
        %v2491 = vadd.f32 %v1520, %v2475
        %v2492 = vadd.f32 %v1521, %v2476
        %v2493 = vadd.f32 %v1522, %v2477
        %v2494 = vadd.f32 %v1523, %v2478
        %v2495 = vadd.f32 %v1524, %v2479
        %v2496 = vadd.f32 %v1525, %v2480
        %v2497 = vadd.f32 %v1526, %v2481
        %v2498 = vadd.f32 %v1527, %v2482
        %v2499 = vadd.f32 %v1528, %v2483
        %v2500 = vadd.f32 %v1529, %v2484
        %v2501 = vadd.f32 %v1530, %v2485
        %v2502 = vadd.f32 %v1531, %v2486
        %v2503 = vadd.f32 %v1532, %v2487
        %v2504 = vadd.f32 %v1533, %v2488
        %v2505 = vmul.f32 %v2489, 0.7978846
        %v2506 = vmul.f32 %v2490, 0.7978846
        %v2507 = vmul.f32 %v2491, 0.7978846
        %v2508 = vmul.f32 %v2492, 0.7978846
        %v2509 = vmul.f32 %v2493, 0.7978846
        %v2510 = vmul.f32 %v2494, 0.7978846
        %v2511 = vmul.f32 %v2495, 0.7978846
        %v2512 = vmul.f32 %v2496, 0.7978846
        %v2513 = vmul.f32 %v2497, 0.7978846
        %v2514 = vmul.f32 %v2498, 0.7978846
        %v2515 = vmul.f32 %v2499, 0.7978846
        %v2516 = vmul.f32 %v2500, 0.7978846
        %v2517 = vmul.f32 %v2501, 0.7978846
        %v2518 = vmul.f32 %v2502, 0.7978846
        %v2519 = vmul.f32 %v2503, 0.7978846
        %v2520 = vmul.f32 %v2504, 0.7978846
        %v2521 = vtanh.pop %v2505
        %v2522 = vtanh.pop %v2506
        %v2523 = vtanh.pop %v2507
        %v2524 = vtanh.pop %v2508
        %v2525 = vtanh.pop %v2509
        %v2526 = vtanh.pop %v2510
        %v2527 = vtanh.pop %v2511
        %v2528 = vtanh.pop %v2512
        %v2529 = vtanh.pop %v2513
        %v2530 = vtanh.pop %v2514
        %v2531 = vtanh.pop %v2515
        %v2532 = vtanh.pop %v2516
        %v2533 = vtanh.pop %v2517
        %v2534 = vtanh.pop %v2518
        %v2535 = vtanh.pop %v2519
        %v2536 = vtanh.pop %v2520
        %v2537 = vadd.f32 %v2521, 1.0
        %v2538 = vadd.f32 %v2522, 1.0
        %v2539 = vadd.f32 %v2523, 1.0
        %v2540 = vadd.f32 %v2524, 1.0
        %v2541 = vadd.f32 %v2525, 1.0
        %v2542 = vadd.f32 %v2526, 1.0
        %v2543 = vadd.f32 %v2527, 1.0
        %v2544 = vadd.f32 %v2528, 1.0
        %v2545 = vadd.f32 %v2529, 1.0
        %v2546 = vadd.f32 %v2530, 1.0
        %v2547 = vadd.f32 %v2531, 1.0
        %v2548 = vadd.f32 %v2532, 1.0
        %v2549 = vadd.f32 %v2533, 1.0
        %v2550 = vadd.f32 %v2534, 1.0
        %v2551 = vadd.f32 %v2535, 1.0
        %v2552 = vadd.f32 %v2536, 1.0
        %v2553 = vmul.f32 %v2537, 0.5
        %v2554 = vmul.f32 %v2538, 0.5
        %v2555 = vmul.f32 %v2539, 0.5
        %v2556 = vmul.f32 %v2540, 0.5
        %v2557 = vmul.f32 %v2541, 0.5
        %v2558 = vmul.f32 %v2542, 0.5
        %v2559 = vmul.f32 %v2543, 0.5
        %v2560 = vmul.f32 %v2544, 0.5
        %v2561 = vmul.f32 %v2545, 0.5
        %v2562 = vmul.f32 %v2546, 0.5
        %v2563 = vmul.f32 %v2547, 0.5
        %v2564 = vmul.f32 %v2548, 0.5
        %v2565 = vmul.f32 %v2549, 0.5
        %v2566 = vmul.f32 %v2550, 0.5
        %v2567 = vmul.f32 %v2551, 0.5
        %v2568 = vmul.f32 %v2552, 0.5
        %v2569 = vmul.f32 %v1518, %v2553
        %v2570 = vmul.f32 %v1519, %v2554
        %v2571 = vmul.f32 %v1520, %v2555
        %v2572 = vmul.f32 %v1521, %v2556
        %v2573 = vmul.f32 %v1522, %v2557
        %v2574 = vmul.f32 %v1523, %v2558
        %v2575 = vmul.f32 %v1524, %v2559
        %v2576 = vmul.f32 %v1525, %v2560
        %v2577 = vmul.f32 %v1526, %v2561
        %v2578 = vmul.f32 %v1527, %v2562
        %v2579 = vmul.f32 %v1528, %v2563
        %v2580 = vmul.f32 %v1529, %v2564
        %v2581 = vmul.f32 %v1530, %v2565
        %v2582 = vmul.f32 %v1531, %v2566
        %v2583 = vmul.f32 %v1532, %v2567
        %v2584 = vmul.f32 %v1533, %v2568
        %v2585 = vmul.f32 %v2425, %v2425
        %v2586 = vmul.f32 %v2426, %v2426
        %v2587 = vmul.f32 %v2427, %v2427
        %v2588 = vmul.f32 %v2428, %v2428
        %v2589 = vmul.f32 %v2429, %v2429
        %v2590 = vmul.f32 %v2430, %v2430
        %v2591 = vmul.f32 %v2431, %v2431
        %v2592 = vmul.f32 %v2432, %v2432
        %v2593 = vmul.f32 %v2433, %v2433
        %v2594 = vmul.f32 %v2434, %v2434
        %v2595 = vmul.f32 %v2435, %v2435
        %v2596 = vmul.f32 %v2436, %v2436
        %v2597 = vmul.f32 %v2437, %v2437
        %v2598 = vmul.f32 %v2438, %v2438
        %v2599 = vmul.f32 %v2439, %v2439
        %v2600 = vmul.f32 %v2440, %v2440
        %v2601 = vmul.f32 %v2425, %v2585
        %v2602 = vmul.f32 %v2426, %v2586
        %v2603 = vmul.f32 %v2427, %v2587
        %v2604 = vmul.f32 %v2428, %v2588
        %v2605 = vmul.f32 %v2429, %v2589
        %v2606 = vmul.f32 %v2430, %v2590
        %v2607 = vmul.f32 %v2431, %v2591
        %v2608 = vmul.f32 %v2432, %v2592
        %v2609 = vmul.f32 %v2433, %v2593
        %v2610 = vmul.f32 %v2434, %v2594
        %v2611 = vmul.f32 %v2435, %v2595
        %v2612 = vmul.f32 %v2436, %v2596
        %v2613 = vmul.f32 %v2437, %v2597
        %v2614 = vmul.f32 %v2438, %v2598
        %v2615 = vmul.f32 %v2439, %v2599
        %v2616 = vmul.f32 %v2440, %v2600
        %v2617 = vmul.f32 %v2601, 0.044715
        %v2618 = vmul.f32 %v2602, 0.044715
        %v2619 = vmul.f32 %v2603, 0.044715
        %v2620 = vmul.f32 %v2604, 0.044715
        %v2621 = vmul.f32 %v2605, 0.044715
        %v2622 = vmul.f32 %v2606, 0.044715
        %v2623 = vmul.f32 %v2607, 0.044715
        %v2624 = vmul.f32 %v2608, 0.044715
        %v2625 = vmul.f32 %v2609, 0.044715
        %v2626 = vmul.f32 %v2610, 0.044715
        %v2627 = vmul.f32 %v2611, 0.044715
        %v2628 = vmul.f32 %v2612, 0.044715
        %v2629 = vmul.f32 %v2613, 0.044715
        %v2630 = vmul.f32 %v2614, 0.044715
        %v2631 = vmul.f32 %v2615, 0.044715
        %v2632 = vmul.f32 %v2616, 0.044715
        %v2633 = vadd.f32 %v2425, %v2617
        %v2634 = vadd.f32 %v2426, %v2618
        %v2635 = vadd.f32 %v2427, %v2619
        %v2636 = vadd.f32 %v2428, %v2620
        %v2637 = vadd.f32 %v2429, %v2621
        %v2638 = vadd.f32 %v2430, %v2622
        %v2639 = vadd.f32 %v2431, %v2623
        %v2640 = vadd.f32 %v2432, %v2624
        %v2641 = vadd.f32 %v2433, %v2625
        %v2642 = vadd.f32 %v2434, %v2626
        %v2643 = vadd.f32 %v2435, %v2627
        %v2644 = vadd.f32 %v2436, %v2628
        %v2645 = vadd.f32 %v2437, %v2629
        %v2646 = vadd.f32 %v2438, %v2630
        %v2647 = vadd.f32 %v2439, %v2631
        %v2648 = vadd.f32 %v2440, %v2632
        %v2649 = vmul.f32 %v2633, 0.7978846
        %v2650 = vmul.f32 %v2634, 0.7978846
        %v2651 = vmul.f32 %v2635, 0.7978846
        %v2652 = vmul.f32 %v2636, 0.7978846
        %v2653 = vmul.f32 %v2637, 0.7978846
        %v2654 = vmul.f32 %v2638, 0.7978846
        %v2655 = vmul.f32 %v2639, 0.7978846
        %v2656 = vmul.f32 %v2640, 0.7978846
        %v2657 = vmul.f32 %v2641, 0.7978846
        %v2658 = vmul.f32 %v2642, 0.7978846
        %v2659 = vmul.f32 %v2643, 0.7978846
        %v2660 = vmul.f32 %v2644, 0.7978846
        %v2661 = vmul.f32 %v2645, 0.7978846
        %v2662 = vmul.f32 %v2646, 0.7978846
        %v2663 = vmul.f32 %v2647, 0.7978846
        %v2664 = vmul.f32 %v2648, 0.7978846
        %v2665 = vtanh.pop %v2649
        %v2666 = vtanh.pop %v2650
        %v2667 = vtanh.pop %v2651
        %v2668 = vtanh.pop %v2652
        %v2669 = vtanh.pop %v2653
        %v2670 = vtanh.pop %v2654
        %v2671 = vtanh.pop %v2655
        %v2672 = vtanh.pop %v2656
        %v2673 = vtanh.pop %v2657
        %v2674 = vtanh.pop %v2658
        %v2675 = vtanh.pop %v2659
        %v2676 = vtanh.pop %v2660
        %v2677 = vtanh.pop %v2661
        %v2678 = vtanh.pop %v2662
        %v2679 = vtanh.pop %v2663
        %v2680 = vtanh.pop %v2664
        %v2681 = vadd.f32 %v2665, 1.0
        %v2682 = vadd.f32 %v2666, 1.0
        %v2683 = vadd.f32 %v2667, 1.0
        %v2684 = vadd.f32 %v2668, 1.0
        %v2685 = vadd.f32 %v2669, 1.0
        %v2686 = vadd.f32 %v2670, 1.0
        %v2687 = vadd.f32 %v2671, 1.0
        %v2688 = vadd.f32 %v2672, 1.0
        %v2689 = vadd.f32 %v2673, 1.0
        %v2690 = vadd.f32 %v2674, 1.0
        %v2691 = vadd.f32 %v2675, 1.0
        %v2692 = vadd.f32 %v2676, 1.0
        %v2693 = vadd.f32 %v2677, 1.0
        %v2694 = vadd.f32 %v2678, 1.0
        %v2695 = vadd.f32 %v2679, 1.0
        %v2696 = vadd.f32 %v2680, 1.0
        %v2697 = vmul.f32 %v2681, 0.5
        %v2698 = vmul.f32 %v2682, 0.5
        %v2699 = vmul.f32 %v2683, 0.5
        %v2700 = vmul.f32 %v2684, 0.5
        %v2701 = vmul.f32 %v2685, 0.5
        %v2702 = vmul.f32 %v2686, 0.5
        %v2703 = vmul.f32 %v2687, 0.5
        %v2704 = vmul.f32 %v2688, 0.5
        %v2705 = vmul.f32 %v2689, 0.5
        %v2706 = vmul.f32 %v2690, 0.5
        %v2707 = vmul.f32 %v2691, 0.5
        %v2708 = vmul.f32 %v2692, 0.5
        %v2709 = vmul.f32 %v2693, 0.5
        %v2710 = vmul.f32 %v2694, 0.5
        %v2711 = vmul.f32 %v2695, 0.5
        %v2712 = vmul.f32 %v2696, 0.5
        %v2713 = vmul.f32 %v2425, %v2697
        %v2714 = vmul.f32 %v2426, %v2698
        %v2715 = vmul.f32 %v2427, %v2699
        %v2716 = vmul.f32 %v2428, %v2700
        %v2717 = vmul.f32 %v2429, %v2701
        %v2718 = vmul.f32 %v2430, %v2702
        %v2719 = vmul.f32 %v2431, %v2703
        %v2720 = vmul.f32 %v2432, %v2704
        %v2721 = vmul.f32 %v2433, %v2705
        %v2722 = vmul.f32 %v2434, %v2706
        %v2723 = vmul.f32 %v2435, %v2707
        %v2724 = vmul.f32 %v2436, %v2708
        %v2725 = vmul.f32 %v2437, %v2709
        %v2726 = vmul.f32 %v2438, %v2710
        %v2727 = vmul.f32 %v2439, %v2711
        %v2728 = vmul.f32 %v2440, %v2712
        %v2729 = vpack.c.bf16 %v2570, %v2569
        %v2730 = vpack.c.bf16 %v2572, %v2571
        %v2731 = vpack.c.bf16 %v2574, %v2573
        %v2732 = vpack.c.bf16 %v2576, %v2575
        %v2733 = vpack.c.bf16 %v2578, %v2577
        %v2734 = vpack.c.bf16 %v2580, %v2579
        %v2735 = vpack.c.bf16 %v2582, %v2581
        %v2736 = vpack.c.bf16 %v2584, %v2583
        %v2737 = vpack.c.bf16 %v2714, %v2713
        %v2738 = vpack.c.bf16 %v2716, %v2715
        %v2739 = vpack.c.bf16 %v2718, %v2717
        %v2740 = vpack.c.bf16 %v2720, %v2719
        %v2741 = vpack.c.bf16 %v2722, %v2721
        %v2742 = vpack.c.bf16 %v2724, %v2723
        %v2743 = vpack.c.bf16 %v2726, %v2725
        %v2744 = vpack.c.bf16 %v2728, %v2727
        %v2745 = vld [vmem:[#allocation19] sm:$0xf]
        %v2746 = vld [vmem:[#allocation21] sm:$0xf]
        %v2748 = vsel %vm910, %v2737, 0
        %v2751 = vsel %vm910, %v2738, 0
        %v2754 = vsel %vm910, %v2739, 0
        %v2757 = vsel %vm910, %v2740, 0
        %v2760 = vsel %vm910, %v2741, 0
        %v2763 = vsel %vm910, %v2742, 0
        %v2766 = vsel %vm910, %v2743, 0
        %v2769 = vsel %vm910, %v2744, 0
        %vm2771 = vcmask 1043456
        %v2773 = vsel %vm2771, %v2746, 0
        %2775 = vmatprep.subr.bf16.mxu0 0
        %2776 = vmatpush1.bf16.msra.mxu0 %v2773
        %2777 = vmatprep.subr.bf16.mxu0 0
        %2778 = vmatpush1.bf16.msra.mxu0 0
        %2779 = vmatprep.subr.bf16.mxu0 0
        %2780 = vmatpush1.bf16.msra.mxu0 0
        %2781 = vmatprep.subr.bf16.mxu0 0
        %2782 = vmatpush1.bf16.msra.mxu0 0
        %2783 = vmatprep.subr.bf16.mxu0 0
        %2784 = vmatpush1.bf16.msra.mxu0 0
        %2785 = vmatprep.subr.bf16.mxu0 0
        %2786 = vmatpush1.bf16.msra.mxu0 0
        %2787 = vmatprep.subr.bf16.mxu0 0
        %2788 = vmatpush1.bf16.msra.mxu0 0
        %2789 = vmatprep.subr.bf16.mxu0 0
        %2790 = vmatpush1.bf16.msra.mxu0 0
        %2791 = vmatprep.subr.bf16.mxu0 0
        %2792 = vmatpush1.bf16.msra.mxu0 0
        %2793 = vmatprep.subr.bf16.mxu0 0
        %2794 = vmatpush1.bf16.msra.mxu0 0
        %2795 = vmatprep.subr.bf16.mxu0 0
        %2796 = vmatpush1.bf16.msra.mxu0 0
        %2797 = vmatprep.subr.bf16.mxu0 0
        %2798 = vmatpush1.bf16.msra.mxu0 0
        %2799 = vmatprep.subr.bf16.mxu0 0
        %2800 = vmatpush1.bf16.msra.mxu0 0
        %2801 = vmatprep.subr.bf16.mxu0 0
        %2802 = vmatpush1.bf16.msra.mxu0 0
        %2803 = vmatprep.subr.bf16.mxu0 0
        %2804 = vmatpush1.bf16.msra.mxu0 0
        %2805 = vmatprep.subr.bf16.mxu0 0
        %2806 = vmatpush1.bf16.msra.mxu0 0
        %2807 = vmatprep.mubr.bf16.mxu0 0
        %2808 = vmatmul.mubr.bf16.gmra.mrb[0].mxu0 %v2748
        %v2809 = vpop.f32.mrb[0].mxu0
        %v2810 = vadd.f32 0.0, %v2809
        %v2811 = vpop.f32.mrb[0].mxu0
        %v2812 = vpop.f32.mrb[0].mxu0
        %v2813 = vadd.f32 0.0, %v2812
        %v2814 = vpop.f32.mrb[0].mxu0
        %2815 = vmatprep.mubr.bf16.mxu0 0
        %2816 = vmatmul.mubr.bf16.gmra.mrb[0].mxu0 %v2751
        %v2817 = vpop.f32.mrb[0].mxu0
        %v2818 = vadd.f32 0.0, %v2817
        %v2819 = vpop.f32.mrb[0].mxu0
        %v2820 = vpop.f32.mrb[0].mxu0
        %v2821 = vadd.f32 0.0, %v2820
        %v2822 = vpop.f32.mrb[0].mxu0
        %2823 = vmatprep.mubr.bf16.mxu0 0
        %2824 = vmatmul.mubr.bf16.gmra.mrb[0].mxu0 %v2754
        %v2825 = vpop.f32.mrb[0].mxu0
        %v2826 = vadd.f32 0.0, %v2825
        %v2827 = vpop.f32.mrb[0].mxu0
        %v2828 = vpop.f32.mrb[0].mxu0
        %v2829 = vadd.f32 0.0, %v2828
        %v2830 = vpop.f32.mrb[0].mxu0
        %2831 = vmatprep.mubr.bf16.mxu0 0
        %2832 = vmatmul.mubr.bf16.gmra.mrb[0].mxu0 %v2757
        %v2833 = vpop.f32.mrb[0].mxu0
        %v2834 = vadd.f32 0.0, %v2833
        %v2835 = vpop.f32.mrb[0].mxu0
        %v2836 = vpop.f32.mrb[0].mxu0
        %v2837 = vadd.f32 0.0, %v2836
        %v2838 = vpop.f32.mrb[0].mxu0
        %2839 = vmatprep.mubr.bf16.mxu0 0
        %2840 = vmatmul.mubr.bf16.gmra.mrb[0].mxu0 %v2760
        %v2841 = vpop.f32.mrb[0].mxu0
        %v2842 = vadd.f32 0.0, %v2841
        %v2843 = vpop.f32.mrb[0].mxu0
        %v2844 = vpop.f32.mrb[0].mxu0
        %v2845 = vadd.f32 0.0, %v2844
        %v2846 = vpop.f32.mrb[0].mxu0
        %2847 = vmatprep.mubr.bf16.mxu0 0
        %2848 = vmatmul.mubr.bf16.gmra.mrb[0].mxu0 %v2763
        %v2849 = vpop.f32.mrb[0].mxu0
        %v2850 = vadd.f32 0.0, %v2849
        %v2851 = vpop.f32.mrb[0].mxu0
        %v2852 = vpop.f32.mrb[0].mxu0
        %v2853 = vadd.f32 0.0, %v2852
        %v2854 = vpop.f32.mrb[0].mxu0
        %2855 = vmatprep.mubr.bf16.mxu0 0
        %2856 = vmatmul.mubr.bf16.gmra.mrb[0].mxu0 %v2766
        %v2857 = vpop.f32.mrb[0].mxu0
        %v2858 = vadd.f32 0.0, %v2857
        %v2859 = vpop.f32.mrb[0].mxu0
        %v2860 = vpop.f32.mrb[0].mxu0
        %v2861 = vadd.f32 0.0, %v2860
        %v2862 = vpop.f32.mrb[0].mxu0
        %2863 = vmatprep.mubr.bf16.mxu0 0
        %2864 = vmatmul.mubr.bf16.gmra.mrb[0].mxu0 %v2769
        %v2865 = vpop.f32.mrb[0].mxu0
        %v2866 = vadd.f32 0.0, %v2865
        %v2867 = vpop.f32.mrb[0].mxu0
        %v2868 = vpop.f32.mrb[0].mxu0
        %v2869 = vadd.f32 0.0, %v2868
        %v2870 = vpop.f32.mrb[0].mxu0
        %2871 = vdwg.mxu0
        %v2873 = vsel %vm910, %v2729, 0
        %v2876 = vsel %vm910, %v2730, 0
        %v2879 = vsel %vm910, %v2731, 0
        %v2882 = vsel %vm910, %v2732, 0
        %v2885 = vsel %vm910, %v2733, 0
        %v2888 = vsel %vm910, %v2734, 0
        %v2891 = vsel %vm910, %v2735, 0
        %v2894 = vsel %vm910, %v2736, 0
        %v2897 = vsel %vm2771, %v2745, 0
        %2899 = vmatprep.subr.bf16.mxu0 0
        %2900 = vmatpush1.bf16.msra.mxu0 %v2897
        %2901 = vmatprep.subr.bf16.mxu0 0
        %2902 = vmatpush1.bf16.msra.mxu0 0
        %2903 = vmatprep.subr.bf16.mxu0 0
        %2904 = vmatpush1.bf16.msra.mxu0 0
        %2905 = vmatprep.subr.bf16.mxu0 0
        %2906 = vmatpush1.bf16.msra.mxu0 0
        %2907 = vmatprep.subr.bf16.mxu0 0
        %2908 = vmatpush1.bf16.msra.mxu0 0
        %2909 = vmatprep.subr.bf16.mxu0 0
        %2910 = vmatpush1.bf16.msra.mxu0 0
        %2911 = vmatprep.subr.bf16.mxu0 0
        %2912 = vmatpush1.bf16.msra.mxu0 0
        %2913 = vmatprep.subr.bf16.mxu0 0
        %2914 = vmatpush1.bf16.msra.mxu0 0
        %2915 = vmatprep.subr.bf16.mxu0 0
        %2916 = vmatpush1.bf16.msra.mxu0 0
        %2917 = vmatprep.subr.bf16.mxu0 0
        %2918 = vmatpush1.bf16.msra.mxu0 0
        %2919 = vmatprep.subr.bf16.mxu0 0
        %2920 = vmatpush1.bf16.msra.mxu0 0
        %2921 = vmatprep.subr.bf16.mxu0 0
        %2922 = vmatpush1.bf16.msra.mxu0 0
        %2923 = vmatprep.subr.bf16.mxu0 0
        %2924 = vmatpush1.bf16.msra.mxu0 0
        %2925 = vmatprep.subr.bf16.mxu0 0
        %2926 = vmatpush1.bf16.msra.mxu0 0
        %2927 = vmatprep.subr.bf16.mxu0 0
        %2928 = vmatpush1.bf16.msra.mxu0 0
        %2929 = vmatprep.subr.bf16.mxu0 0
        %2930 = vmatpush1.bf16.msra.mxu0 0
        %2931 = vmatprep.mubr.bf16.mxu0 0
        %2932 = vmatmul.mubr.bf16.gmra.mrb[0].mxu0 %v2873
        %v2933 = vpop.f32.mrb[0].mxu0
        %v2934 = vadd.f32 %v2810, %v2933
        %v2935 = vpop.f32.mrb[0].mxu0
        %v2936 = vpop.f32.mrb[0].mxu0
        %v2937 = vadd.f32 %v2813, %v2936
        %v2938 = vpop.f32.mrb[0].mxu0
        %2939 = vmatprep.mubr.bf16.mxu0 0
        %2940 = vmatmul.mubr.bf16.gmra.mrb[0].mxu0 %v2876
        %v2941 = vpop.f32.mrb[0].mxu0
        %v2942 = vadd.f32 %v2818, %v2941
        %v2943 = vpop.f32.mrb[0].mxu0
        %v2944 = vpop.f32.mrb[0].mxu0
        %v2945 = vadd.f32 %v2821, %v2944
        %v2946 = vpop.f32.mrb[0].mxu0
        %2947 = vmatprep.mubr.bf16.mxu0 0
        %2948 = vmatmul.mubr.bf16.gmra.mrb[0].mxu0 %v2879
        %v2949 = vpop.f32.mrb[0].mxu0
        %v2950 = vadd.f32 %v2826, %v2949
        %v2951 = vpop.f32.mrb[0].mxu0
        %v2952 = vpop.f32.mrb[0].mxu0
        %v2953 = vadd.f32 %v2829, %v2952
        %v2954 = vpop.f32.mrb[0].mxu0
        %2955 = vmatprep.mubr.bf16.mxu0 0
        %2956 = vmatmul.mubr.bf16.gmra.mrb[0].mxu0 %v2882
        %v2957 = vpop.f32.mrb[0].mxu0
        %v2958 = vadd.f32 %v2834, %v2957
        %v2959 = vpop.f32.mrb[0].mxu0
        %v2960 = vpop.f32.mrb[0].mxu0
        %v2961 = vadd.f32 %v2837, %v2960
        %v2962 = vpop.f32.mrb[0].mxu0
        %2963 = vmatprep.mubr.bf16.mxu0 0
        %2964 = vmatmul.mubr.bf16.gmra.mrb[0].mxu0 %v2885
        %v2965 = vpop.f32.mrb[0].mxu0
        %v2966 = vadd.f32 %v2842, %v2965
        %v2967 = vpop.f32.mrb[0].mxu0
        %v2968 = vpop.f32.mrb[0].mxu0
        %v2969 = vadd.f32 %v2845, %v2968
        %v2970 = vpop.f32.mrb[0].mxu0
        %2971 = vmatprep.mubr.bf16.mxu0 0
        %2972 = vmatmul.mubr.bf16.gmra.mrb[0].mxu0 %v2888
        %v2973 = vpop.f32.mrb[0].mxu0
        %v2974 = vadd.f32 %v2850, %v2973
        %v2975 = vpop.f32.mrb[0].mxu0
        %v2976 = vpop.f32.mrb[0].mxu0
        %v2977 = vadd.f32 %v2853, %v2976
        %v2978 = vpop.f32.mrb[0].mxu0
        %2979 = vmatprep.mubr.bf16.mxu0 0
        %2980 = vmatmul.mubr.bf16.gmra.mrb[0].mxu0 %v2891
        %v2981 = vpop.f32.mrb[0].mxu0
        %v2982 = vadd.f32 %v2858, %v2981
        %v2983 = vpop.f32.mrb[0].mxu0
        %v2984 = vpop.f32.mrb[0].mxu0
        %v2985 = vadd.f32 %v2861, %v2984
        %v2986 = vpop.f32.mrb[0].mxu0
        %2987 = vmatprep.mubr.bf16.mxu0 0
        %2988 = vmatmul.mubr.bf16.gmra.mrb[0].mxu0 %v2894
        %v2989 = vpop.f32.mrb[0].mxu0
        %v2990 = vadd.f32 %v2866, %v2989
        %v2991 = vpop.f32.mrb[0].mxu0
        %v2992 = vpop.f32.mrb[0].mxu0
        %v2993 = vadd.f32 %v2869, %v2992
        %v2994 = vpop.f32.mrb[0].mxu0
        %2995 = vdwg.mxu0
        %v2996 = vld [vmem:[%s564] sm:$0x1]
        %v2998 = vlaneseq
        %v2999 = vshrl.u32 %v2998, 7
        %v3000 = vsub.s32 0, %v2999
        %v3001 = vrot.slane %v2996, %v3000
        %v3003 = vadd.f32 %v2934, %v3001
        %v3004 = vadd.f32 %v2937, %v3001
        %v3005 = vadd.f32 %v2942, %v3001
        %v3006 = vadd.f32 %v2945, %v3001
        %v3007 = vadd.f32 %v2950, %v3001
        %v3008 = vadd.f32 %v2953, %v3001
        %v3009 = vadd.f32 %v2958, %v3001
        %v3010 = vadd.f32 %v2961, %v3001
        %v3011 = vadd.f32 %v2966, %v3001
        %v3012 = vadd.f32 %v2969, %v3001
        %v3013 = vadd.f32 %v2974, %v3001
        %v3014 = vadd.f32 %v2977, %v3001
        %v3015 = vadd.f32 %v2982, %v3001
        %v3016 = vadd.f32 %v2985, %v3001
        %v3017 = vadd.f32 %v2990, %v3001
        %v3018 = vadd.f32 %v2993, %v3001
        %3019 = vst.msk [vmem:[%s608] sm:$0xff] %vm675, %v3003
        %3020 = vst.msk [vmem:[%s608 + $0x8] sm:$0xff] %vm675, %v3004
        %3021 = vst.msk [vmem:[%s608 + $0x10] sm:$0xff] %vm675, %v3005
        %3022 = vst.msk [vmem:[%s608 + $0x18] sm:$0xff] %vm675, %v3006
        %3023 = vst.msk [vmem:[%s608 + $0x20] sm:$0xff] %vm675, %v3007
        %3024 = vst.msk [vmem:[%s608 + $0x28] sm:$0xff] %vm675, %v3008
        %3025 = vst.msk [vmem:[%s608 + $0x30] sm:$0xff] %vm675, %v3009
        %3026 = vst.msk [vmem:[%s608 + $0x38] sm:$0xff] %vm675, %v3010
        %3027 = vst.msk [vmem:[%s608 + $0x40] sm:$0xff] %vm675, %v3011
        %3028 = vst.msk [vmem:[%s608 + $0x48] sm:$0xff] %vm675, %v3012
        %3029 = vst.msk [vmem:[%s608 + $0x50] sm:$0xff] %vm675, %v3013
        %3030 = vst.msk [vmem:[%s608 + $0x58] sm:$0xff] %vm675, %v3014
        %3031 = vst.msk [vmem:[%s608 + $0x60] sm:$0xff] %vm675, %v3015
        %3032 = vst.msk [vmem:[%s608 + $0x68] sm:$0xff] %vm675, %v3016
        %3033 = vst.msk [vmem:[%s608 + $0x70] sm:$0xff] %vm675, %v3017
        %3034 = vst.msk [vmem:[%s608 + $0x78] sm:$0xff] %vm675, %v3018
        %s3035 = sand.u32 %s321, 1
        %s3036 = scalar_lea.sflag [#allocation6], %s3035
        %s3037 = sand.u32 %s321, 1
        %s3038 = smul.addr %s3037, 128
        %s3039 = scalar_lea.vmem [#allocation24], %s3038
        // Predicated region
        $region121: #{tpu_custom_call.1} parent=67 // pred_check
          %p3040 = pneg %p331
        $region122: #{tpu_custom_call.1} parent=67 // pred_check_branch
          %3042 = sbr.rel (%p3040) target = $region124
        $region123: #{tpu_custom_call.1} parent=67 // pred_region
          %s3043 = smul.u32 16, %s42
          %s3045 = ssub.s32 2048, 2048
          %3046 = vsyncadd %s3036, %s3045
          %s3047 = smul.addr %s41, 16
          %s3048 = sadd.s32 %s3043, %s3047
          %s3049 = smul.addr %s3048, 128
          %s3050 = scalar_lea.hbm %s12, %s3049
          %s3051 = sshll.u32 %s3039, 4
          %s3052 = int_to_ptr.vmem [resolvable:$true] %s3051
          %3057 = dma.vmem_to_hbm [thread:$0]  %s3052, 2048, %s3050, %s3036, 128, 128, 8
        $region124: #{tpu_custom_call.1} parent=67 // pred_fallthru
          _
      $region68: #{tpu_custom_call.1} parent=5 // pred_fallthru
        _
      %p3058 = scmp.le.s32.totalorder 2, %s32
      // Predicated region
      $region125: #{tpu_custom_call.1} parent=5 // pred_check
        %p3059 = pneg %p3058
      $region126: #{tpu_custom_call.1} parent=5 // pred_check_branch
        %3061 = sbr.rel (%p3059) target = $region128
      $region127: #{tpu_custom_call.1} parent=5 // pred_region
        %s3062 = ssub.s32 %s32, 2
        // Predicated region
        $region129: #{tpu_custom_call.1} parent=127 // pred_check
          %p3063 = pneg %p337
        $region130: #{tpu_custom_call.1} parent=127 // pred_check_branch
          %3065 = sbr.rel (%p3063) target = $region132
        $region131: #{tpu_custom_call.1} parent=127 // pred_region
          %s3066 = sand.u32 %s322, 1
          %s3067 = scalar_lea.sflag [#allocation6], %s3066
          %s3068 = sand.u32 %s322, 1
          %s3069 = smul.addr %s3068, 128
          %s3070 = scalar_lea.vmem [#allocation24], %s3069
          %3071 = dma.done %s3067, 2048
        $region132: #{tpu_custom_call.1} parent=127 // pred_fallthru
          _
      $region128: #{tpu_custom_call.1} parent=5 // pred_fallthru
        _
    $region6: #{tpu_custom_call.1} parent=1 // loop_footer
      %s36 = sadd.s32 1, %s32
    $region7: #{tpu_custom_call.1} parent=1 // loop_footer_branch
      %31 = sbr.rel target = $region3
    $region8: #{tpu_custom_call.1} parent=1 // loop_exit
      _
    %3072 = vsyncpa [#allocation5], 1
    %s3073 = scalar_lea.sflag [#allocation5], 1
    %3074 = vsyncpa %s3073, 1
    %3075 = vsyncpa [#allocation8], 1
    %3076 = vsyncpa [#allocation11], 1
    %3077 = vsyncpa [#allocation14], 1
    %3078 = vsyncpa [#allocation17], 1
    %3079 = vsyncpa [#allocation20], 1
    %3080 = vsyncpa [#allocation23], 1
    %s3081 = scalar_lea.sflag [#allocation23], 1
    %3082 = vsyncpa %s3081, 1
    %3083 = vsyncpa [#allocation6], 1
    %s3084 = scalar_lea.sflag [#allocation6], 1
    %3085 = vsyncpa %s3084, 1

</llo_original>
